<compile_context>
chip_gen: v6e
topology: v6e:2x2x1
jax: 0.10.0
libtpu: 0.0.40
codegen_flags: <defaults>
</compile_context>

<pallas_src>
import jax
import jax.numpy as jnp
from jax.experimental import pallas as pl
from jax.experimental.pallas import tpu as pltpu


SUB = 16  # sublane rows per inner compute slab (SUB * 128 = 2048 batch elements)

# ---------------------------------------------------------------------------
# Packed parameter vector layout (all offsets are static Python ints).
#   W stored as (fan_in, fan_out) row-major (i.e. PyTorch W^T), biases flat.
# ---------------------------------------------------------------------------
_OFF_W1, _OFF_B1 = 0, 40      # W1 (4,10),  b1 (10,)
_OFF_W2, _OFF_B2 = 50, 150    # W2 (10,10), b2 (10,)
_OFF_W3, _OFF_B3 = 160, 260   # W3 (10,10), b3 (10,)
_OFF_W4, _OFF_B4 = 270, 310   # W4 (10,4),  b4 (4,)
_OFF_W5, _OFF_B5 = 314, 318   # fused ln_w*w5 (4,), fused scalar bias
PARAM_VEC_LEN = 320


def _read_matrix(p_ref, off, n_in, n_out):
    return [[p_ref[off + i * n_out + j] for j in range(n_out)] for i in range(n_in)]


def _read_vector(p_ref, off, n):
    return [p_ref[off + j] for j in range(n)]


def _dense_tanh(h, w, b):
    """h: list of (SUB,128) arrays; w: [len(h)][len(b)] SMEM scalars; returns list."""
    out = []
    for j in range(len(b)):
        acc = h[0] * w[0][j]
        for i in range(1, len(h)):
            acc = acc + h[i] * w[i][j]
        out.append(jnp.tanh(acc + b[j]))
    return out


def _new_model_kernel(p_ref, x_ref, o_ref):
    # Scalar weights: read once per grid step from SMEM (sld co-issues with VPU work).
    w1 = _read_matrix(p_ref, _OFF_W1, 4, 10)
    b1 = _read_vector(p_ref, _OFF_B1, 10)
    w2 = _read_matrix(p_ref, _OFF_W2, 10, 10)
    b2 = _read_vector(p_ref, _OFF_B2, 10)
    w3 = _read_matrix(p_ref, _OFF_W3, 10, 10)
    b3 = _read_vector(p_ref, _OFF_B3, 10)
    w4 = _read_matrix(p_ref, _OFF_W4, 10, 4)
    b4 = _read_vector(p_ref, _OFF_B4, 4)
    w5 = _read_vector(p_ref, _OFF_W5, 4)   # LayerNorm scale folded in on the host
    b5 = p_ref[_OFF_B5]                    # LayerNorm shift folded in on the host

    tile_rows = x_ref.shape[1]
    # Unrolled loop over (SUB, 128) slabs: every vreg is 100% dense, live set stays
    # within the 64-vreg file (~2 vregs per live channel), slices are (8,128)-aligned.
    for s in range(tile_rows // SUB):
        r0 = s * SUB
        xs = [x_ref[c, r0:r0 + SUB, :] for c in range(4)]   # 4 dense (SUB,128) slabs

        h = _dense_tanh(xs, w1, b1)    # 4  -> 10
        h = _dense_tanh(h, w2, b2)     # 10 -> 10
        h = _dense_tanh(h, w3, b3)     # 10 -> 10
        h = _dense_tanh(h, w4, b4)     # 10 -> 4

        # LayerNorm(4) across the channel axis, eps = 1e-5 (pure elementwise math).
        mean = (h[0] + h[1] + h[2] + h[3]) * 0.25
        d = [hc - mean for hc in h]
        var = (d[0] * d[0] + d[1] * d[1] + d[2] * d[2] + d[3] * d[3]) * 0.25
        inv = jax.lax.rsqrt(var + 1e-5)

        # Final Linear(4,1); LayerNorm affine pre-folded into w5/b5.
        y = (d[0] * w5[0] + d[1] * w5[1] + d[2] * w5[2] + d[3] * w5[3]) * inv + b5
        o_ref[r0:r0 + SUB, :] = y      # fully dense (SUB,128) store


# ---------------------------------------------------------------------------
# Host-side parameter handling
# ---------------------------------------------------------------------------
def init_params(seed=0):
    """Deterministic init mimicking nn.Linear defaults (U(-1/sqrt(fan_in), ...))."""
    key = jax.random.PRNGKey(seed)
    dims = [(4, 10), (10, 10), (10, 10), (10, 4), (4, 1)]
    keys = jax.random.split(key, 2 * len(dims))
    params = []
    for idx, (fan_in, fan_out) in enumerate(dims):
        bound = 1.0 / (fan_in ** 0.5)
        w = jax.random.uniform(keys[2 * idx], (fan_in, fan_out), jnp.float32, -bound, bound)
        b = jax.random.uniform(keys[2 * idx + 1], (fan_out,), jnp.float32, -bound, bound)
        params.append((w, b))
    ln_w = jnp.ones((4,), jnp.float32)
    ln_b = jnp.zeros((4,), jnp.float32)
    return params, ln_w, ln_b


def pack_params(params, ln_w, ln_b):
    """Pack all weights/biases (LN affine folded into the last Linear) into one vector."""
    (w1, b1), (w2, b2), (w3, b3), (w4, b4), (w5, b5) = params
    # (n*ln_w + ln_b) @ w5 + b5  ==  n @ (ln_w*w5) + (ln_b @ w5 + b5)
    w5f = ln_w * w5[:, 0]                              # (4,)
    b5f = jnp.dot(ln_b, w5[:, 0]) + b5[0]              # ()
    vec = jnp.concatenate([
        w1.reshape(-1), b1,
        w2.reshape(-1), b2,
        w3.reshape(-1), b3,
        w4.reshape(-1), b4,
        w5f, b5f.reshape(1),
    ]).astype(jnp.float32)
    return jnp.pad(vec, (0, PARAM_VEC_LEN - vec.shape[0]))


# ---------------------------------------------------------------------------
# Wrappers
# ---------------------------------------------------------------------------
def new_model_forward_cf(x_cf, param_vec, *, tile_rows=64):
    """x_cf: (4, B) channels-first float32 -> (B, 1) float32."""
    c, b = x_cf.shape
    assert c == 4

    # Tile selection: multiples of SUB rows; big tiles to amortize per-step cost,
    # but keep >= 2 grid steps when possible so both v7x TensorCores get work.
    tr = max(SUB, (tile_rows // SUB) * SUB)
    rows_needed = pl.cdiv(b, 128)
    rows_needed = pl.cdiv(rows_needed, SUB) * SUB
    tr = min(tr, rows_needed)
    if rows_needed < 2 * tr and rows_needed >= 2 * SUB:
        tr = max(SUB, ((rows_needed // 2) // SUB) * SUB)
    tile_b = tr * 128

    b_pad = pl.cdiv(b, tile_b) * tile_b
    if b_pad != b:
        x_cf = jnp.pad(x_cf, ((0, 0), (0, b_pad - b)))
    rows = b_pad // 128
    x3 = x_cf.reshape(4, rows, 128)          # free reshape: batch dense on sublanes+lanes
    grid = (rows // tr,)

    flops_per_elem = 2 * (4 * 10 + 10 * 10 + 10 * 10 + 10 * 4 + 4) + 30
    cost = pl.CostEstimate(
        flops=flops_per_elem * b_pad,
        transcendentals=35 * b_pad,
        bytes_accessed=20 * b_pad + 4 * PARAM_VEC_LEN,
    )

    out = pl.pallas_call(
        _new_model_kernel,
        out_shape=jax.ShapeDtypeStruct((rows, 128), jnp.float32),
        grid_spec=pl.GridSpec(
            grid=grid,
            in_specs=[
                # 320 packed scalars resident in SMEM (one tiny copy, no per-step relayout).
                pl.BlockSpec(memory_space=pltpu.MemorySpace.SMEM),
                # SoA input tile: (4 channels, tr rows, 128 lanes).
                pl.BlockSpec((4, tr, 128), lambda i: (0, i, 0)),
            ],
            # Fully sublane+lane dense output block (unmasked stores).
            out_specs=pl.BlockSpec((tr, 128), lambda i: (i, 0)),
        ),
        compiler_params=pltpu.CompilerParams(
            dimension_semantics=("parallel",),       # megacore sharding on v7x
            vmem_limit_bytes=32 * 1024 * 1024,
        ),
        cost_estimate=cost,
    )(param_vec, x3)
    return out.reshape(b_pad)[:b].reshape(b, 1)


def new_model_forward(x, param_vec, *, tile_rows=64):
    """x: (B, 4) float32 -> (B, 1) float32.

    NOTE: the x.T below is a separate XLA transpose; producers that can emit
    channels-first data should call new_model_forward_cf directly and skip it.
    """
    return new_model_forward_cf(x.T, param_vec, tile_rows=tile_rows)


def reference_forward(x, params, ln_w, ln_b):
    (w1, b1), (w2, b2), (w3, b3), (w4, b4), (w5, b5) = params
    h = jnp.tanh(x @ w1 + b1)
    h = jnp.tanh(h @ w2 + b2)
    h = jnp.tanh(h @ w3 + b3)
    h = jnp.tanh(h @ w4 + b4)
    mean = jnp.mean(h, axis=-1, keepdims=True)
    var = jnp.mean((h - mean) ** 2, axis=-1, keepdims=True)
    h = (h - mean) / jnp.sqrt(var + 1e-5)
    h = h * ln_w + ln_b
    return h @ w5 + b5


if __name__ == "__main__":
    params, ln_w, ln_b = init_params(seed=0)
    key = jax.random.PRNGKey(0)
    B = 4100                                    # non-multiple of the tile: exercises padding
    x = jax.random.normal(key, (B, 4), dtype=jnp.float32)

    # Test 1: default module (ln_w=1, ln_b=0), small tile -> multiple grid steps.
    vec = pack_params(params, ln_w, ln_b)
    out = jax.block_until_ready(new_model_forward(x, vec, tile_rows=16))
    ref = reference_forward(x, params, ln_w, ln_b)
    assert out.shape == (B, 1)
    assert jnp.allclose(out, ref, atol=2e-5, rtol=1e-5), float(jnp.max(jnp.abs(out - ref)))

    # Test 2: non-trivial LayerNorm affine (checks the w5/b5 fold) with default tiling.
    kw, kb = jax.random.split(jax.random.PRNGKey(1))
    ln_w2 = jax.random.normal(kw, (4,), jnp.float32)
    ln_b2 = jax.random.normal(kb, (4,), jnp.float32)
    vec2 = pack_params(params, ln_w2, ln_b2)
    out2 = jax.block_until_ready(new_model_forward(x, vec2))
    ref2 = reference_forward(x, params, ln_w2, ln_b2)
    assert jnp.allclose(out2, ref2, atol=2e-5, rtol=1e-5), float(jnp.max(jnp.abs(out2 - ref2)))

    print("KERNEL_OK")
</pallas_src>

<mosaic_0001>
module attributes {stable_mosaic.version = 11 : i64} {
  func.func @_new_model_kernel(%arg0: i32, %arg1: memref<320xf32, #tpu.memory_space<smem>>, %arg2: memref<4x16x128xf32, #tpu.memory_space<vmem>>, %arg3: memref<16x128xf32, #tpu.memory_space<vmem>>) attributes {dimension_semantics = [#tpu.dimension_semantics<parallel>], iteration_bounds = array<i64: 3>, scalar_prefetch = 0 : i64, scratch_operands = 0 : i64, tpu.core_type = #tpu.core_type<tc>, window_params = [{transform_indices = @transform_0, window_bounds = array<i64: 320>}, {transform_indices = @transform_1, window_bounds = array<i64: 4, 16, 128>}, {transform_indices = @transform_2, window_bounds = array<i64: 16, 128>}]} {
    %c0 = arith.constant 0 : index
    %0 = memref.load %arg1[%c0] : memref<320xf32, #tpu.memory_space<smem>>
    %c1 = arith.constant 1 : index
    %1 = memref.load %arg1[%c1] : memref<320xf32, #tpu.memory_space<smem>>
    %c2 = arith.constant 2 : index
    %2 = memref.load %arg1[%c2] : memref<320xf32, #tpu.memory_space<smem>>
    %c3 = arith.constant 3 : index
    %3 = memref.load %arg1[%c3] : memref<320xf32, #tpu.memory_space<smem>>
    %c4 = arith.constant 4 : index
    %4 = memref.load %arg1[%c4] : memref<320xf32, #tpu.memory_space<smem>>
    %c5 = arith.constant 5 : index
    %5 = memref.load %arg1[%c5] : memref<320xf32, #tpu.memory_space<smem>>
    %c6 = arith.constant 6 : index
    %6 = memref.load %arg1[%c6] : memref<320xf32, #tpu.memory_space<smem>>
    %c7 = arith.constant 7 : index
    %7 = memref.load %arg1[%c7] : memref<320xf32, #tpu.memory_space<smem>>
    %c8 = arith.constant 8 : index
    %8 = memref.load %arg1[%c8] : memref<320xf32, #tpu.memory_space<smem>>
    %c9 = arith.constant 9 : index
    %9 = memref.load %arg1[%c9] : memref<320xf32, #tpu.memory_space<smem>>
    %c10 = arith.constant 10 : index
    %10 = memref.load %arg1[%c10] : memref<320xf32, #tpu.memory_space<smem>>
    %c11 = arith.constant 11 : index
    %11 = memref.load %arg1[%c11] : memref<320xf32, #tpu.memory_space<smem>>
    %c12 = arith.constant 12 : index
    %12 = memref.load %arg1[%c12] : memref<320xf32, #tpu.memory_space<smem>>
    %c13 = arith.constant 13 : index
    %13 = memref.load %arg1[%c13] : memref<320xf32, #tpu.memory_space<smem>>
    %c14 = arith.constant 14 : index
    %14 = memref.load %arg1[%c14] : memref<320xf32, #tpu.memory_space<smem>>
    %c15 = arith.constant 15 : index
    %15 = memref.load %arg1[%c15] : memref<320xf32, #tpu.memory_space<smem>>
    %c16 = arith.constant 16 : index
    %16 = memref.load %arg1[%c16] : memref<320xf32, #tpu.memory_space<smem>>
    %c17 = arith.constant 17 : index
    %17 = memref.load %arg1[%c17] : memref<320xf32, #tpu.memory_space<smem>>
    %c18 = arith.constant 18 : index
    %18 = memref.load %arg1[%c18] : memref<320xf32, #tpu.memory_space<smem>>
    %c19 = arith.constant 19 : index
    %19 = memref.load %arg1[%c19] : memref<320xf32, #tpu.memory_space<smem>>
    %c20 = arith.constant 20 : index
    %20 = memref.load %arg1[%c20] : memref<320xf32, #tpu.memory_space<smem>>
    %c21 = arith.constant 21 : index
    %21 = memref.load %arg1[%c21] : memref<320xf32, #tpu.memory_space<smem>>
    %c22 = arith.constant 22 : index
    %22 = memref.load %arg1[%c22] : memref<320xf32, #tpu.memory_space<smem>>
    %c23 = arith.constant 23 : index
    %23 = memref.load %arg1[%c23] : memref<320xf32, #tpu.memory_space<smem>>
    %c24 = arith.constant 24 : index
    %24 = memref.load %arg1[%c24] : memref<320xf32, #tpu.memory_space<smem>>
    %c25 = arith.constant 25 : index
    %25 = memref.load %arg1[%c25] : memref<320xf32, #tpu.memory_space<smem>>
    %c26 = arith.constant 26 : index
    %26 = memref.load %arg1[%c26] : memref<320xf32, #tpu.memory_space<smem>>
    %c27 = arith.constant 27 : index
    %27 = memref.load %arg1[%c27] : memref<320xf32, #tpu.memory_space<smem>>
    %c28 = arith.constant 28 : index
    %28 = memref.load %arg1[%c28] : memref<320xf32, #tpu.memory_space<smem>>
    %c29 = arith.constant 29 : index
    %29 = memref.load %arg1[%c29] : memref<320xf32, #tpu.memory_space<smem>>
    %c30 = arith.constant 30 : index
    %30 = memref.load %arg1[%c30] : memref<320xf32, #tpu.memory_space<smem>>
    %c31 = arith.constant 31 : index
    %31 = memref.load %arg1[%c31] : memref<320xf32, #tpu.memory_space<smem>>
    %c32 = arith.constant 32 : index
    %32 = memref.load %arg1[%c32] : memref<320xf32, #tpu.memory_space<smem>>
    %c33 = arith.constant 33 : index
    %33 = memref.load %arg1[%c33] : memref<320xf32, #tpu.memory_space<smem>>
    %c34 = arith.constant 34 : index
    %34 = memref.load %arg1[%c34] : memref<320xf32, #tpu.memory_space<smem>>
    %c35 = arith.constant 35 : index
    %35 = memref.load %arg1[%c35] : memref<320xf32, #tpu.memory_space<smem>>
    %c36 = arith.constant 36 : index
    %36 = memref.load %arg1[%c36] : memref<320xf32, #tpu.memory_space<smem>>
    %c37 = arith.constant 37 : index
    %37 = memref.load %arg1[%c37] : memref<320xf32, #tpu.memory_space<smem>>
    %c38 = arith.constant 38 : index
    %38 = memref.load %arg1[%c38] : memref<320xf32, #tpu.memory_space<smem>>
    %c39 = arith.constant 39 : index
    %39 = memref.load %arg1[%c39] : memref<320xf32, #tpu.memory_space<smem>>
    %c40 = arith.constant 40 : index
    %40 = memref.load %arg1[%c40] : memref<320xf32, #tpu.memory_space<smem>>
    %c41 = arith.constant 41 : index
    %41 = memref.load %arg1[%c41] : memref<320xf32, #tpu.memory_space<smem>>
    %c42 = arith.constant 42 : index
    %42 = memref.load %arg1[%c42] : memref<320xf32, #tpu.memory_space<smem>>
    %c43 = arith.constant 43 : index
    %43 = memref.load %arg1[%c43] : memref<320xf32, #tpu.memory_space<smem>>
    %c44 = arith.constant 44 : index
    %44 = memref.load %arg1[%c44] : memref<320xf32, #tpu.memory_space<smem>>
    %c45 = arith.constant 45 : index
    %45 = memref.load %arg1[%c45] : memref<320xf32, #tpu.memory_space<smem>>
    %c46 = arith.constant 46 : index
    %46 = memref.load %arg1[%c46] : memref<320xf32, #tpu.memory_space<smem>>
    %c47 = arith.constant 47 : index
    %47 = memref.load %arg1[%c47] : memref<320xf32, #tpu.memory_space<smem>>
    %c48 = arith.constant 48 : index
    %48 = memref.load %arg1[%c48] : memref<320xf32, #tpu.memory_space<smem>>
    %c49 = arith.constant 49 : index
    %49 = memref.load %arg1[%c49] : memref<320xf32, #tpu.memory_space<smem>>
    %c50 = arith.constant 50 : index
    %50 = memref.load %arg1[%c50] : memref<320xf32, #tpu.memory_space<smem>>
    %c51 = arith.constant 51 : index
    %51 = memref.load %arg1[%c51] : memref<320xf32, #tpu.memory_space<smem>>
    %c52 = arith.constant 52 : index
    %52 = memref.load %arg1[%c52] : memref<320xf32, #tpu.memory_space<smem>>
    %c53 = arith.constant 53 : index
    %53 = memref.load %arg1[%c53] : memref<320xf32, #tpu.memory_space<smem>>
    %c54 = arith.constant 54 : index
    %54 = memref.load %arg1[%c54] : memref<320xf32, #tpu.memory_space<smem>>
    %c55 = arith.constant 55 : index
    %55 = memref.load %arg1[%c55] : memref<320xf32, #tpu.memory_space<smem>>
    %c56 = arith.constant 56 : index
    %56 = memref.load %arg1[%c56] : memref<320xf32, #tpu.memory_space<smem>>
    %c57 = arith.constant 57 : index
    %57 = memref.load %arg1[%c57] : memref<320xf32, #tpu.memory_space<smem>>
    %c58 = arith.constant 58 : index
    %58 = memref.load %arg1[%c58] : memref<320xf32, #tpu.memory_space<smem>>
    %c59 = arith.constant 59 : index
    %59 = memref.load %arg1[%c59] : memref<320xf32, #tpu.memory_space<smem>>
    %c60 = arith.constant 60 : index
    %60 = memref.load %arg1[%c60] : memref<320xf32, #tpu.memory_space<smem>>
    %c61 = arith.constant 61 : index
    %61 = memref.load %arg1[%c61] : memref<320xf32, #tpu.memory_space<smem>>
    %c62 = arith.constant 62 : index
    %62 = memref.load %arg1[%c62] : memref<320xf32, #tpu.memory_space<smem>>
    %c63 = arith.constant 63 : index
    %63 = memref.load %arg1[%c63] : memref<320xf32, #tpu.memory_space<smem>>
    %c64 = arith.constant 64 : index
    %64 = memref.load %arg1[%c64] : memref<320xf32, #tpu.memory_space<smem>>
    %c65 = arith.constant 65 : index
    %65 = memref.load %arg1[%c65] : memref<320xf32, #tpu.memory_space<smem>>
    %c66 = arith.constant 66 : index
    %66 = memref.load %arg1[%c66] : memref<320xf32, #tpu.memory_space<smem>>
    %c67 = arith.constant 67 : index
    %67 = memref.load %arg1[%c67] : memref<320xf32, #tpu.memory_space<smem>>
    %c68 = arith.constant 68 : index
    %68 = memref.load %arg1[%c68] : memref<320xf32, #tpu.memory_space<smem>>
    %c69 = arith.constant 69 : index
    %69 = memref.load %arg1[%c69] : memref<320xf32, #tpu.memory_space<smem>>
    %c70 = arith.constant 70 : index
    %70 = memref.load %arg1[%c70] : memref<320xf32, #tpu.memory_space<smem>>
    %c71 = arith.constant 71 : index
    %71 = memref.load %arg1[%c71] : memref<320xf32, #tpu.memory_space<smem>>
    %c72 = arith.constant 72 : index
    %72 = memref.load %arg1[%c72] : memref<320xf32, #tpu.memory_space<smem>>
    %c73 = arith.constant 73 : index
    %73 = memref.load %arg1[%c73] : memref<320xf32, #tpu.memory_space<smem>>
    %c74 = arith.constant 74 : index
    %74 = memref.load %arg1[%c74] : memref<320xf32, #tpu.memory_space<smem>>
    %c75 = arith.constant 75 : index
    %75 = memref.load %arg1[%c75] : memref<320xf32, #tpu.memory_space<smem>>
    %c76 = arith.constant 76 : index
    %76 = memref.load %arg1[%c76] : memref<320xf32, #tpu.memory_space<smem>>
    %c77 = arith.constant 77 : index
    %77 = memref.load %arg1[%c77] : memref<320xf32, #tpu.memory_space<smem>>
    %c78 = arith.constant 78 : index
    %78 = memref.load %arg1[%c78] : memref<320xf32, #tpu.memory_space<smem>>
    %c79 = arith.constant 79 : index
    %79 = memref.load %arg1[%c79] : memref<320xf32, #tpu.memory_space<smem>>
    %c80 = arith.constant 80 : index
    %80 = memref.load %arg1[%c80] : memref<320xf32, #tpu.memory_space<smem>>
    %c81 = arith.constant 81 : index
    %81 = memref.load %arg1[%c81] : memref<320xf32, #tpu.memory_space<smem>>
    %c82 = arith.constant 82 : index
    %82 = memref.load %arg1[%c82] : memref<320xf32, #tpu.memory_space<smem>>
    %c83 = arith.constant 83 : index
    %83 = memref.load %arg1[%c83] : memref<320xf32, #tpu.memory_space<smem>>
    %c84 = arith.constant 84 : index
    %84 = memref.load %arg1[%c84] : memref<320xf32, #tpu.memory_space<smem>>
    %c85 = arith.constant 85 : index
    %85 = memref.load %arg1[%c85] : memref<320xf32, #tpu.memory_space<smem>>
    %c86 = arith.constant 86 : index
    %86 = memref.load %arg1[%c86] : memref<320xf32, #tpu.memory_space<smem>>
    %c87 = arith.constant 87 : index
    %87 = memref.load %arg1[%c87] : memref<320xf32, #tpu.memory_space<smem>>
    %c88 = arith.constant 88 : index
    %88 = memref.load %arg1[%c88] : memref<320xf32, #tpu.memory_space<smem>>
    %c89 = arith.constant 89 : index
    %89 = memref.load %arg1[%c89] : memref<320xf32, #tpu.memory_space<smem>>
    %c90 = arith.constant 90 : index
    %90 = memref.load %arg1[%c90] : memref<320xf32, #tpu.memory_space<smem>>
    %c91 = arith.constant 91 : index
    %91 = memref.load %arg1[%c91] : memref<320xf32, #tpu.memory_space<smem>>
    %c92 = arith.constant 92 : index
    %92 = memref.load %arg1[%c92] : memref<320xf32, #tpu.memory_space<smem>>
    %c93 = arith.constant 93 : index
    %93 = memref.load %arg1[%c93] : memref<320xf32, #tpu.memory_space<smem>>
    %c94 = arith.constant 94 : index
    %94 = memref.load %arg1[%c94] : memref<320xf32, #tpu.memory_space<smem>>
    %c95 = arith.constant 95 : index
    %95 = memref.load %arg1[%c95] : memref<320xf32, #tpu.memory_space<smem>>
    %c96 = arith.constant 96 : index
    %96 = memref.load %arg1[%c96] : memref<320xf32, #tpu.memory_space<smem>>
    %c97 = arith.constant 97 : index
    %97 = memref.load %arg1[%c97] : memref<320xf32, #tpu.memory_space<smem>>
    %c98 = arith.constant 98 : index
    %98 = memref.load %arg1[%c98] : memref<320xf32, #tpu.memory_space<smem>>
    %c99 = arith.constant 99 : index
    %99 = memref.load %arg1[%c99] : memref<320xf32, #tpu.memory_space<smem>>
    %c100 = arith.constant 100 : index
    %100 = memref.load %arg1[%c100] : memref<320xf32, #tpu.memory_space<smem>>
    %c101 = arith.constant 101 : index
    %101 = memref.load %arg1[%c101] : memref<320xf32, #tpu.memory_space<smem>>
    %c102 = arith.constant 102 : index
    %102 = memref.load %arg1[%c102] : memref<320xf32, #tpu.memory_space<smem>>
    %c103 = arith.constant 103 : index
    %103 = memref.load %arg1[%c103] : memref<320xf32, #tpu.memory_space<smem>>
    %c104 = arith.constant 104 : index
    %104 = memref.load %arg1[%c104] : memref<320xf32, #tpu.memory_space<smem>>
    %c105 = arith.constant 105 : index
    %105 = memref.load %arg1[%c105] : memref<320xf32, #tpu.memory_space<smem>>
    %c106 = arith.constant 106 : index
    %106 = memref.load %arg1[%c106] : memref<320xf32, #tpu.memory_space<smem>>
    %c107 = arith.constant 107 : index
    %107 = memref.load %arg1[%c107] : memref<320xf32, #tpu.memory_space<smem>>
    %c108 = arith.constant 108 : index
    %108 = memref.load %arg1[%c108] : memref<320xf32, #tpu.memory_space<smem>>
    %c109 = arith.constant 109 : index
    %109 = memref.load %arg1[%c109] : memref<320xf32, #tpu.memory_space<smem>>
    %c110 = arith.constant 110 : index
    %110 = memref.load %arg1[%c110] : memref<320xf32, #tpu.memory_space<smem>>
    %c111 = arith.constant 111 : index
    %111 = memref.load %arg1[%c111] : memref<320xf32, #tpu.memory_space<smem>>
    %c112 = arith.constant 112 : index
    %112 = memref.load %arg1[%c112] : memref<320xf32, #tpu.memory_space<smem>>
    %c113 = arith.constant 113 : index
    %113 = memref.load %arg1[%c113] : memref<320xf32, #tpu.memory_space<smem>>
    %c114 = arith.constant 114 : index
    %114 = memref.load %arg1[%c114] : memref<320xf32, #tpu.memory_space<smem>>
    %c115 = arith.constant 115 : index
    %115 = memref.load %arg1[%c115] : memref<320xf32, #tpu.memory_space<smem>>
    %c116 = arith.constant 116 : index
    %116 = memref.load %arg1[%c116] : memref<320xf32, #tpu.memory_space<smem>>
    %c117 = arith.constant 117 : index
    %117 = memref.load %arg1[%c117] : memref<320xf32, #tpu.memory_space<smem>>
    %c118 = arith.constant 118 : index
    %118 = memref.load %arg1[%c118] : memref<320xf32, #tpu.memory_space<smem>>
    %c119 = arith.constant 119 : index
    %119 = memref.load %arg1[%c119] : memref<320xf32, #tpu.memory_space<smem>>
    %c120 = arith.constant 120 : index
    %120 = memref.load %arg1[%c120] : memref<320xf32, #tpu.memory_space<smem>>
    %c121 = arith.constant 121 : index
    %121 = memref.load %arg1[%c121] : memref<320xf32, #tpu.memory_space<smem>>
    %c122 = arith.constant 122 : index
    %122 = memref.load %arg1[%c122] : memref<320xf32, #tpu.memory_space<smem>>
    %c123 = arith.constant 123 : index
    %123 = memref.load %arg1[%c123] : memref<320xf32, #tpu.memory_space<smem>>
    %c124 = arith.constant 124 : index
    %124 = memref.load %arg1[%c124] : memref<320xf32, #tpu.memory_space<smem>>
    %c125 = arith.constant 125 : index
    %125 = memref.load %arg1[%c125] : memref<320xf32, #tpu.memory_space<smem>>
    %c126 = arith.constant 126 : index
    %126 = memref.load %arg1[%c126] : memref<320xf32, #tpu.memory_space<smem>>
    %c127 = arith.constant 127 : index
    %127 = memref.load %arg1[%c127] : memref<320xf32, #tpu.memory_space<smem>>
    %c128 = arith.constant 128 : index
    %128 = memref.load %arg1[%c128] : memref<320xf32, #tpu.memory_space<smem>>
    %c129 = arith.constant 129 : index
    %129 = memref.load %arg1[%c129] : memref<320xf32, #tpu.memory_space<smem>>
    %c130 = arith.constant 130 : index
    %130 = memref.load %arg1[%c130] : memref<320xf32, #tpu.memory_space<smem>>
    %c131 = arith.constant 131 : index
    %131 = memref.load %arg1[%c131] : memref<320xf32, #tpu.memory_space<smem>>
    %c132 = arith.constant 132 : index
    %132 = memref.load %arg1[%c132] : memref<320xf32, #tpu.memory_space<smem>>
    %c133 = arith.constant 133 : index
    %133 = memref.load %arg1[%c133] : memref<320xf32, #tpu.memory_space<smem>>
    %c134 = arith.constant 134 : index
    %134 = memref.load %arg1[%c134] : memref<320xf32, #tpu.memory_space<smem>>
    %c135 = arith.constant 135 : index
    %135 = memref.load %arg1[%c135] : memref<320xf32, #tpu.memory_space<smem>>
    %c136 = arith.constant 136 : index
    %136 = memref.load %arg1[%c136] : memref<320xf32, #tpu.memory_space<smem>>
    %c137 = arith.constant 137 : index
    %137 = memref.load %arg1[%c137] : memref<320xf32, #tpu.memory_space<smem>>
    %c138 = arith.constant 138 : index
    %138 = memref.load %arg1[%c138] : memref<320xf32, #tpu.memory_space<smem>>
    %c139 = arith.constant 139 : index
    %139 = memref.load %arg1[%c139] : memref<320xf32, #tpu.memory_space<smem>>
    %c140 = arith.constant 140 : index
    %140 = memref.load %arg1[%c140] : memref<320xf32, #tpu.memory_space<smem>>
    %c141 = arith.constant 141 : index
    %141 = memref.load %arg1[%c141] : memref<320xf32, #tpu.memory_space<smem>>
    %c142 = arith.constant 142 : index
    %142 = memref.load %arg1[%c142] : memref<320xf32, #tpu.memory_space<smem>>
    %c143 = arith.constant 143 : index
    %143 = memref.load %arg1[%c143] : memref<320xf32, #tpu.memory_space<smem>>
    %c144 = arith.constant 144 : index
    %144 = memref.load %arg1[%c144] : memref<320xf32, #tpu.memory_space<smem>>
    %c145 = arith.constant 145 : index
    %145 = memref.load %arg1[%c145] : memref<320xf32, #tpu.memory_space<smem>>
    %c146 = arith.constant 146 : index
    %146 = memref.load %arg1[%c146] : memref<320xf32, #tpu.memory_space<smem>>
    %c147 = arith.constant 147 : index
    %147 = memref.load %arg1[%c147] : memref<320xf32, #tpu.memory_space<smem>>
    %c148 = arith.constant 148 : index
    %148 = memref.load %arg1[%c148] : memref<320xf32, #tpu.memory_space<smem>>
    %c149 = arith.constant 149 : index
    %149 = memref.load %arg1[%c149] : memref<320xf32, #tpu.memory_space<smem>>
    %c150 = arith.constant 150 : index
    %150 = memref.load %arg1[%c150] : memref<320xf32, #tpu.memory_space<smem>>
    %c151 = arith.constant 151 : index
    %151 = memref.load %arg1[%c151] : memref<320xf32, #tpu.memory_space<smem>>
    %c152 = arith.constant 152 : index
    %152 = memref.load %arg1[%c152] : memref<320xf32, #tpu.memory_space<smem>>
    %c153 = arith.constant 153 : index
    %153 = memref.load %arg1[%c153] : memref<320xf32, #tpu.memory_space<smem>>
    %c154 = arith.constant 154 : index
    %154 = memref.load %arg1[%c154] : memref<320xf32, #tpu.memory_space<smem>>
    %c155 = arith.constant 155 : index
    %155 = memref.load %arg1[%c155] : memref<320xf32, #tpu.memory_space<smem>>
    %c156 = arith.constant 156 : index
    %156 = memref.load %arg1[%c156] : memref<320xf32, #tpu.memory_space<smem>>
    %c157 = arith.constant 157 : index
    %157 = memref.load %arg1[%c157] : memref<320xf32, #tpu.memory_space<smem>>
    %c158 = arith.constant 158 : index
    %158 = memref.load %arg1[%c158] : memref<320xf32, #tpu.memory_space<smem>>
    %c159 = arith.constant 159 : index
    %159 = memref.load %arg1[%c159] : memref<320xf32, #tpu.memory_space<smem>>
    %c160 = arith.constant 160 : index
    %160 = memref.load %arg1[%c160] : memref<320xf32, #tpu.memory_space<smem>>
    %c161 = arith.constant 161 : index
    %161 = memref.load %arg1[%c161] : memref<320xf32, #tpu.memory_space<smem>>
    %c162 = arith.constant 162 : index
    %162 = memref.load %arg1[%c162] : memref<320xf32, #tpu.memory_space<smem>>
    %c163 = arith.constant 163 : index
    %163 = memref.load %arg1[%c163] : memref<320xf32, #tpu.memory_space<smem>>
    %c164 = arith.constant 164 : index
    %164 = memref.load %arg1[%c164] : memref<320xf32, #tpu.memory_space<smem>>
    %c165 = arith.constant 165 : index
    %165 = memref.load %arg1[%c165] : memref<320xf32, #tpu.memory_space<smem>>
    %c166 = arith.constant 166 : index
    %166 = memref.load %arg1[%c166] : memref<320xf32, #tpu.memory_space<smem>>
    %c167 = arith.constant 167 : index
    %167 = memref.load %arg1[%c167] : memref<320xf32, #tpu.memory_space<smem>>
    %c168 = arith.constant 168 : index
    %168 = memref.load %arg1[%c168] : memref<320xf32, #tpu.memory_space<smem>>
    %c169 = arith.constant 169 : index
    %169 = memref.load %arg1[%c169] : memref<320xf32, #tpu.memory_space<smem>>
    %c170 = arith.constant 170 : index
    %170 = memref.load %arg1[%c170] : memref<320xf32, #tpu.memory_space<smem>>
    %c171 = arith.constant 171 : index
    %171 = memref.load %arg1[%c171] : memref<320xf32, #tpu.memory_space<smem>>
    %c172 = arith.constant 172 : index
    %172 = memref.load %arg1[%c172] : memref<320xf32, #tpu.memory_space<smem>>
    %c173 = arith.constant 173 : index
    %173 = memref.load %arg1[%c173] : memref<320xf32, #tpu.memory_space<smem>>
    %c174 = arith.constant 174 : index
    %174 = memref.load %arg1[%c174] : memref<320xf32, #tpu.memory_space<smem>>
    %c175 = arith.constant 175 : index
    %175 = memref.load %arg1[%c175] : memref<320xf32, #tpu.memory_space<smem>>
    %c176 = arith.constant 176 : index
    %176 = memref.load %arg1[%c176] : memref<320xf32, #tpu.memory_space<smem>>
    %c177 = arith.constant 177 : index
    %177 = memref.load %arg1[%c177] : memref<320xf32, #tpu.memory_space<smem>>
    %c178 = arith.constant 178 : index
    %178 = memref.load %arg1[%c178] : memref<320xf32, #tpu.memory_space<smem>>
    %c179 = arith.constant 179 : index
    %179 = memref.load %arg1[%c179] : memref<320xf32, #tpu.memory_space<smem>>
    %c180 = arith.constant 180 : index
    %180 = memref.load %arg1[%c180] : memref<320xf32, #tpu.memory_space<smem>>
    %c181 = arith.constant 181 : index
    %181 = memref.load %arg1[%c181] : memref<320xf32, #tpu.memory_space<smem>>
    %c182 = arith.constant 182 : index
    %182 = memref.load %arg1[%c182] : memref<320xf32, #tpu.memory_space<smem>>
    %c183 = arith.constant 183 : index
    %183 = memref.load %arg1[%c183] : memref<320xf32, #tpu.memory_space<smem>>
    %c184 = arith.constant 184 : index
    %184 = memref.load %arg1[%c184] : memref<320xf32, #tpu.memory_space<smem>>
    %c185 = arith.constant 185 : index
    %185 = memref.load %arg1[%c185] : memref<320xf32, #tpu.memory_space<smem>>
    %c186 = arith.constant 186 : index
    %186 = memref.load %arg1[%c186] : memref<320xf32, #tpu.memory_space<smem>>
    %c187 = arith.constant 187 : index
    %187 = memref.load %arg1[%c187] : memref<320xf32, #tpu.memory_space<smem>>
    %c188 = arith.constant 188 : index
    %188 = memref.load %arg1[%c188] : memref<320xf32, #tpu.memory_space<smem>>
    %c189 = arith.constant 189 : index
    %189 = memref.load %arg1[%c189] : memref<320xf32, #tpu.memory_space<smem>>
    %c190 = arith.constant 190 : index
    %190 = memref.load %arg1[%c190] : memref<320xf32, #tpu.memory_space<smem>>
    %c191 = arith.constant 191 : index
    %191 = memref.load %arg1[%c191] : memref<320xf32, #tpu.memory_space<smem>>
    %c192 = arith.constant 192 : index
    %192 = memref.load %arg1[%c192] : memref<320xf32, #tpu.memory_space<smem>>
    %c193 = arith.constant 193 : index
    %193 = memref.load %arg1[%c193] : memref<320xf32, #tpu.memory_space<smem>>
    %c194 = arith.constant 194 : index
    %194 = memref.load %arg1[%c194] : memref<320xf32, #tpu.memory_space<smem>>
    %c195 = arith.constant 195 : index
    %195 = memref.load %arg1[%c195] : memref<320xf32, #tpu.memory_space<smem>>
    %c196 = arith.constant 196 : index
    %196 = memref.load %arg1[%c196] : memref<320xf32, #tpu.memory_space<smem>>
    %c197 = arith.constant 197 : index
    %197 = memref.load %arg1[%c197] : memref<320xf32, #tpu.memory_space<smem>>
    %c198 = arith.constant 198 : index
    %198 = memref.load %arg1[%c198] : memref<320xf32, #tpu.memory_space<smem>>
    %c199 = arith.constant 199 : index
    %199 = memref.load %arg1[%c199] : memref<320xf32, #tpu.memory_space<smem>>
    %c200 = arith.constant 200 : index
    %200 = memref.load %arg1[%c200] : memref<320xf32, #tpu.memory_space<smem>>
    %c201 = arith.constant 201 : index
    %201 = memref.load %arg1[%c201] : memref<320xf32, #tpu.memory_space<smem>>
    %c202 = arith.constant 202 : index
    %202 = memref.load %arg1[%c202] : memref<320xf32, #tpu.memory_space<smem>>
    %c203 = arith.constant 203 : index
    %203 = memref.load %arg1[%c203] : memref<320xf32, #tpu.memory_space<smem>>
    %c204 = arith.constant 204 : index
    %204 = memref.load %arg1[%c204] : memref<320xf32, #tpu.memory_space<smem>>
    %c205 = arith.constant 205 : index
    %205 = memref.load %arg1[%c205] : memref<320xf32, #tpu.memory_space<smem>>
    %c206 = arith.constant 206 : index
    %206 = memref.load %arg1[%c206] : memref<320xf32, #tpu.memory_space<smem>>
    %c207 = arith.constant 207 : index
    %207 = memref.load %arg1[%c207] : memref<320xf32, #tpu.memory_space<smem>>
    %c208 = arith.constant 208 : index
    %208 = memref.load %arg1[%c208] : memref<320xf32, #tpu.memory_space<smem>>
    %c209 = arith.constant 209 : index
    %209 = memref.load %arg1[%c209] : memref<320xf32, #tpu.memory_space<smem>>
    %c210 = arith.constant 210 : index
    %210 = memref.load %arg1[%c210] : memref<320xf32, #tpu.memory_space<smem>>
    %c211 = arith.constant 211 : index
    %211 = memref.load %arg1[%c211] : memref<320xf32, #tpu.memory_space<smem>>
    %c212 = arith.constant 212 : index
    %212 = memref.load %arg1[%c212] : memref<320xf32, #tpu.memory_space<smem>>
    %c213 = arith.constant 213 : index
    %213 = memref.load %arg1[%c213] : memref<320xf32, #tpu.memory_space<smem>>
    %c214 = arith.constant 214 : index
    %214 = memref.load %arg1[%c214] : memref<320xf32, #tpu.memory_space<smem>>
    %c215 = arith.constant 215 : index
    %215 = memref.load %arg1[%c215] : memref<320xf32, #tpu.memory_space<smem>>
    %c216 = arith.constant 216 : index
    %216 = memref.load %arg1[%c216] : memref<320xf32, #tpu.memory_space<smem>>
    %c217 = arith.constant 217 : index
    %217 = memref.load %arg1[%c217] : memref<320xf32, #tpu.memory_space<smem>>
    %c218 = arith.constant 218 : index
    %218 = memref.load %arg1[%c218] : memref<320xf32, #tpu.memory_space<smem>>
    %c219 = arith.constant 219 : index
    %219 = memref.load %arg1[%c219] : memref<320xf32, #tpu.memory_space<smem>>
    %c220 = arith.constant 220 : index
    %220 = memref.load %arg1[%c220] : memref<320xf32, #tpu.memory_space<smem>>
    %c221 = arith.constant 221 : index
    %221 = memref.load %arg1[%c221] : memref<320xf32, #tpu.memory_space<smem>>
    %c222 = arith.constant 222 : index
    %222 = memref.load %arg1[%c222] : memref<320xf32, #tpu.memory_space<smem>>
    %c223 = arith.constant 223 : index
    %223 = memref.load %arg1[%c223] : memref<320xf32, #tpu.memory_space<smem>>
    %c224 = arith.constant 224 : index
    %224 = memref.load %arg1[%c224] : memref<320xf32, #tpu.memory_space<smem>>
    %c225 = arith.constant 225 : index
    %225 = memref.load %arg1[%c225] : memref<320xf32, #tpu.memory_space<smem>>
    %c226 = arith.constant 226 : index
    %226 = memref.load %arg1[%c226] : memref<320xf32, #tpu.memory_space<smem>>
    %c227 = arith.constant 227 : index
    %227 = memref.load %arg1[%c227] : memref<320xf32, #tpu.memory_space<smem>>
    %c228 = arith.constant 228 : index
    %228 = memref.load %arg1[%c228] : memref<320xf32, #tpu.memory_space<smem>>
    %c229 = arith.constant 229 : index
    %229 = memref.load %arg1[%c229] : memref<320xf32, #tpu.memory_space<smem>>
    %c230 = arith.constant 230 : index
    %230 = memref.load %arg1[%c230] : memref<320xf32, #tpu.memory_space<smem>>
    %c231 = arith.constant 231 : index
    %231 = memref.load %arg1[%c231] : memref<320xf32, #tpu.memory_space<smem>>
    %c232 = arith.constant 232 : index
    %232 = memref.load %arg1[%c232] : memref<320xf32, #tpu.memory_space<smem>>
    %c233 = arith.constant 233 : index
    %233 = memref.load %arg1[%c233] : memref<320xf32, #tpu.memory_space<smem>>
    %c234 = arith.constant 234 : index
    %234 = memref.load %arg1[%c234] : memref<320xf32, #tpu.memory_space<smem>>
    %c235 = arith.constant 235 : index
    %235 = memref.load %arg1[%c235] : memref<320xf32, #tpu.memory_space<smem>>
    %c236 = arith.constant 236 : index
    %236 = memref.load %arg1[%c236] : memref<320xf32, #tpu.memory_space<smem>>
    %c237 = arith.constant 237 : index
    %237 = memref.load %arg1[%c237] : memref<320xf32, #tpu.memory_space<smem>>
    %c238 = arith.constant 238 : index
    %238 = memref.load %arg1[%c238] : memref<320xf32, #tpu.memory_space<smem>>
    %c239 = arith.constant 239 : index
    %239 = memref.load %arg1[%c239] : memref<320xf32, #tpu.memory_space<smem>>
    %c240 = arith.constant 240 : index
    %240 = memref.load %arg1[%c240] : memref<320xf32, #tpu.memory_space<smem>>
    %c241 = arith.constant 241 : index
    %241 = memref.load %arg1[%c241] : memref<320xf32, #tpu.memory_space<smem>>
    %c242 = arith.constant 242 : index
    %242 = memref.load %arg1[%c242] : memref<320xf32, #tpu.memory_space<smem>>
    %c243 = arith.constant 243 : index
    %243 = memref.load %arg1[%c243] : memref<320xf32, #tpu.memory_space<smem>>
    %c244 = arith.constant 244 : index
    %244 = memref.load %arg1[%c244] : memref<320xf32, #tpu.memory_space<smem>>
    %c245 = arith.constant 245 : index
    %245 = memref.load %arg1[%c245] : memref<320xf32, #tpu.memory_space<smem>>
    %c246 = arith.constant 246 : index
    %246 = memref.load %arg1[%c246] : memref<320xf32, #tpu.memory_space<smem>>
    %c247 = arith.constant 247 : index
    %247 = memref.load %arg1[%c247] : memref<320xf32, #tpu.memory_space<smem>>
    %c248 = arith.constant 248 : index
    %248 = memref.load %arg1[%c248] : memref<320xf32, #tpu.memory_space<smem>>
    %c249 = arith.constant 249 : index
    %249 = memref.load %arg1[%c249] : memref<320xf32, #tpu.memory_space<smem>>
    %c250 = arith.constant 250 : index
    %250 = memref.load %arg1[%c250] : memref<320xf32, #tpu.memory_space<smem>>
    %c251 = arith.constant 251 : index
    %251 = memref.load %arg1[%c251] : memref<320xf32, #tpu.memory_space<smem>>
    %c252 = arith.constant 252 : index
    %252 = memref.load %arg1[%c252] : memref<320xf32, #tpu.memory_space<smem>>
    %c253 = arith.constant 253 : index
    %253 = memref.load %arg1[%c253] : memref<320xf32, #tpu.memory_space<smem>>
    %c254 = arith.constant 254 : index
    %254 = memref.load %arg1[%c254] : memref<320xf32, #tpu.memory_space<smem>>
    %c255 = arith.constant 255 : index
    %255 = memref.load %arg1[%c255] : memref<320xf32, #tpu.memory_space<smem>>
    %c256 = arith.constant 256 : index
    %256 = memref.load %arg1[%c256] : memref<320xf32, #tpu.memory_space<smem>>
    %c257 = arith.constant 257 : index
    %257 = memref.load %arg1[%c257] : memref<320xf32, #tpu.memory_space<smem>>
    %c258 = arith.constant 258 : index
    %258 = memref.load %arg1[%c258] : memref<320xf32, #tpu.memory_space<smem>>
    %c259 = arith.constant 259 : index
    %259 = memref.load %arg1[%c259] : memref<320xf32, #tpu.memory_space<smem>>
    %c260 = arith.constant 260 : index
    %260 = memref.load %arg1[%c260] : memref<320xf32, #tpu.memory_space<smem>>
    %c261 = arith.constant 261 : index
    %261 = memref.load %arg1[%c261] : memref<320xf32, #tpu.memory_space<smem>>
    %c262 = arith.constant 262 : index
    %262 = memref.load %arg1[%c262] : memref<320xf32, #tpu.memory_space<smem>>
    %c263 = arith.constant 263 : index
    %263 = memref.load %arg1[%c263] : memref<320xf32, #tpu.memory_space<smem>>
    %c264 = arith.constant 264 : index
    %264 = memref.load %arg1[%c264] : memref<320xf32, #tpu.memory_space<smem>>
    %c265 = arith.constant 265 : index
    %265 = memref.load %arg1[%c265] : memref<320xf32, #tpu.memory_space<smem>>
    %c266 = arith.constant 266 : index
    %266 = memref.load %arg1[%c266] : memref<320xf32, #tpu.memory_space<smem>>
    %c267 = arith.constant 267 : index
    %267 = memref.load %arg1[%c267] : memref<320xf32, #tpu.memory_space<smem>>
    %c268 = arith.constant 268 : index
    %268 = memref.load %arg1[%c268] : memref<320xf32, #tpu.memory_space<smem>>
    %c269 = arith.constant 269 : index
    %269 = memref.load %arg1[%c269] : memref<320xf32, #tpu.memory_space<smem>>
    %c270 = arith.constant 270 : index
    %270 = memref.load %arg1[%c270] : memref<320xf32, #tpu.memory_space<smem>>
    %c271 = arith.constant 271 : index
    %271 = memref.load %arg1[%c271] : memref<320xf32, #tpu.memory_space<smem>>
    %c272 = arith.constant 272 : index
    %272 = memref.load %arg1[%c272] : memref<320xf32, #tpu.memory_space<smem>>
    %c273 = arith.constant 273 : index
    %273 = memref.load %arg1[%c273] : memref<320xf32, #tpu.memory_space<smem>>
    %c274 = arith.constant 274 : index
    %274 = memref.load %arg1[%c274] : memref<320xf32, #tpu.memory_space<smem>>
    %c275 = arith.constant 275 : index
    %275 = memref.load %arg1[%c275] : memref<320xf32, #tpu.memory_space<smem>>
    %c276 = arith.constant 276 : index
    %276 = memref.load %arg1[%c276] : memref<320xf32, #tpu.memory_space<smem>>
    %c277 = arith.constant 277 : index
    %277 = memref.load %arg1[%c277] : memref<320xf32, #tpu.memory_space<smem>>
    %c278 = arith.constant 278 : index
    %278 = memref.load %arg1[%c278] : memref<320xf32, #tpu.memory_space<smem>>
    %c279 = arith.constant 279 : index
    %279 = memref.load %arg1[%c279] : memref<320xf32, #tpu.memory_space<smem>>
    %c280 = arith.constant 280 : index
    %280 = memref.load %arg1[%c280] : memref<320xf32, #tpu.memory_space<smem>>
    %c281 = arith.constant 281 : index
    %281 = memref.load %arg1[%c281] : memref<320xf32, #tpu.memory_space<smem>>
    %c282 = arith.constant 282 : index
    %282 = memref.load %arg1[%c282] : memref<320xf32, #tpu.memory_space<smem>>
    %c283 = arith.constant 283 : index
    %283 = memref.load %arg1[%c283] : memref<320xf32, #tpu.memory_space<smem>>
    %c284 = arith.constant 284 : index
    %284 = memref.load %arg1[%c284] : memref<320xf32, #tpu.memory_space<smem>>
    %c285 = arith.constant 285 : index
    %285 = memref.load %arg1[%c285] : memref<320xf32, #tpu.memory_space<smem>>
    %c286 = arith.constant 286 : index
    %286 = memref.load %arg1[%c286] : memref<320xf32, #tpu.memory_space<smem>>
    %c287 = arith.constant 287 : index
    %287 = memref.load %arg1[%c287] : memref<320xf32, #tpu.memory_space<smem>>
    %c288 = arith.constant 288 : index
    %288 = memref.load %arg1[%c288] : memref<320xf32, #tpu.memory_space<smem>>
    %c289 = arith.constant 289 : index
    %289 = memref.load %arg1[%c289] : memref<320xf32, #tpu.memory_space<smem>>
    %c290 = arith.constant 290 : index
    %290 = memref.load %arg1[%c290] : memref<320xf32, #tpu.memory_space<smem>>
    %c291 = arith.constant 291 : index
    %291 = memref.load %arg1[%c291] : memref<320xf32, #tpu.memory_space<smem>>
    %c292 = arith.constant 292 : index
    %292 = memref.load %arg1[%c292] : memref<320xf32, #tpu.memory_space<smem>>
    %c293 = arith.constant 293 : index
    %293 = memref.load %arg1[%c293] : memref<320xf32, #tpu.memory_space<smem>>
    %c294 = arith.constant 294 : index
    %294 = memref.load %arg1[%c294] : memref<320xf32, #tpu.memory_space<smem>>
    %c295 = arith.constant 295 : index
    %295 = memref.load %arg1[%c295] : memref<320xf32, #tpu.memory_space<smem>>
    %c296 = arith.constant 296 : index
    %296 = memref.load %arg1[%c296] : memref<320xf32, #tpu.memory_space<smem>>
    %c297 = arith.constant 297 : index
    %297 = memref.load %arg1[%c297] : memref<320xf32, #tpu.memory_space<smem>>
    %c298 = arith.constant 298 : index
    %298 = memref.load %arg1[%c298] : memref<320xf32, #tpu.memory_space<smem>>
    %c299 = arith.constant 299 : index
    %299 = memref.load %arg1[%c299] : memref<320xf32, #tpu.memory_space<smem>>
    %c300 = arith.constant 300 : index
    %300 = memref.load %arg1[%c300] : memref<320xf32, #tpu.memory_space<smem>>
    %c301 = arith.constant 301 : index
    %301 = memref.load %arg1[%c301] : memref<320xf32, #tpu.memory_space<smem>>
    %c302 = arith.constant 302 : index
    %302 = memref.load %arg1[%c302] : memref<320xf32, #tpu.memory_space<smem>>
    %c303 = arith.constant 303 : index
    %303 = memref.load %arg1[%c303] : memref<320xf32, #tpu.memory_space<smem>>
    %c304 = arith.constant 304 : index
    %304 = memref.load %arg1[%c304] : memref<320xf32, #tpu.memory_space<smem>>
    %c305 = arith.constant 305 : index
    %305 = memref.load %arg1[%c305] : memref<320xf32, #tpu.memory_space<smem>>
    %c306 = arith.constant 306 : index
    %306 = memref.load %arg1[%c306] : memref<320xf32, #tpu.memory_space<smem>>
    %c307 = arith.constant 307 : index
    %307 = memref.load %arg1[%c307] : memref<320xf32, #tpu.memory_space<smem>>
    %c308 = arith.constant 308 : index
    %308 = memref.load %arg1[%c308] : memref<320xf32, #tpu.memory_space<smem>>
    %c309 = arith.constant 309 : index
    %309 = memref.load %arg1[%c309] : memref<320xf32, #tpu.memory_space<smem>>
    %c310 = arith.constant 310 : index
    %310 = memref.load %arg1[%c310] : memref<320xf32, #tpu.memory_space<smem>>
    %c311 = arith.constant 311 : index
    %311 = memref.load %arg1[%c311] : memref<320xf32, #tpu.memory_space<smem>>
    %c312 = arith.constant 312 : index
    %312 = memref.load %arg1[%c312] : memref<320xf32, #tpu.memory_space<smem>>
    %c313 = arith.constant 313 : index
    %313 = memref.load %arg1[%c313] : memref<320xf32, #tpu.memory_space<smem>>
    %c314 = arith.constant 314 : index
    %314 = memref.load %arg1[%c314] : memref<320xf32, #tpu.memory_space<smem>>
    %c315 = arith.constant 315 : index
    %315 = memref.load %arg1[%c315] : memref<320xf32, #tpu.memory_space<smem>>
    %c316 = arith.constant 316 : index
    %316 = memref.load %arg1[%c316] : memref<320xf32, #tpu.memory_space<smem>>
    %c317 = arith.constant 317 : index
    %317 = memref.load %arg1[%c317] : memref<320xf32, #tpu.memory_space<smem>>
    %c318 = arith.constant 318 : index
    %318 = memref.load %arg1[%c318] : memref<320xf32, #tpu.memory_space<smem>>
    %c0_0 = arith.constant 0 : index
    %c0_1 = arith.constant 0 : index
    %c0_2 = arith.constant 0 : index
    %319 = vector.load %arg2[%c0_0, %c0_1, %c0_2] : memref<4x16x128xf32, #tpu.memory_space<vmem>>, vector<1x16x128xf32>
    %320 = vector.shape_cast %319 : vector<1x16x128xf32> to vector<16x128xf32>
    %c1_3 = arith.constant 1 : index
    %c0_4 = arith.constant 0 : index
    %c0_5 = arith.constant 0 : index
    %321 = vector.load %arg2[%c1_3, %c0_4, %c0_5] : memref<4x16x128xf32, #tpu.memory_space<vmem>>, vector<1x16x128xf32>
    %322 = vector.shape_cast %321 : vector<1x16x128xf32> to vector<16x128xf32>
    %c2_6 = arith.constant 2 : index
    %c0_7 = arith.constant 0 : index
    %c0_8 = arith.constant 0 : index
    %323 = vector.load %arg2[%c2_6, %c0_7, %c0_8] : memref<4x16x128xf32, #tpu.memory_space<vmem>>, vector<1x16x128xf32>
    %324 = vector.shape_cast %323 : vector<1x16x128xf32> to vector<16x128xf32>
    %c3_9 = arith.constant 3 : index
    %c0_10 = arith.constant 0 : index
    %c0_11 = arith.constant 0 : index
    %325 = vector.load %arg2[%c3_9, %c0_10, %c0_11] : memref<4x16x128xf32, #tpu.memory_space<vmem>>, vector<1x16x128xf32>
    %326 = vector.shape_cast %325 : vector<1x16x128xf32> to vector<16x128xf32>
    %327 = vector.broadcast %0 : f32 to vector<16x128xf32>
    %328 = arith.mulf %320, %327 : vector<16x128xf32>
    %329 = vector.broadcast %10 : f32 to vector<16x128xf32>
    %330 = arith.mulf %322, %329 : vector<16x128xf32>
    %331 = arith.addf %328, %330 : vector<16x128xf32>
    %332 = vector.broadcast %20 : f32 to vector<16x128xf32>
    %333 = arith.mulf %324, %332 : vector<16x128xf32>
    %334 = arith.addf %331, %333 : vector<16x128xf32>
    %335 = vector.broadcast %30 : f32 to vector<16x128xf32>
    %336 = arith.mulf %326, %335 : vector<16x128xf32>
    %337 = arith.addf %334, %336 : vector<16x128xf32>
    %338 = vector.broadcast %40 : f32 to vector<16x128xf32>
    %339 = arith.addf %337, %338 : vector<16x128xf32>
    %340 = math.tanh %339 : vector<16x128xf32>
    %341 = vector.broadcast %1 : f32 to vector<16x128xf32>
    %342 = arith.mulf %320, %341 : vector<16x128xf32>
    %343 = vector.broadcast %11 : f32 to vector<16x128xf32>
    %344 = arith.mulf %322, %343 : vector<16x128xf32>
    %345 = arith.addf %342, %344 : vector<16x128xf32>
    %346 = vector.broadcast %21 : f32 to vector<16x128xf32>
    %347 = arith.mulf %324, %346 : vector<16x128xf32>
    %348 = arith.addf %345, %347 : vector<16x128xf32>
    %349 = vector.broadcast %31 : f32 to vector<16x128xf32>
    %350 = arith.mulf %326, %349 : vector<16x128xf32>
    %351 = arith.addf %348, %350 : vector<16x128xf32>
    %352 = vector.broadcast %41 : f32 to vector<16x128xf32>
    %353 = arith.addf %351, %352 : vector<16x128xf32>
    %354 = math.tanh %353 : vector<16x128xf32>
    %355 = vector.broadcast %2 : f32 to vector<16x128xf32>
    %356 = arith.mulf %320, %355 : vector<16x128xf32>
    %357 = vector.broadcast %12 : f32 to vector<16x128xf32>
    %358 = arith.mulf %322, %357 : vector<16x128xf32>
    %359 = arith.addf %356, %358 : vector<16x128xf32>
    %360 = vector.broadcast %22 : f32 to vector<16x128xf32>
    %361 = arith.mulf %324, %360 : vector<16x128xf32>
    %362 = arith.addf %359, %361 : vector<16x128xf32>
    %363 = vector.broadcast %32 : f32 to vector<16x128xf32>
    %364 = arith.mulf %326, %363 : vector<16x128xf32>
    %365 = arith.addf %362, %364 : vector<16x128xf32>
    %366 = vector.broadcast %42 : f32 to vector<16x128xf32>
    %367 = arith.addf %365, %366 : vector<16x128xf32>
    %368 = math.tanh %367 : vector<16x128xf32>
    %369 = vector.broadcast %3 : f32 to vector<16x128xf32>
    %370 = arith.mulf %320, %369 : vector<16x128xf32>
    %371 = vector.broadcast %13 : f32 to vector<16x128xf32>
    %372 = arith.mulf %322, %371 : vector<16x128xf32>
    %373 = arith.addf %370, %372 : vector<16x128xf32>
    %374 = vector.broadcast %23 : f32 to vector<16x128xf32>
    %375 = arith.mulf %324, %374 : vector<16x128xf32>
    %376 = arith.addf %373, %375 : vector<16x128xf32>
    %377 = vector.broadcast %33 : f32 to vector<16x128xf32>
    %378 = arith.mulf %326, %377 : vector<16x128xf32>
    %379 = arith.addf %376, %378 : vector<16x128xf32>
    %380 = vector.broadcast %43 : f32 to vector<16x128xf32>
    %381 = arith.addf %379, %380 : vector<16x128xf32>
    %382 = math.tanh %381 : vector<16x128xf32>
    %383 = vector.broadcast %4 : f32 to vector<16x128xf32>
    %384 = arith.mulf %320, %383 : vector<16x128xf32>
    %385 = vector.broadcast %14 : f32 to vector<16x128xf32>
    %386 = arith.mulf %322, %385 : vector<16x128xf32>
    %387 = arith.addf %384, %386 : vector<16x128xf32>
    %388 = vector.broadcast %24 : f32 to vector<16x128xf32>
    %389 = arith.mulf %324, %388 : vector<16x128xf32>
    %390 = arith.addf %387, %389 : vector<16x128xf32>
    %391 = vector.broadcast %34 : f32 to vector<16x128xf32>
    %392 = arith.mulf %326, %391 : vector<16x128xf32>
    %393 = arith.addf %390, %392 : vector<16x128xf32>
    %394 = vector.broadcast %44 : f32 to vector<16x128xf32>
    %395 = arith.addf %393, %394 : vector<16x128xf32>
    %396 = math.tanh %395 : vector<16x128xf32>
    %397 = vector.broadcast %5 : f32 to vector<16x128xf32>
    %398 = arith.mulf %320, %397 : vector<16x128xf32>
    %399 = vector.broadcast %15 : f32 to vector<16x128xf32>
    %400 = arith.mulf %322, %399 : vector<16x128xf32>
    %401 = arith.addf %398, %400 : vector<16x128xf32>
    %402 = vector.broadcast %25 : f32 to vector<16x128xf32>
    %403 = arith.mulf %324, %402 : vector<16x128xf32>
    %404 = arith.addf %401, %403 : vector<16x128xf32>
    %405 = vector.broadcast %35 : f32 to vector<16x128xf32>
    %406 = arith.mulf %326, %405 : vector<16x128xf32>
    %407 = arith.addf %404, %406 : vector<16x128xf32>
    %408 = vector.broadcast %45 : f32 to vector<16x128xf32>
    %409 = arith.addf %407, %408 : vector<16x128xf32>
    %410 = math.tanh %409 : vector<16x128xf32>
    %411 = vector.broadcast %6 : f32 to vector<16x128xf32>
    %412 = arith.mulf %320, %411 : vector<16x128xf32>
    %413 = vector.broadcast %16 : f32 to vector<16x128xf32>
    %414 = arith.mulf %322, %413 : vector<16x128xf32>
    %415 = arith.addf %412, %414 : vector<16x128xf32>
    %416 = vector.broadcast %26 : f32 to vector<16x128xf32>
    %417 = arith.mulf %324, %416 : vector<16x128xf32>
    %418 = arith.addf %415, %417 : vector<16x128xf32>
    %419 = vector.broadcast %36 : f32 to vector<16x128xf32>
    %420 = arith.mulf %326, %419 : vector<16x128xf32>
    %421 = arith.addf %418, %420 : vector<16x128xf32>
    %422 = vector.broadcast %46 : f32 to vector<16x128xf32>
    %423 = arith.addf %421, %422 : vector<16x128xf32>
    %424 = math.tanh %423 : vector<16x128xf32>
    %425 = vector.broadcast %7 : f32 to vector<16x128xf32>
    %426 = arith.mulf %320, %425 : vector<16x128xf32>
    %427 = vector.broadcast %17 : f32 to vector<16x128xf32>
    %428 = arith.mulf %322, %427 : vector<16x128xf32>
    %429 = arith.addf %426, %428 : vector<16x128xf32>
    %430 = vector.broadcast %27 : f32 to vector<16x128xf32>
    %431 = arith.mulf %324, %430 : vector<16x128xf32>
    %432 = arith.addf %429, %431 : vector<16x128xf32>
    %433 = vector.broadcast %37 : f32 to vector<16x128xf32>
    %434 = arith.mulf %326, %433 : vector<16x128xf32>
    %435 = arith.addf %432, %434 : vector<16x128xf32>
    %436 = vector.broadcast %47 : f32 to vector<16x128xf32>
    %437 = arith.addf %435, %436 : vector<16x128xf32>
    %438 = math.tanh %437 : vector<16x128xf32>
    %439 = vector.broadcast %8 : f32 to vector<16x128xf32>
    %440 = arith.mulf %320, %439 : vector<16x128xf32>
    %441 = vector.broadcast %18 : f32 to vector<16x128xf32>
    %442 = arith.mulf %322, %441 : vector<16x128xf32>
    %443 = arith.addf %440, %442 : vector<16x128xf32>
    %444 = vector.broadcast %28 : f32 to vector<16x128xf32>
    %445 = arith.mulf %324, %444 : vector<16x128xf32>
    %446 = arith.addf %443, %445 : vector<16x128xf32>
    %447 = vector.broadcast %38 : f32 to vector<16x128xf32>
    %448 = arith.mulf %326, %447 : vector<16x128xf32>
    %449 = arith.addf %446, %448 : vector<16x128xf32>
    %450 = vector.broadcast %48 : f32 to vector<16x128xf32>
    %451 = arith.addf %449, %450 : vector<16x128xf32>
    %452 = math.tanh %451 : vector<16x128xf32>
    %453 = vector.broadcast %9 : f32 to vector<16x128xf32>
    %454 = arith.mulf %320, %453 : vector<16x128xf32>
    %455 = vector.broadcast %19 : f32 to vector<16x128xf32>
    %456 = arith.mulf %322, %455 : vector<16x128xf32>
    %457 = arith.addf %454, %456 : vector<16x128xf32>
    %458 = vector.broadcast %29 : f32 to vector<16x128xf32>
    %459 = arith.mulf %324, %458 : vector<16x128xf32>
    %460 = arith.addf %457, %459 : vector<16x128xf32>
    %461 = vector.broadcast %39 : f32 to vector<16x128xf32>
    %462 = arith.mulf %326, %461 : vector<16x128xf32>
    %463 = arith.addf %460, %462 : vector<16x128xf32>
    %464 = vector.broadcast %49 : f32 to vector<16x128xf32>
    %465 = arith.addf %463, %464 : vector<16x128xf32>
    %466 = math.tanh %465 : vector<16x128xf32>
    %467 = vector.broadcast %50 : f32 to vector<16x128xf32>
    %468 = arith.mulf %340, %467 : vector<16x128xf32>
    %469 = vector.broadcast %60 : f32 to vector<16x128xf32>
    %470 = arith.mulf %354, %469 : vector<16x128xf32>
    %471 = arith.addf %468, %470 : vector<16x128xf32>
    %472 = vector.broadcast %70 : f32 to vector<16x128xf32>
    %473 = arith.mulf %368, %472 : vector<16x128xf32>
    %474 = arith.addf %471, %473 : vector<16x128xf32>
    %475 = vector.broadcast %80 : f32 to vector<16x128xf32>
    %476 = arith.mulf %382, %475 : vector<16x128xf32>
    %477 = arith.addf %474, %476 : vector<16x128xf32>
    %478 = vector.broadcast %90 : f32 to vector<16x128xf32>
    %479 = arith.mulf %396, %478 : vector<16x128xf32>
    %480 = arith.addf %477, %479 : vector<16x128xf32>
    %481 = vector.broadcast %100 : f32 to vector<16x128xf32>
    %482 = arith.mulf %410, %481 : vector<16x128xf32>
    %483 = arith.addf %480, %482 : vector<16x128xf32>
    %484 = vector.broadcast %110 : f32 to vector<16x128xf32>
    %485 = arith.mulf %424, %484 : vector<16x128xf32>
    %486 = arith.addf %483, %485 : vector<16x128xf32>
    %487 = vector.broadcast %120 : f32 to vector<16x128xf32>
    %488 = arith.mulf %438, %487 : vector<16x128xf32>
    %489 = arith.addf %486, %488 : vector<16x128xf32>
    %490 = vector.broadcast %130 : f32 to vector<16x128xf32>
    %491 = arith.mulf %452, %490 : vector<16x128xf32>
    %492 = arith.addf %489, %491 : vector<16x128xf32>
    %493 = vector.broadcast %140 : f32 to vector<16x128xf32>
    %494 = arith.mulf %466, %493 : vector<16x128xf32>
    %495 = arith.addf %492, %494 : vector<16x128xf32>
    %496 = vector.broadcast %150 : f32 to vector<16x128xf32>
    %497 = arith.addf %495, %496 : vector<16x128xf32>
    %498 = math.tanh %497 : vector<16x128xf32>
    %499 = vector.broadcast %51 : f32 to vector<16x128xf32>
    %500 = arith.mulf %340, %499 : vector<16x128xf32>
    %501 = vector.broadcast %61 : f32 to vector<16x128xf32>
    %502 = arith.mulf %354, %501 : vector<16x128xf32>
    %503 = arith.addf %500, %502 : vector<16x128xf32>
    %504 = vector.broadcast %71 : f32 to vector<16x128xf32>
    %505 = arith.mulf %368, %504 : vector<16x128xf32>
    %506 = arith.addf %503, %505 : vector<16x128xf32>
    %507 = vector.broadcast %81 : f32 to vector<16x128xf32>
    %508 = arith.mulf %382, %507 : vector<16x128xf32>
    %509 = arith.addf %506, %508 : vector<16x128xf32>
    %510 = vector.broadcast %91 : f32 to vector<16x128xf32>
    %511 = arith.mulf %396, %510 : vector<16x128xf32>
    %512 = arith.addf %509, %511 : vector<16x128xf32>
    %513 = vector.broadcast %101 : f32 to vector<16x128xf32>
    %514 = arith.mulf %410, %513 : vector<16x128xf32>
    %515 = arith.addf %512, %514 : vector<16x128xf32>
    %516 = vector.broadcast %111 : f32 to vector<16x128xf32>
    %517 = arith.mulf %424, %516 : vector<16x128xf32>
    %518 = arith.addf %515, %517 : vector<16x128xf32>
    %519 = vector.broadcast %121 : f32 to vector<16x128xf32>
    %520 = arith.mulf %438, %519 : vector<16x128xf32>
    %521 = arith.addf %518, %520 : vector<16x128xf32>
    %522 = vector.broadcast %131 : f32 to vector<16x128xf32>
    %523 = arith.mulf %452, %522 : vector<16x128xf32>
    %524 = arith.addf %521, %523 : vector<16x128xf32>
    %525 = vector.broadcast %141 : f32 to vector<16x128xf32>
    %526 = arith.mulf %466, %525 : vector<16x128xf32>
    %527 = arith.addf %524, %526 : vector<16x128xf32>
    %528 = vector.broadcast %151 : f32 to vector<16x128xf32>
    %529 = arith.addf %527, %528 : vector<16x128xf32>
    %530 = math.tanh %529 : vector<16x128xf32>
    %531 = vector.broadcast %52 : f32 to vector<16x128xf32>
    %532 = arith.mulf %340, %531 : vector<16x128xf32>
    %533 = vector.broadcast %62 : f32 to vector<16x128xf32>
    %534 = arith.mulf %354, %533 : vector<16x128xf32>
    %535 = arith.addf %532, %534 : vector<16x128xf32>
    %536 = vector.broadcast %72 : f32 to vector<16x128xf32>
    %537 = arith.mulf %368, %536 : vector<16x128xf32>
    %538 = arith.addf %535, %537 : vector<16x128xf32>
    %539 = vector.broadcast %82 : f32 to vector<16x128xf32>
    %540 = arith.mulf %382, %539 : vector<16x128xf32>
    %541 = arith.addf %538, %540 : vector<16x128xf32>
    %542 = vector.broadcast %92 : f32 to vector<16x128xf32>
    %543 = arith.mulf %396, %542 : vector<16x128xf32>
    %544 = arith.addf %541, %543 : vector<16x128xf32>
    %545 = vector.broadcast %102 : f32 to vector<16x128xf32>
    %546 = arith.mulf %410, %545 : vector<16x128xf32>
    %547 = arith.addf %544, %546 : vector<16x128xf32>
    %548 = vector.broadcast %112 : f32 to vector<16x128xf32>
    %549 = arith.mulf %424, %548 : vector<16x128xf32>
    %550 = arith.addf %547, %549 : vector<16x128xf32>
    %551 = vector.broadcast %122 : f32 to vector<16x128xf32>
    %552 = arith.mulf %438, %551 : vector<16x128xf32>
    %553 = arith.addf %550, %552 : vector<16x128xf32>
    %554 = vector.broadcast %132 : f32 to vector<16x128xf32>
    %555 = arith.mulf %452, %554 : vector<16x128xf32>
    %556 = arith.addf %553, %555 : vector<16x128xf32>
    %557 = vector.broadcast %142 : f32 to vector<16x128xf32>
    %558 = arith.mulf %466, %557 : vector<16x128xf32>
    %559 = arith.addf %556, %558 : vector<16x128xf32>
    %560 = vector.broadcast %152 : f32 to vector<16x128xf32>
    %561 = arith.addf %559, %560 : vector<16x128xf32>
    %562 = math.tanh %561 : vector<16x128xf32>
    %563 = vector.broadcast %53 : f32 to vector<16x128xf32>
    %564 = arith.mulf %340, %563 : vector<16x128xf32>
    %565 = vector.broadcast %63 : f32 to vector<16x128xf32>
    %566 = arith.mulf %354, %565 : vector<16x128xf32>
    %567 = arith.addf %564, %566 : vector<16x128xf32>
    %568 = vector.broadcast %73 : f32 to vector<16x128xf32>
    %569 = arith.mulf %368, %568 : vector<16x128xf32>
    %570 = arith.addf %567, %569 : vector<16x128xf32>
    %571 = vector.broadcast %83 : f32 to vector<16x128xf32>
    %572 = arith.mulf %382, %571 : vector<16x128xf32>
    %573 = arith.addf %570, %572 : vector<16x128xf32>
    %574 = vector.broadcast %93 : f32 to vector<16x128xf32>
    %575 = arith.mulf %396, %574 : vector<16x128xf32>
    %576 = arith.addf %573, %575 : vector<16x128xf32>
    %577 = vector.broadcast %103 : f32 to vector<16x128xf32>
    %578 = arith.mulf %410, %577 : vector<16x128xf32>
    %579 = arith.addf %576, %578 : vector<16x128xf32>
    %580 = vector.broadcast %113 : f32 to vector<16x128xf32>
    %581 = arith.mulf %424, %580 : vector<16x128xf32>
    %582 = arith.addf %579, %581 : vector<16x128xf32>
    %583 = vector.broadcast %123 : f32 to vector<16x128xf32>
    %584 = arith.mulf %438, %583 : vector<16x128xf32>
    %585 = arith.addf %582, %584 : vector<16x128xf32>
    %586 = vector.broadcast %133 : f32 to vector<16x128xf32>
    %587 = arith.mulf %452, %586 : vector<16x128xf32>
    %588 = arith.addf %585, %587 : vector<16x128xf32>
    %589 = vector.broadcast %143 : f32 to vector<16x128xf32>
    %590 = arith.mulf %466, %589 : vector<16x128xf32>
    %591 = arith.addf %588, %590 : vector<16x128xf32>
    %592 = vector.broadcast %153 : f32 to vector<16x128xf32>
    %593 = arith.addf %591, %592 : vector<16x128xf32>
    %594 = math.tanh %593 : vector<16x128xf32>
    %595 = vector.broadcast %54 : f32 to vector<16x128xf32>
    %596 = arith.mulf %340, %595 : vector<16x128xf32>
    %597 = vector.broadcast %64 : f32 to vector<16x128xf32>
    %598 = arith.mulf %354, %597 : vector<16x128xf32>
    %599 = arith.addf %596, %598 : vector<16x128xf32>
    %600 = vector.broadcast %74 : f32 to vector<16x128xf32>
    %601 = arith.mulf %368, %600 : vector<16x128xf32>
    %602 = arith.addf %599, %601 : vector<16x128xf32>
    %603 = vector.broadcast %84 : f32 to vector<16x128xf32>
    %604 = arith.mulf %382, %603 : vector<16x128xf32>
    %605 = arith.addf %602, %604 : vector<16x128xf32>
    %606 = vector.broadcast %94 : f32 to vector<16x128xf32>
    %607 = arith.mulf %396, %606 : vector<16x128xf32>
    %608 = arith.addf %605, %607 : vector<16x128xf32>
    %609 = vector.broadcast %104 : f32 to vector<16x128xf32>
    %610 = arith.mulf %410, %609 : vector<16x128xf32>
    %611 = arith.addf %608, %610 : vector<16x128xf32>
    %612 = vector.broadcast %114 : f32 to vector<16x128xf32>
    %613 = arith.mulf %424, %612 : vector<16x128xf32>
    %614 = arith.addf %611, %613 : vector<16x128xf32>
    %615 = vector.broadcast %124 : f32 to vector<16x128xf32>
    %616 = arith.mulf %438, %615 : vector<16x128xf32>
    %617 = arith.addf %614, %616 : vector<16x128xf32>
    %618 = vector.broadcast %134 : f32 to vector<16x128xf32>
    %619 = arith.mulf %452, %618 : vector<16x128xf32>
    %620 = arith.addf %617, %619 : vector<16x128xf32>
    %621 = vector.broadcast %144 : f32 to vector<16x128xf32>
    %622 = arith.mulf %466, %621 : vector<16x128xf32>
    %623 = arith.addf %620, %622 : vector<16x128xf32>
    %624 = vector.broadcast %154 : f32 to vector<16x128xf32>
    %625 = arith.addf %623, %624 : vector<16x128xf32>
    %626 = math.tanh %625 : vector<16x128xf32>
    %627 = vector.broadcast %55 : f32 to vector<16x128xf32>
    %628 = arith.mulf %340, %627 : vector<16x128xf32>
    %629 = vector.broadcast %65 : f32 to vector<16x128xf32>
    %630 = arith.mulf %354, %629 : vector<16x128xf32>
    %631 = arith.addf %628, %630 : vector<16x128xf32>
    %632 = vector.broadcast %75 : f32 to vector<16x128xf32>
    %633 = arith.mulf %368, %632 : vector<16x128xf32>
    %634 = arith.addf %631, %633 : vector<16x128xf32>
    %635 = vector.broadcast %85 : f32 to vector<16x128xf32>
    %636 = arith.mulf %382, %635 : vector<16x128xf32>
    %637 = arith.addf %634, %636 : vector<16x128xf32>
    %638 = vector.broadcast %95 : f32 to vector<16x128xf32>
    %639 = arith.mulf %396, %638 : vector<16x128xf32>
    %640 = arith.addf %637, %639 : vector<16x128xf32>
    %641 = vector.broadcast %105 : f32 to vector<16x128xf32>
    %642 = arith.mulf %410, %641 : vector<16x128xf32>
    %643 = arith.addf %640, %642 : vector<16x128xf32>
    %644 = vector.broadcast %115 : f32 to vector<16x128xf32>
    %645 = arith.mulf %424, %644 : vector<16x128xf32>
    %646 = arith.addf %643, %645 : vector<16x128xf32>
    %647 = vector.broadcast %125 : f32 to vector<16x128xf32>
    %648 = arith.mulf %438, %647 : vector<16x128xf32>
    %649 = arith.addf %646, %648 : vector<16x128xf32>
    %650 = vector.broadcast %135 : f32 to vector<16x128xf32>
    %651 = arith.mulf %452, %650 : vector<16x128xf32>
    %652 = arith.addf %649, %651 : vector<16x128xf32>
    %653 = vector.broadcast %145 : f32 to vector<16x128xf32>
    %654 = arith.mulf %466, %653 : vector<16x128xf32>
    %655 = arith.addf %652, %654 : vector<16x128xf32>
    %656 = vector.broadcast %155 : f32 to vector<16x128xf32>
    %657 = arith.addf %655, %656 : vector<16x128xf32>
    %658 = math.tanh %657 : vector<16x128xf32>
    %659 = vector.broadcast %56 : f32 to vector<16x128xf32>
    %660 = arith.mulf %340, %659 : vector<16x128xf32>
    %661 = vector.broadcast %66 : f32 to vector<16x128xf32>
    %662 = arith.mulf %354, %661 : vector<16x128xf32>
    %663 = arith.addf %660, %662 : vector<16x128xf32>
    %664 = vector.broadcast %76 : f32 to vector<16x128xf32>
    %665 = arith.mulf %368, %664 : vector<16x128xf32>
    %666 = arith.addf %663, %665 : vector<16x128xf32>
    %667 = vector.broadcast %86 : f32 to vector<16x128xf32>
    %668 = arith.mulf %382, %667 : vector<16x128xf32>
    %669 = arith.addf %666, %668 : vector<16x128xf32>
    %670 = vector.broadcast %96 : f32 to vector<16x128xf32>
    %671 = arith.mulf %396, %670 : vector<16x128xf32>
    %672 = arith.addf %669, %671 : vector<16x128xf32>
    %673 = vector.broadcast %106 : f32 to vector<16x128xf32>
    %674 = arith.mulf %410, %673 : vector<16x128xf32>
    %675 = arith.addf %672, %674 : vector<16x128xf32>
    %676 = vector.broadcast %116 : f32 to vector<16x128xf32>
    %677 = arith.mulf %424, %676 : vector<16x128xf32>
    %678 = arith.addf %675, %677 : vector<16x128xf32>
    %679 = vector.broadcast %126 : f32 to vector<16x128xf32>
    %680 = arith.mulf %438, %679 : vector<16x128xf32>
    %681 = arith.addf %678, %680 : vector<16x128xf32>
    %682 = vector.broadcast %136 : f32 to vector<16x128xf32>
    %683 = arith.mulf %452, %682 : vector<16x128xf32>
    %684 = arith.addf %681, %683 : vector<16x128xf32>
    %685 = vector.broadcast %146 : f32 to vector<16x128xf32>
    %686 = arith.mulf %466, %685 : vector<16x128xf32>
    %687 = arith.addf %684, %686 : vector<16x128xf32>
    %688 = vector.broadcast %156 : f32 to vector<16x128xf32>
    %689 = arith.addf %687, %688 : vector<16x128xf32>
    %690 = math.tanh %689 : vector<16x128xf32>
    %691 = vector.broadcast %57 : f32 to vector<16x128xf32>
    %692 = arith.mulf %340, %691 : vector<16x128xf32>
    %693 = vector.broadcast %67 : f32 to vector<16x128xf32>
    %694 = arith.mulf %354, %693 : vector<16x128xf32>
    %695 = arith.addf %692, %694 : vector<16x128xf32>
    %696 = vector.broadcast %77 : f32 to vector<16x128xf32>
    %697 = arith.mulf %368, %696 : vector<16x128xf32>
    %698 = arith.addf %695, %697 : vector<16x128xf32>
    %699 = vector.broadcast %87 : f32 to vector<16x128xf32>
    %700 = arith.mulf %382, %699 : vector<16x128xf32>
    %701 = arith.addf %698, %700 : vector<16x128xf32>
    %702 = vector.broadcast %97 : f32 to vector<16x128xf32>
    %703 = arith.mulf %396, %702 : vector<16x128xf32>
    %704 = arith.addf %701, %703 : vector<16x128xf32>
    %705 = vector.broadcast %107 : f32 to vector<16x128xf32>
    %706 = arith.mulf %410, %705 : vector<16x128xf32>
    %707 = arith.addf %704, %706 : vector<16x128xf32>
    %708 = vector.broadcast %117 : f32 to vector<16x128xf32>
    %709 = arith.mulf %424, %708 : vector<16x128xf32>
    %710 = arith.addf %707, %709 : vector<16x128xf32>
    %711 = vector.broadcast %127 : f32 to vector<16x128xf32>
    %712 = arith.mulf %438, %711 : vector<16x128xf32>
    %713 = arith.addf %710, %712 : vector<16x128xf32>
    %714 = vector.broadcast %137 : f32 to vector<16x128xf32>
    %715 = arith.mulf %452, %714 : vector<16x128xf32>
    %716 = arith.addf %713, %715 : vector<16x128xf32>
    %717 = vector.broadcast %147 : f32 to vector<16x128xf32>
    %718 = arith.mulf %466, %717 : vector<16x128xf32>
    %719 = arith.addf %716, %718 : vector<16x128xf32>
    %720 = vector.broadcast %157 : f32 to vector<16x128xf32>
    %721 = arith.addf %719, %720 : vector<16x128xf32>
    %722 = math.tanh %721 : vector<16x128xf32>
    %723 = vector.broadcast %58 : f32 to vector<16x128xf32>
    %724 = arith.mulf %340, %723 : vector<16x128xf32>
    %725 = vector.broadcast %68 : f32 to vector<16x128xf32>
    %726 = arith.mulf %354, %725 : vector<16x128xf32>
    %727 = arith.addf %724, %726 : vector<16x128xf32>
    %728 = vector.broadcast %78 : f32 to vector<16x128xf32>
    %729 = arith.mulf %368, %728 : vector<16x128xf32>
    %730 = arith.addf %727, %729 : vector<16x128xf32>
    %731 = vector.broadcast %88 : f32 to vector<16x128xf32>
    %732 = arith.mulf %382, %731 : vector<16x128xf32>
    %733 = arith.addf %730, %732 : vector<16x128xf32>
    %734 = vector.broadcast %98 : f32 to vector<16x128xf32>
    %735 = arith.mulf %396, %734 : vector<16x128xf32>
    %736 = arith.addf %733, %735 : vector<16x128xf32>
    %737 = vector.broadcast %108 : f32 to vector<16x128xf32>
    %738 = arith.mulf %410, %737 : vector<16x128xf32>
    %739 = arith.addf %736, %738 : vector<16x128xf32>
    %740 = vector.broadcast %118 : f32 to vector<16x128xf32>
    %741 = arith.mulf %424, %740 : vector<16x128xf32>
    %742 = arith.addf %739, %741 : vector<16x128xf32>
    %743 = vector.broadcast %128 : f32 to vector<16x128xf32>
    %744 = arith.mulf %438, %743 : vector<16x128xf32>
    %745 = arith.addf %742, %744 : vector<16x128xf32>
    %746 = vector.broadcast %138 : f32 to vector<16x128xf32>
    %747 = arith.mulf %452, %746 : vector<16x128xf32>
    %748 = arith.addf %745, %747 : vector<16x128xf32>
    %749 = vector.broadcast %148 : f32 to vector<16x128xf32>
    %750 = arith.mulf %466, %749 : vector<16x128xf32>
    %751 = arith.addf %748, %750 : vector<16x128xf32>
    %752 = vector.broadcast %158 : f32 to vector<16x128xf32>
    %753 = arith.addf %751, %752 : vector<16x128xf32>
    %754 = math.tanh %753 : vector<16x128xf32>
    %755 = vector.broadcast %59 : f32 to vector<16x128xf32>
    %756 = arith.mulf %340, %755 : vector<16x128xf32>
    %757 = vector.broadcast %69 : f32 to vector<16x128xf32>
    %758 = arith.mulf %354, %757 : vector<16x128xf32>
    %759 = arith.addf %756, %758 : vector<16x128xf32>
    %760 = vector.broadcast %79 : f32 to vector<16x128xf32>
    %761 = arith.mulf %368, %760 : vector<16x128xf32>
    %762 = arith.addf %759, %761 : vector<16x128xf32>
    %763 = vector.broadcast %89 : f32 to vector<16x128xf32>
    %764 = arith.mulf %382, %763 : vector<16x128xf32>
    %765 = arith.addf %762, %764 : vector<16x128xf32>
    %766 = vector.broadcast %99 : f32 to vector<16x128xf32>
    %767 = arith.mulf %396, %766 : vector<16x128xf32>
    %768 = arith.addf %765, %767 : vector<16x128xf32>
    %769 = vector.broadcast %109 : f32 to vector<16x128xf32>
    %770 = arith.mulf %410, %769 : vector<16x128xf32>
    %771 = arith.addf %768, %770 : vector<16x128xf32>
    %772 = vector.broadcast %119 : f32 to vector<16x128xf32>
    %773 = arith.mulf %424, %772 : vector<16x128xf32>
    %774 = arith.addf %771, %773 : vector<16x128xf32>
    %775 = vector.broadcast %129 : f32 to vector<16x128xf32>
    %776 = arith.mulf %438, %775 : vector<16x128xf32>
    %777 = arith.addf %774, %776 : vector<16x128xf32>
    %778 = vector.broadcast %139 : f32 to vector<16x128xf32>
    %779 = arith.mulf %452, %778 : vector<16x128xf32>
    %780 = arith.addf %777, %779 : vector<16x128xf32>
    %781 = vector.broadcast %149 : f32 to vector<16x128xf32>
    %782 = arith.mulf %466, %781 : vector<16x128xf32>
    %783 = arith.addf %780, %782 : vector<16x128xf32>
    %784 = vector.broadcast %159 : f32 to vector<16x128xf32>
    %785 = arith.addf %783, %784 : vector<16x128xf32>
    %786 = math.tanh %785 : vector<16x128xf32>
    %787 = vector.broadcast %160 : f32 to vector<16x128xf32>
    %788 = arith.mulf %498, %787 : vector<16x128xf32>
    %789 = vector.broadcast %170 : f32 to vector<16x128xf32>
    %790 = arith.mulf %530, %789 : vector<16x128xf32>
    %791 = arith.addf %788, %790 : vector<16x128xf32>
    %792 = vector.broadcast %180 : f32 to vector<16x128xf32>
    %793 = arith.mulf %562, %792 : vector<16x128xf32>
    %794 = arith.addf %791, %793 : vector<16x128xf32>
    %795 = vector.broadcast %190 : f32 to vector<16x128xf32>
    %796 = arith.mulf %594, %795 : vector<16x128xf32>
    %797 = arith.addf %794, %796 : vector<16x128xf32>
    %798 = vector.broadcast %200 : f32 to vector<16x128xf32>
    %799 = arith.mulf %626, %798 : vector<16x128xf32>
    %800 = arith.addf %797, %799 : vector<16x128xf32>
    %801 = vector.broadcast %210 : f32 to vector<16x128xf32>
    %802 = arith.mulf %658, %801 : vector<16x128xf32>
    %803 = arith.addf %800, %802 : vector<16x128xf32>
    %804 = vector.broadcast %220 : f32 to vector<16x128xf32>
    %805 = arith.mulf %690, %804 : vector<16x128xf32>
    %806 = arith.addf %803, %805 : vector<16x128xf32>
    %807 = vector.broadcast %230 : f32 to vector<16x128xf32>
    %808 = arith.mulf %722, %807 : vector<16x128xf32>
    %809 = arith.addf %806, %808 : vector<16x128xf32>
    %810 = vector.broadcast %240 : f32 to vector<16x128xf32>
    %811 = arith.mulf %754, %810 : vector<16x128xf32>
    %812 = arith.addf %809, %811 : vector<16x128xf32>
    %813 = vector.broadcast %250 : f32 to vector<16x128xf32>
    %814 = arith.mulf %786, %813 : vector<16x128xf32>
    %815 = arith.addf %812, %814 : vector<16x128xf32>
    %816 = vector.broadcast %260 : f32 to vector<16x128xf32>
    %817 = arith.addf %815, %816 : vector<16x128xf32>
    %818 = math.tanh %817 : vector<16x128xf32>
    %819 = vector.broadcast %161 : f32 to vector<16x128xf32>
    %820 = arith.mulf %498, %819 : vector<16x128xf32>
    %821 = vector.broadcast %171 : f32 to vector<16x128xf32>
    %822 = arith.mulf %530, %821 : vector<16x128xf32>
    %823 = arith.addf %820, %822 : vector<16x128xf32>
    %824 = vector.broadcast %181 : f32 to vector<16x128xf32>
    %825 = arith.mulf %562, %824 : vector<16x128xf32>
    %826 = arith.addf %823, %825 : vector<16x128xf32>
    %827 = vector.broadcast %191 : f32 to vector<16x128xf32>
    %828 = arith.mulf %594, %827 : vector<16x128xf32>
    %829 = arith.addf %826, %828 : vector<16x128xf32>
    %830 = vector.broadcast %201 : f32 to vector<16x128xf32>
    %831 = arith.mulf %626, %830 : vector<16x128xf32>
    %832 = arith.addf %829, %831 : vector<16x128xf32>
    %833 = vector.broadcast %211 : f32 to vector<16x128xf32>
    %834 = arith.mulf %658, %833 : vector<16x128xf32>
    %835 = arith.addf %832, %834 : vector<16x128xf32>
    %836 = vector.broadcast %221 : f32 to vector<16x128xf32>
    %837 = arith.mulf %690, %836 : vector<16x128xf32>
    %838 = arith.addf %835, %837 : vector<16x128xf32>
    %839 = vector.broadcast %231 : f32 to vector<16x128xf32>
    %840 = arith.mulf %722, %839 : vector<16x128xf32>
    %841 = arith.addf %838, %840 : vector<16x128xf32>
    %842 = vector.broadcast %241 : f32 to vector<16x128xf32>
    %843 = arith.mulf %754, %842 : vector<16x128xf32>
    %844 = arith.addf %841, %843 : vector<16x128xf32>
    %845 = vector.broadcast %251 : f32 to vector<16x128xf32>
    %846 = arith.mulf %786, %845 : vector<16x128xf32>
    %847 = arith.addf %844, %846 : vector<16x128xf32>
    %848 = vector.broadcast %261 : f32 to vector<16x128xf32>
    %849 = arith.addf %847, %848 : vector<16x128xf32>
    %850 = math.tanh %849 : vector<16x128xf32>
    %851 = vector.broadcast %162 : f32 to vector<16x128xf32>
    %852 = arith.mulf %498, %851 : vector<16x128xf32>
    %853 = vector.broadcast %172 : f32 to vector<16x128xf32>
    %854 = arith.mulf %530, %853 : vector<16x128xf32>
    %855 = arith.addf %852, %854 : vector<16x128xf32>
    %856 = vector.broadcast %182 : f32 to vector<16x128xf32>
    %857 = arith.mulf %562, %856 : vector<16x128xf32>
    %858 = arith.addf %855, %857 : vector<16x128xf32>
    %859 = vector.broadcast %192 : f32 to vector<16x128xf32>
    %860 = arith.mulf %594, %859 : vector<16x128xf32>
    %861 = arith.addf %858, %860 : vector<16x128xf32>
    %862 = vector.broadcast %202 : f32 to vector<16x128xf32>
    %863 = arith.mulf %626, %862 : vector<16x128xf32>
    %864 = arith.addf %861, %863 : vector<16x128xf32>
    %865 = vector.broadcast %212 : f32 to vector<16x128xf32>
    %866 = arith.mulf %658, %865 : vector<16x128xf32>
    %867 = arith.addf %864, %866 : vector<16x128xf32>
    %868 = vector.broadcast %222 : f32 to vector<16x128xf32>
    %869 = arith.mulf %690, %868 : vector<16x128xf32>
    %870 = arith.addf %867, %869 : vector<16x128xf32>
    %871 = vector.broadcast %232 : f32 to vector<16x128xf32>
    %872 = arith.mulf %722, %871 : vector<16x128xf32>
    %873 = arith.addf %870, %872 : vector<16x128xf32>
    %874 = vector.broadcast %242 : f32 to vector<16x128xf32>
    %875 = arith.mulf %754, %874 : vector<16x128xf32>
    %876 = arith.addf %873, %875 : vector<16x128xf32>
    %877 = vector.broadcast %252 : f32 to vector<16x128xf32>
    %878 = arith.mulf %786, %877 : vector<16x128xf32>
    %879 = arith.addf %876, %878 : vector<16x128xf32>
    %880 = vector.broadcast %262 : f32 to vector<16x128xf32>
    %881 = arith.addf %879, %880 : vector<16x128xf32>
    %882 = math.tanh %881 : vector<16x128xf32>
    %883 = vector.broadcast %163 : f32 to vector<16x128xf32>
    %884 = arith.mulf %498, %883 : vector<16x128xf32>
    %885 = vector.broadcast %173 : f32 to vector<16x128xf32>
    %886 = arith.mulf %530, %885 : vector<16x128xf32>
    %887 = arith.addf %884, %886 : vector<16x128xf32>
    %888 = vector.broadcast %183 : f32 to vector<16x128xf32>
    %889 = arith.mulf %562, %888 : vector<16x128xf32>
    %890 = arith.addf %887, %889 : vector<16x128xf32>
    %891 = vector.broadcast %193 : f32 to vector<16x128xf32>
    %892 = arith.mulf %594, %891 : vector<16x128xf32>
    %893 = arith.addf %890, %892 : vector<16x128xf32>
    %894 = vector.broadcast %203 : f32 to vector<16x128xf32>
    %895 = arith.mulf %626, %894 : vector<16x128xf32>
    %896 = arith.addf %893, %895 : vector<16x128xf32>
    %897 = vector.broadcast %213 : f32 to vector<16x128xf32>
    %898 = arith.mulf %658, %897 : vector<16x128xf32>
    %899 = arith.addf %896, %898 : vector<16x128xf32>
    %900 = vector.broadcast %223 : f32 to vector<16x128xf32>
    %901 = arith.mulf %690, %900 : vector<16x128xf32>
    %902 = arith.addf %899, %901 : vector<16x128xf32>
    %903 = vector.broadcast %233 : f32 to vector<16x128xf32>
    %904 = arith.mulf %722, %903 : vector<16x128xf32>
    %905 = arith.addf %902, %904 : vector<16x128xf32>
    %906 = vector.broadcast %243 : f32 to vector<16x128xf32>
    %907 = arith.mulf %754, %906 : vector<16x128xf32>
    %908 = arith.addf %905, %907 : vector<16x128xf32>
    %909 = vector.broadcast %253 : f32 to vector<16x128xf32>
    %910 = arith.mulf %786, %909 : vector<16x128xf32>
    %911 = arith.addf %908, %910 : vector<16x128xf32>
    %912 = vector.broadcast %263 : f32 to vector<16x128xf32>
    %913 = arith.addf %911, %912 : vector<16x128xf32>
    %914 = math.tanh %913 : vector<16x128xf32>
    %915 = vector.broadcast %164 : f32 to vector<16x128xf32>
    %916 = arith.mulf %498, %915 : vector<16x128xf32>
    %917 = vector.broadcast %174 : f32 to vector<16x128xf32>
    %918 = arith.mulf %530, %917 : vector<16x128xf32>
    %919 = arith.addf %916, %918 : vector<16x128xf32>
    %920 = vector.broadcast %184 : f32 to vector<16x128xf32>
    %921 = arith.mulf %562, %920 : vector<16x128xf32>
    %922 = arith.addf %919, %921 : vector<16x128xf32>
    %923 = vector.broadcast %194 : f32 to vector<16x128xf32>
    %924 = arith.mulf %594, %923 : vector<16x128xf32>
    %925 = arith.addf %922, %924 : vector<16x128xf32>
    %926 = vector.broadcast %204 : f32 to vector<16x128xf32>
    %927 = arith.mulf %626, %926 : vector<16x128xf32>
    %928 = arith.addf %925, %927 : vector<16x128xf32>
    %929 = vector.broadcast %214 : f32 to vector<16x128xf32>
    %930 = arith.mulf %658, %929 : vector<16x128xf32>
    %931 = arith.addf %928, %930 : vector<16x128xf32>
    %932 = vector.broadcast %224 : f32 to vector<16x128xf32>
    %933 = arith.mulf %690, %932 : vector<16x128xf32>
    %934 = arith.addf %931, %933 : vector<16x128xf32>
    %935 = vector.broadcast %234 : f32 to vector<16x128xf32>
    %936 = arith.mulf %722, %935 : vector<16x128xf32>
    %937 = arith.addf %934, %936 : vector<16x128xf32>
    %938 = vector.broadcast %244 : f32 to vector<16x128xf32>
    %939 = arith.mulf %754, %938 : vector<16x128xf32>
    %940 = arith.addf %937, %939 : vector<16x128xf32>
    %941 = vector.broadcast %254 : f32 to vector<16x128xf32>
    %942 = arith.mulf %786, %941 : vector<16x128xf32>
    %943 = arith.addf %940, %942 : vector<16x128xf32>
    %944 = vector.broadcast %264 : f32 to vector<16x128xf32>
    %945 = arith.addf %943, %944 : vector<16x128xf32>
    %946 = math.tanh %945 : vector<16x128xf32>
    %947 = vector.broadcast %165 : f32 to vector<16x128xf32>
    %948 = arith.mulf %498, %947 : vector<16x128xf32>
    %949 = vector.broadcast %175 : f32 to vector<16x128xf32>
    %950 = arith.mulf %530, %949 : vector<16x128xf32>
    %951 = arith.addf %948, %950 : vector<16x128xf32>
    %952 = vector.broadcast %185 : f32 to vector<16x128xf32>
    %953 = arith.mulf %562, %952 : vector<16x128xf32>
    %954 = arith.addf %951, %953 : vector<16x128xf32>
    %955 = vector.broadcast %195 : f32 to vector<16x128xf32>
    %956 = arith.mulf %594, %955 : vector<16x128xf32>
    %957 = arith.addf %954, %956 : vector<16x128xf32>
    %958 = vector.broadcast %205 : f32 to vector<16x128xf32>
    %959 = arith.mulf %626, %958 : vector<16x128xf32>
    %960 = arith.addf %957, %959 : vector<16x128xf32>
    %961 = vector.broadcast %215 : f32 to vector<16x128xf32>
    %962 = arith.mulf %658, %961 : vector<16x128xf32>
    %963 = arith.addf %960, %962 : vector<16x128xf32>
    %964 = vector.broadcast %225 : f32 to vector<16x128xf32>
    %965 = arith.mulf %690, %964 : vector<16x128xf32>
    %966 = arith.addf %963, %965 : vector<16x128xf32>
    %967 = vector.broadcast %235 : f32 to vector<16x128xf32>
    %968 = arith.mulf %722, %967 : vector<16x128xf32>
    %969 = arith.addf %966, %968 : vector<16x128xf32>
    %970 = vector.broadcast %245 : f32 to vector<16x128xf32>
    %971 = arith.mulf %754, %970 : vector<16x128xf32>
    %972 = arith.addf %969, %971 : vector<16x128xf32>
    %973 = vector.broadcast %255 : f32 to vector<16x128xf32>
    %974 = arith.mulf %786, %973 : vector<16x128xf32>
    %975 = arith.addf %972, %974 : vector<16x128xf32>
    %976 = vector.broadcast %265 : f32 to vector<16x128xf32>
    %977 = arith.addf %975, %976 : vector<16x128xf32>
    %978 = math.tanh %977 : vector<16x128xf32>
    %979 = vector.broadcast %166 : f32 to vector<16x128xf32>
    %980 = arith.mulf %498, %979 : vector<16x128xf32>
    %981 = vector.broadcast %176 : f32 to vector<16x128xf32>
    %982 = arith.mulf %530, %981 : vector<16x128xf32>
    %983 = arith.addf %980, %982 : vector<16x128xf32>
    %984 = vector.broadcast %186 : f32 to vector<16x128xf32>
    %985 = arith.mulf %562, %984 : vector<16x128xf32>
    %986 = arith.addf %983, %985 : vector<16x128xf32>
    %987 = vector.broadcast %196 : f32 to vector<16x128xf32>
    %988 = arith.mulf %594, %987 : vector<16x128xf32>
    %989 = arith.addf %986, %988 : vector<16x128xf32>
    %990 = vector.broadcast %206 : f32 to vector<16x128xf32>
    %991 = arith.mulf %626, %990 : vector<16x128xf32>
    %992 = arith.addf %989, %991 : vector<16x128xf32>
    %993 = vector.broadcast %216 : f32 to vector<16x128xf32>
    %994 = arith.mulf %658, %993 : vector<16x128xf32>
    %995 = arith.addf %992, %994 : vector<16x128xf32>
    %996 = vector.broadcast %226 : f32 to vector<16x128xf32>
    %997 = arith.mulf %690, %996 : vector<16x128xf32>
    %998 = arith.addf %995, %997 : vector<16x128xf32>
    %999 = vector.broadcast %236 : f32 to vector<16x128xf32>
    %1000 = arith.mulf %722, %999 : vector<16x128xf32>
    %1001 = arith.addf %998, %1000 : vector<16x128xf32>
    %1002 = vector.broadcast %246 : f32 to vector<16x128xf32>
    %1003 = arith.mulf %754, %1002 : vector<16x128xf32>
    %1004 = arith.addf %1001, %1003 : vector<16x128xf32>
    %1005 = vector.broadcast %256 : f32 to vector<16x128xf32>
    %1006 = arith.mulf %786, %1005 : vector<16x128xf32>
    %1007 = arith.addf %1004, %1006 : vector<16x128xf32>
    %1008 = vector.broadcast %266 : f32 to vector<16x128xf32>
    %1009 = arith.addf %1007, %1008 : vector<16x128xf32>
    %1010 = math.tanh %1009 : vector<16x128xf32>
    %1011 = vector.broadcast %167 : f32 to vector<16x128xf32>
    %1012 = arith.mulf %498, %1011 : vector<16x128xf32>
    %1013 = vector.broadcast %177 : f32 to vector<16x128xf32>
    %1014 = arith.mulf %530, %1013 : vector<16x128xf32>
    %1015 = arith.addf %1012, %1014 : vector<16x128xf32>
    %1016 = vector.broadcast %187 : f32 to vector<16x128xf32>
    %1017 = arith.mulf %562, %1016 : vector<16x128xf32>
    %1018 = arith.addf %1015, %1017 : vector<16x128xf32>
    %1019 = vector.broadcast %197 : f32 to vector<16x128xf32>
    %1020 = arith.mulf %594, %1019 : vector<16x128xf32>
    %1021 = arith.addf %1018, %1020 : vector<16x128xf32>
    %1022 = vector.broadcast %207 : f32 to vector<16x128xf32>
    %1023 = arith.mulf %626, %1022 : vector<16x128xf32>
    %1024 = arith.addf %1021, %1023 : vector<16x128xf32>
    %1025 = vector.broadcast %217 : f32 to vector<16x128xf32>
    %1026 = arith.mulf %658, %1025 : vector<16x128xf32>
    %1027 = arith.addf %1024, %1026 : vector<16x128xf32>
    %1028 = vector.broadcast %227 : f32 to vector<16x128xf32>
    %1029 = arith.mulf %690, %1028 : vector<16x128xf32>
    %1030 = arith.addf %1027, %1029 : vector<16x128xf32>
    %1031 = vector.broadcast %237 : f32 to vector<16x128xf32>
    %1032 = arith.mulf %722, %1031 : vector<16x128xf32>
    %1033 = arith.addf %1030, %1032 : vector<16x128xf32>
    %1034 = vector.broadcast %247 : f32 to vector<16x128xf32>
    %1035 = arith.mulf %754, %1034 : vector<16x128xf32>
    %1036 = arith.addf %1033, %1035 : vector<16x128xf32>
    %1037 = vector.broadcast %257 : f32 to vector<16x128xf32>
    %1038 = arith.mulf %786, %1037 : vector<16x128xf32>
    %1039 = arith.addf %1036, %1038 : vector<16x128xf32>
    %1040 = vector.broadcast %267 : f32 to vector<16x128xf32>
    %1041 = arith.addf %1039, %1040 : vector<16x128xf32>
    %1042 = math.tanh %1041 : vector<16x128xf32>
    %1043 = vector.broadcast %168 : f32 to vector<16x128xf32>
    %1044 = arith.mulf %498, %1043 : vector<16x128xf32>
    %1045 = vector.broadcast %178 : f32 to vector<16x128xf32>
    %1046 = arith.mulf %530, %1045 : vector<16x128xf32>
    %1047 = arith.addf %1044, %1046 : vector<16x128xf32>
    %1048 = vector.broadcast %188 : f32 to vector<16x128xf32>
    %1049 = arith.mulf %562, %1048 : vector<16x128xf32>
    %1050 = arith.addf %1047, %1049 : vector<16x128xf32>
    %1051 = vector.broadcast %198 : f32 to vector<16x128xf32>
    %1052 = arith.mulf %594, %1051 : vector<16x128xf32>
    %1053 = arith.addf %1050, %1052 : vector<16x128xf32>
    %1054 = vector.broadcast %208 : f32 to vector<16x128xf32>
    %1055 = arith.mulf %626, %1054 : vector<16x128xf32>
    %1056 = arith.addf %1053, %1055 : vector<16x128xf32>
    %1057 = vector.broadcast %218 : f32 to vector<16x128xf32>
    %1058 = arith.mulf %658, %1057 : vector<16x128xf32>
    %1059 = arith.addf %1056, %1058 : vector<16x128xf32>
    %1060 = vector.broadcast %228 : f32 to vector<16x128xf32>
    %1061 = arith.mulf %690, %1060 : vector<16x128xf32>
    %1062 = arith.addf %1059, %1061 : vector<16x128xf32>
    %1063 = vector.broadcast %238 : f32 to vector<16x128xf32>
    %1064 = arith.mulf %722, %1063 : vector<16x128xf32>
    %1065 = arith.addf %1062, %1064 : vector<16x128xf32>
    %1066 = vector.broadcast %248 : f32 to vector<16x128xf32>
    %1067 = arith.mulf %754, %1066 : vector<16x128xf32>
    %1068 = arith.addf %1065, %1067 : vector<16x128xf32>
    %1069 = vector.broadcast %258 : f32 to vector<16x128xf32>
    %1070 = arith.mulf %786, %1069 : vector<16x128xf32>
    %1071 = arith.addf %1068, %1070 : vector<16x128xf32>
    %1072 = vector.broadcast %268 : f32 to vector<16x128xf32>
    %1073 = arith.addf %1071, %1072 : vector<16x128xf32>
    %1074 = math.tanh %1073 : vector<16x128xf32>
    %1075 = vector.broadcast %169 : f32 to vector<16x128xf32>
    %1076 = arith.mulf %498, %1075 : vector<16x128xf32>
    %1077 = vector.broadcast %179 : f32 to vector<16x128xf32>
    %1078 = arith.mulf %530, %1077 : vector<16x128xf32>
    %1079 = arith.addf %1076, %1078 : vector<16x128xf32>
    %1080 = vector.broadcast %189 : f32 to vector<16x128xf32>
    %1081 = arith.mulf %562, %1080 : vector<16x128xf32>
    %1082 = arith.addf %1079, %1081 : vector<16x128xf32>
    %1083 = vector.broadcast %199 : f32 to vector<16x128xf32>
    %1084 = arith.mulf %594, %1083 : vector<16x128xf32>
    %1085 = arith.addf %1082, %1084 : vector<16x128xf32>
    %1086 = vector.broadcast %209 : f32 to vector<16x128xf32>
    %1087 = arith.mulf %626, %1086 : vector<16x128xf32>
    %1088 = arith.addf %1085, %1087 : vector<16x128xf32>
    %1089 = vector.broadcast %219 : f32 to vector<16x128xf32>
    %1090 = arith.mulf %658, %1089 : vector<16x128xf32>
    %1091 = arith.addf %1088, %1090 : vector<16x128xf32>
    %1092 = vector.broadcast %229 : f32 to vector<16x128xf32>
    %1093 = arith.mulf %690, %1092 : vector<16x128xf32>
    %1094 = arith.addf %1091, %1093 : vector<16x128xf32>
    %1095 = vector.broadcast %239 : f32 to vector<16x128xf32>
    %1096 = arith.mulf %722, %1095 : vector<16x128xf32>
    %1097 = arith.addf %1094, %1096 : vector<16x128xf32>
    %1098 = vector.broadcast %249 : f32 to vector<16x128xf32>
    %1099 = arith.mulf %754, %1098 : vector<16x128xf32>
    %1100 = arith.addf %1097, %1099 : vector<16x128xf32>
    %1101 = vector.broadcast %259 : f32 to vector<16x128xf32>
    %1102 = arith.mulf %786, %1101 : vector<16x128xf32>
    %1103 = arith.addf %1100, %1102 : vector<16x128xf32>
    %1104 = vector.broadcast %269 : f32 to vector<16x128xf32>
    %1105 = arith.addf %1103, %1104 : vector<16x128xf32>
    %1106 = math.tanh %1105 : vector<16x128xf32>
    %1107 = vector.broadcast %270 : f32 to vector<16x128xf32>
    %1108 = arith.mulf %818, %1107 : vector<16x128xf32>
    %1109 = vector.broadcast %274 : f32 to vector<16x128xf32>
    %1110 = arith.mulf %850, %1109 : vector<16x128xf32>
    %1111 = arith.addf %1108, %1110 : vector<16x128xf32>
    %1112 = vector.broadcast %278 : f32 to vector<16x128xf32>
    %1113 = arith.mulf %882, %1112 : vector<16x128xf32>
    %1114 = arith.addf %1111, %1113 : vector<16x128xf32>
    %1115 = vector.broadcast %282 : f32 to vector<16x128xf32>
    %1116 = arith.mulf %914, %1115 : vector<16x128xf32>
    %1117 = arith.addf %1114, %1116 : vector<16x128xf32>
    %1118 = vector.broadcast %286 : f32 to vector<16x128xf32>
    %1119 = arith.mulf %946, %1118 : vector<16x128xf32>
    %1120 = arith.addf %1117, %1119 : vector<16x128xf32>
    %1121 = vector.broadcast %290 : f32 to vector<16x128xf32>
    %1122 = arith.mulf %978, %1121 : vector<16x128xf32>
    %1123 = arith.addf %1120, %1122 : vector<16x128xf32>
    %1124 = vector.broadcast %294 : f32 to vector<16x128xf32>
    %1125 = arith.mulf %1010, %1124 : vector<16x128xf32>
    %1126 = arith.addf %1123, %1125 : vector<16x128xf32>
    %1127 = vector.broadcast %298 : f32 to vector<16x128xf32>
    %1128 = arith.mulf %1042, %1127 : vector<16x128xf32>
    %1129 = arith.addf %1126, %1128 : vector<16x128xf32>
    %1130 = vector.broadcast %302 : f32 to vector<16x128xf32>
    %1131 = arith.mulf %1074, %1130 : vector<16x128xf32>
    %1132 = arith.addf %1129, %1131 : vector<16x128xf32>
    %1133 = vector.broadcast %306 : f32 to vector<16x128xf32>
    %1134 = arith.mulf %1106, %1133 : vector<16x128xf32>
    %1135 = arith.addf %1132, %1134 : vector<16x128xf32>
    %1136 = vector.broadcast %310 : f32 to vector<16x128xf32>
    %1137 = arith.addf %1135, %1136 : vector<16x128xf32>
    %1138 = math.tanh %1137 : vector<16x128xf32>
    %1139 = vector.broadcast %271 : f32 to vector<16x128xf32>
    %1140 = arith.mulf %818, %1139 : vector<16x128xf32>
    %1141 = vector.broadcast %275 : f32 to vector<16x128xf32>
    %1142 = arith.mulf %850, %1141 : vector<16x128xf32>
    %1143 = arith.addf %1140, %1142 : vector<16x128xf32>
    %1144 = vector.broadcast %279 : f32 to vector<16x128xf32>
    %1145 = arith.mulf %882, %1144 : vector<16x128xf32>
    %1146 = arith.addf %1143, %1145 : vector<16x128xf32>
    %1147 = vector.broadcast %283 : f32 to vector<16x128xf32>
    %1148 = arith.mulf %914, %1147 : vector<16x128xf32>
    %1149 = arith.addf %1146, %1148 : vector<16x128xf32>
    %1150 = vector.broadcast %287 : f32 to vector<16x128xf32>
    %1151 = arith.mulf %946, %1150 : vector<16x128xf32>
    %1152 = arith.addf %1149, %1151 : vector<16x128xf32>
    %1153 = vector.broadcast %291 : f32 to vector<16x128xf32>
    %1154 = arith.mulf %978, %1153 : vector<16x128xf32>
    %1155 = arith.addf %1152, %1154 : vector<16x128xf32>
    %1156 = vector.broadcast %295 : f32 to vector<16x128xf32>
    %1157 = arith.mulf %1010, %1156 : vector<16x128xf32>
    %1158 = arith.addf %1155, %1157 : vector<16x128xf32>
    %1159 = vector.broadcast %299 : f32 to vector<16x128xf32>
    %1160 = arith.mulf %1042, %1159 : vector<16x128xf32>
    %1161 = arith.addf %1158, %1160 : vector<16x128xf32>
    %1162 = vector.broadcast %303 : f32 to vector<16x128xf32>
    %1163 = arith.mulf %1074, %1162 : vector<16x128xf32>
    %1164 = arith.addf %1161, %1163 : vector<16x128xf32>
    %1165 = vector.broadcast %307 : f32 to vector<16x128xf32>
    %1166 = arith.mulf %1106, %1165 : vector<16x128xf32>
    %1167 = arith.addf %1164, %1166 : vector<16x128xf32>
    %1168 = vector.broadcast %311 : f32 to vector<16x128xf32>
    %1169 = arith.addf %1167, %1168 : vector<16x128xf32>
    %1170 = math.tanh %1169 : vector<16x128xf32>
    %1171 = vector.broadcast %272 : f32 to vector<16x128xf32>
    %1172 = arith.mulf %818, %1171 : vector<16x128xf32>
    %1173 = vector.broadcast %276 : f32 to vector<16x128xf32>
    %1174 = arith.mulf %850, %1173 : vector<16x128xf32>
    %1175 = arith.addf %1172, %1174 : vector<16x128xf32>
    %1176 = vector.broadcast %280 : f32 to vector<16x128xf32>
    %1177 = arith.mulf %882, %1176 : vector<16x128xf32>
    %1178 = arith.addf %1175, %1177 : vector<16x128xf32>
    %1179 = vector.broadcast %284 : f32 to vector<16x128xf32>
    %1180 = arith.mulf %914, %1179 : vector<16x128xf32>
    %1181 = arith.addf %1178, %1180 : vector<16x128xf32>
    %1182 = vector.broadcast %288 : f32 to vector<16x128xf32>
    %1183 = arith.mulf %946, %1182 : vector<16x128xf32>
    %1184 = arith.addf %1181, %1183 : vector<16x128xf32>
    %1185 = vector.broadcast %292 : f32 to vector<16x128xf32>
    %1186 = arith.mulf %978, %1185 : vector<16x128xf32>
    %1187 = arith.addf %1184, %1186 : vector<16x128xf32>
    %1188 = vector.broadcast %296 : f32 to vector<16x128xf32>
    %1189 = arith.mulf %1010, %1188 : vector<16x128xf32>
    %1190 = arith.addf %1187, %1189 : vector<16x128xf32>
    %1191 = vector.broadcast %300 : f32 to vector<16x128xf32>
    %1192 = arith.mulf %1042, %1191 : vector<16x128xf32>
    %1193 = arith.addf %1190, %1192 : vector<16x128xf32>
    %1194 = vector.broadcast %304 : f32 to vector<16x128xf32>
    %1195 = arith.mulf %1074, %1194 : vector<16x128xf32>
    %1196 = arith.addf %1193, %1195 : vector<16x128xf32>
    %1197 = vector.broadcast %308 : f32 to vector<16x128xf32>
    %1198 = arith.mulf %1106, %1197 : vector<16x128xf32>
    %1199 = arith.addf %1196, %1198 : vector<16x128xf32>
    %1200 = vector.broadcast %312 : f32 to vector<16x128xf32>
    %1201 = arith.addf %1199, %1200 : vector<16x128xf32>
    %1202 = math.tanh %1201 : vector<16x128xf32>
    %1203 = vector.broadcast %273 : f32 to vector<16x128xf32>
    %1204 = arith.mulf %818, %1203 : vector<16x128xf32>
    %1205 = vector.broadcast %277 : f32 to vector<16x128xf32>
    %1206 = arith.mulf %850, %1205 : vector<16x128xf32>
    %1207 = arith.addf %1204, %1206 : vector<16x128xf32>
    %1208 = vector.broadcast %281 : f32 to vector<16x128xf32>
    %1209 = arith.mulf %882, %1208 : vector<16x128xf32>
    %1210 = arith.addf %1207, %1209 : vector<16x128xf32>
    %1211 = vector.broadcast %285 : f32 to vector<16x128xf32>
    %1212 = arith.mulf %914, %1211 : vector<16x128xf32>
    %1213 = arith.addf %1210, %1212 : vector<16x128xf32>
    %1214 = vector.broadcast %289 : f32 to vector<16x128xf32>
    %1215 = arith.mulf %946, %1214 : vector<16x128xf32>
    %1216 = arith.addf %1213, %1215 : vector<16x128xf32>
    %1217 = vector.broadcast %293 : f32 to vector<16x128xf32>
    %1218 = arith.mulf %978, %1217 : vector<16x128xf32>
    %1219 = arith.addf %1216, %1218 : vector<16x128xf32>
    %1220 = vector.broadcast %297 : f32 to vector<16x128xf32>
    %1221 = arith.mulf %1010, %1220 : vector<16x128xf32>
    %1222 = arith.addf %1219, %1221 : vector<16x128xf32>
    %1223 = vector.broadcast %301 : f32 to vector<16x128xf32>
    %1224 = arith.mulf %1042, %1223 : vector<16x128xf32>
    %1225 = arith.addf %1222, %1224 : vector<16x128xf32>
    %1226 = vector.broadcast %305 : f32 to vector<16x128xf32>
    %1227 = arith.mulf %1074, %1226 : vector<16x128xf32>
    %1228 = arith.addf %1225, %1227 : vector<16x128xf32>
    %1229 = vector.broadcast %309 : f32 to vector<16x128xf32>
    %1230 = arith.mulf %1106, %1229 : vector<16x128xf32>
    %1231 = arith.addf %1228, %1230 : vector<16x128xf32>
    %1232 = vector.broadcast %313 : f32 to vector<16x128xf32>
    %1233 = arith.addf %1231, %1232 : vector<16x128xf32>
    %1234 = math.tanh %1233 : vector<16x128xf32>
    %1235 = arith.addf %1138, %1170 : vector<16x128xf32>
    %1236 = arith.addf %1235, %1202 : vector<16x128xf32>
    %1237 = arith.addf %1236, %1234 : vector<16x128xf32>
    %cst = arith.constant 2.500000e-01 : f32
    %1238 = vector.broadcast %cst : f32 to vector<16x128xf32>
    %1239 = arith.mulf %1237, %1238 : vector<16x128xf32>
    %1240 = arith.subf %1138, %1239 : vector<16x128xf32>
    %1241 = arith.subf %1170, %1239 : vector<16x128xf32>
    %1242 = arith.subf %1202, %1239 : vector<16x128xf32>
    %1243 = arith.subf %1234, %1239 : vector<16x128xf32>
    %1244 = arith.mulf %1240, %1240 : vector<16x128xf32>
    %1245 = arith.mulf %1241, %1241 : vector<16x128xf32>
    %1246 = arith.addf %1244, %1245 : vector<16x128xf32>
    %1247 = arith.mulf %1242, %1242 : vector<16x128xf32>
    %1248 = arith.addf %1246, %1247 : vector<16x128xf32>
    %1249 = arith.mulf %1243, %1243 : vector<16x128xf32>
    %1250 = arith.addf %1248, %1249 : vector<16x128xf32>
    %cst_12 = arith.constant 2.500000e-01 : f32
    %1251 = vector.broadcast %cst_12 : f32 to vector<16x128xf32>
    %1252 = arith.mulf %1250, %1251 : vector<16x128xf32>
    %cst_13 = arith.constant 9.99999974E-6 : f32
    %1253 = vector.broadcast %cst_13 : f32 to vector<16x128xf32>
    %1254 = arith.addf %1252, %1253 : vector<16x128xf32>
    %1255 = math.rsqrt %1254 : vector<16x128xf32>
    %1256 = vector.broadcast %314 : f32 to vector<16x128xf32>
    %1257 = arith.mulf %1240, %1256 : vector<16x128xf32>
    %1258 = vector.broadcast %315 : f32 to vector<16x128xf32>
    %1259 = arith.mulf %1241, %1258 : vector<16x128xf32>
    %1260 = arith.addf %1257, %1259 : vector<16x128xf32>
    %1261 = vector.broadcast %316 : f32 to vector<16x128xf32>
    %1262 = arith.mulf %1242, %1261 : vector<16x128xf32>
    %1263 = arith.addf %1260, %1262 : vector<16x128xf32>
    %1264 = vector.broadcast %317 : f32 to vector<16x128xf32>
    %1265 = arith.mulf %1243, %1264 : vector<16x128xf32>
    %1266 = arith.addf %1263, %1265 : vector<16x128xf32>
    %1267 = arith.mulf %1266, %1255 : vector<16x128xf32>
    %1268 = vector.broadcast %318 : f32 to vector<16x128xf32>
    %1269 = arith.addf %1267, %1268 : vector<16x128xf32>
    %c0_14 = arith.constant 0 : index
    %c0_15 = arith.constant 0 : index
    %1270 = vector.load %arg3[%c0_14, %c0_15] : memref<16x128xf32, #tpu.memory_space<vmem>>, vector<16x128xf32>
    tpu.vector_store %arg3[%c0_14, %c0_15], %1269 {strides = array<i32>} : memref<16x128xf32, #tpu.memory_space<vmem>>, vector<16x128xf32>,
    return
  }
  func.func @transform_0(%arg0: i32) -> i32 {
    %c0_i32 = arith.constant 0 : i32
    %c0_i32_0 = arith.constant 0 : i32
    return %c0_i32 : i32
  }
  func.func @transform_1(%arg0: i32) -> (i32, i32, i32) {
    %c0_i32 = arith.constant 0 : i32
    %c0_i32_0 = arith.constant 0 : i32
    %c0_i32_1 = arith.constant 0 : i32
    return %c0_i32, %arg0, %c0_i32_0 : i32, i32, i32
  }
  func.func @transform_2(%arg0: i32) -> (i32, i32) {
    %c0_i32 = arith.constant 0 : i32
    %c0_i32_0 = arith.constant 0 : i32
    return %arg0, %c0_i32 : i32, i32
  }
}

</mosaic_0001>

<llo_original>
// kernel: tpu_custom_call.1
$region0: #{tpu_custom_call.1}
  #allocation0 [shape = 'u32[]', space=smem, size = 0x4, offset = 0x4, fixed_abs, tag = 'smem constant byte address 0x4 - core index']
  #allocation1 [shape = 'u32[144,128]{1,0:T(1,128)}', space=vmem, size = 0x12000, scoped, tag = 'internal scratch']
  #allocation8 [shape = 's32[]', space=sflag, size = 0x4, offset = 0, fixed_abs, tag = 'sflag constant byte address 0x0 - dummy sync flag']
  %s0 = inlined_call_operand.hbm [shape: f32[320], index: 0, kind: input, shape index: {}]
  %s1 = inlined_call_operand.hbm [shape: f32[4,48,128], index: 1, kind: input, shape index: {}]
  %s2 = inlined_call_operand.hbm [shape: f32[48,128], index: 2, kind: output, shape index: {}]
  %s3 = sld [smem:[#allocation0]]
  $region49: #{tpu_custom_call.1} parent=0
    _
  %s5 = ssub.s32 1, %s3
  %s6 = scalar_select 0, %s5, %s3
  $region1: #{tpu_custom_call.1} parent=0
    #allocation2 [shape = 'u8[1536]{0}', space=smem, size = 0x600, scoped, tag = 'input window, operand 0, single buffered']
    #allocation3 [shape = 's32[2]{0}', space=sflag, size = 0x8, scoped, tag = 'scoped memory for tpu_custom_call.1']
    #allocation4 [shape = 's32[2]{0}', space=sflag, size = 0x8, scoped, tag = 'scoped memory for tpu_custom_call.1']
    #allocation5 [shape = 's32[2]{0}', space=sflag, size = 0x8, scoped, tag = 'scoped memory for tpu_custom_call.1']
    #allocation6 [shape = 'u8[65536]{0}', space=vmem, size = 0x10000, scoped, tag = 'input window, operand 1']
    #allocation7 [shape = 'u8[16384]{0}', space=vmem, size = 0x4000, scoped, tag = 'output window, operand 0']
    %7 = vsyncpa [#allocation5], 0
    %8 = vsyncpa [#allocation3], 0
    %s9 = scalar_lea.sflag [#allocation3], 1
    %10 = vsyncpa %s9, 0
    %11 = vsyncpa [#allocation4], 0
    %s12 = scalar_lea.sflag [#allocation4], 1
    %13 = vsyncpa %s12, 0
    loop: start=0, step=1, limit=5
    $region2: #{tpu_custom_call.1} parent=1 // loop_pre_header
      _
    $region3: #{tpu_custom_call.1} parent=1 // loop_header
      %s15 = sphi 0, %s19
      %p16 = scmp.ge.s32.totalorder %s15, 5
      %s23 = sphi 0, %s23
      %s25 = sphi 0, %s23
      %s26 = sphi 0, %s25
      %s40 = sphi 0, %s26
      %s46 = sphi 0, %s48
      %s49 = sphi 0, %s46
      %s50 = sphi 0, %s49
      %s66 = sphi 0, %s50
      %s72 = sphi 0, %s74
      %s75 = sphi 0, %s72
      %s76 = sphi 0, %s75
      %s92 = sphi 0, %s76
    $region4: #{tpu_custom_call.1} parent=1 // loop_header_branch
      %18 = sbr.rel (%p16) target = $region8
    $region5: #{tpu_custom_call.1} parent=1 // loop_body
      %s20 = ssub.s32 %s15, 1
      %s21 = ssub.s32 %s15, 2
      %s22 = sadd.s32 %s15, 1
      %s24 = sadd.s32 %s23, 1
      %p27 = scmp.eq.s32.totalorder %s15, 2
      %p28 = scmp.ne.s32.totalorder %s23, %s25
      %p29 = scmp.eq.s32.totalorder %s15, 0
      %p30 = por %p28, %p29
      %p31 = scmp.ne.s32.totalorder %s23, %s25
      %p32 = scmp.eq.s32.totalorder %s20, 2
      %p33 = por %p31, %p32
      %p34 = scmp.ne.s32.totalorder %s25, %s26
      %p35 = scmp.eq.s32.totalorder %s20, 0
      %p36 = por %p34, %p35
      %p37 = scmp.ne.s32.totalorder %s25, %s26
      %p38 = scmp.eq.s32.totalorder %s21, 2
      %p39 = por %p37, %p38
      %p41 = scmp.ne.s32.totalorder %s26, %s40
      %p42 = scmp.eq.s32.totalorder %s21, 0
      %p43 = por %p41, %p42
      %s44 = ssub.s32 %s15, %s22
      %p45 = scmp.eq.s32.totalorder %s44, 0
      %s47 = sadd.s32 %s46, 1
      %s48 = scalar_select %p45, %s46, %s47
      %p51 = pneg %p45
      %p52 = scmp.eq.s32.totalorder %s15, 2
      %p53 = por %p51, %p52
      %p54 = scmp.ne.s32.totalorder %s46, %s49
      %p55 = scmp.eq.s32.totalorder %s15, 0
      %p56 = por %p54, %p55
      %p57 = scmp.ne.s32.totalorder %s46, %s49
      %p58 = scmp.eq.s32.totalorder %s20, 2
      %p59 = por %p57, %p58
      %p60 = scmp.ne.s32.totalorder %s49, %s50
      %p61 = scmp.eq.s32.totalorder %s20, 0
      %p62 = por %p60, %p61
      %p63 = scmp.ne.s32.totalorder %s49, %s50
      %p64 = scmp.eq.s32.totalorder %s21, 2
      %p65 = por %p63, %p64
      %p67 = scmp.ne.s32.totalorder %s50, %s66
      %p68 = scmp.eq.s32.totalorder %s21, 0
      %p69 = por %p67, %p68
      %s70 = ssub.s32 %s15, %s22
      %p71 = scmp.eq.s32.totalorder %s70, 0
      %s73 = sadd.s32 %s72, 1
      %s74 = scalar_select %p71, %s72, %s73
      %p77 = pneg %p71
      %p78 = scmp.eq.s32.totalorder %s15, 2
      %p79 = por %p77, %p78
      %p80 = scmp.ne.s32.totalorder %s72, %s75
      %p81 = scmp.eq.s32.totalorder %s15, 0
      %p82 = por %p80, %p81
      %p83 = scmp.ne.s32.totalorder %s72, %s75
      %p84 = scmp.eq.s32.totalorder %s20, 2
      %p85 = por %p83, %p84
      %p86 = scmp.ne.s32.totalorder %s75, %s76
      %p87 = scmp.eq.s32.totalorder %s20, 0
      %p88 = por %p86, %p87
      %p89 = scmp.ne.s32.totalorder %s75, %s76
      %p90 = scmp.eq.s32.totalorder %s21, 2
      %p91 = por %p89, %p90
      %p93 = scmp.ne.s32.totalorder %s76, %s92
      %p94 = scmp.eq.s32.totalorder %s21, 0
      %p95 = por %p93, %p94
      %p96 = scmp.le.s32.totalorder 1, %s15
      %p97 = scmp.lt.s32.totalorder %s15, 4
      %p98 = pnand %p96, %p97
      %p99 = pneg %p98
      // Predicated region
      $region9: #{tpu_custom_call.1} parent=5 // pred_check
        _
      $region10: #{tpu_custom_call.1} parent=5 // pred_check_branch
        %101 = sbr.rel (%p98) target = $region12
      $region11: #{tpu_custom_call.1} parent=5 // pred_region
        %s102 = ssub.s32 %s15, 1
        // Predicated region
        $region13: #{tpu_custom_call.1} parent=11 // pred_check
          %p103 = pneg %p36
        $region14: #{tpu_custom_call.1} parent=11 // pred_check_branch
          %105 = sbr.rel (%p103) target = $region16
        $region15: #{tpu_custom_call.1} parent=11 // pred_region
          %s107 = ssub.s32 48, 48
          %108 = vsyncadd [#allocation5], %s107
          %111 = dma.hbm_to_smem %s0, 48, [#allocation2], [#allocation5]
        $region16: #{tpu_custom_call.1} parent=11 // pred_fallthru
          _
      $region12: #{tpu_custom_call.1} parent=5 // pred_fallthru
        _
      %p112 = scmp.lt.s32.totalorder %s15, 3
      // Predicated region
      $region17: #{tpu_custom_call.1} parent=5 // pred_check
        %p113 = pneg %p112
      $region18: #{tpu_custom_call.1} parent=5 // pred_check_branch
        %115 = sbr.rel (%p113) target = $region20
      $region19: #{tpu_custom_call.1} parent=5 // pred_region
        // Predicated region
        $region21: #{tpu_custom_call.1} parent=19 // pred_check
          %p116 = pneg %p56
        $region22: #{tpu_custom_call.1} parent=19 // pred_check_branch
          %118 = sbr.rel (%p116) target = $region24
        $region23: #{tpu_custom_call.1} parent=19 // pred_region
          #allocation9 [shape = 'u32[6]{0}', space=smem, size = 0x18, scoped, tag = 'DMA stride descriptor']
          %s119 = sand.u32 %s46, 1
          %s120 = scalar_lea.sflag [#allocation3], %s119
          %s121 = sand.u32 %s46, 1
          %s122 = smul.addr %s121, 64
          %s123 = scalar_lea.vmem [#allocation6], %s122
          %s124 = smul.u32 2, %s15
          %s126 = ssub.s32 1024, 1024
          %127 = vsyncadd %s120, %s126
          %s128 = smul.addr %s124, 128
          %s129 = scalar_lea.hbm %s1, %s128
          %s131 = sshll.u32 1, 14
          %s132 = sxor.u32 4294967295, %s131
          %s134 = sld [smem:[#allocation0]]
          %s135 = sadd.s32 2, %s134
          %s137 = sshll.u32 7, 26
          %s138 = sxor.u32 4294967295, %s137
          %s139 = sand.u32 0, %s138
          %s140 = sshll.u32 %s135, 26
          %s141 = sor.u32 %s139, %s140
          %s142 = sshll.u32 %s123, 4
          %s143 = int_to_ptr.vmem [resolvable:$true] %s142
          %149 = sst [smem:[#allocation9]] 768
          %s150 = scalar_lea.smem [#allocation9], 1
          %151 = sst [smem:[%s150]] 256
          %s152 = scalar_lea.smem [#allocation9], 2
          %153 = sst [smem:[%s152]] 2
          %s154 = scalar_lea.smem [#allocation9], 3
          %155 = sst [smem:[%s154]] 128
          %s156 = scalar_lea.smem [#allocation9], 4
          %157 = sst [smem:[%s156]] 128
          %s158 = scalar_lea.smem [#allocation9], 5
          %159 = sst [smem:[%s158]] 8
          %161 = dma.general %s129, 1024, %s143, %s120, 131072, [#allocation9], %s141, 0
        $region24: #{tpu_custom_call.1} parent=19 // pred_fallthru
          _
      $region20: #{tpu_custom_call.1} parent=5 // pred_fallthru
        _
      %p162 = scmp.le.s32.totalorder 1, %s15
      %p163 = scmp.lt.s32.totalorder %s15, 4
      %p164 = pnand %p162, %p163
      %p165 = pneg %p164
      // Predicated region
      $region25: #{tpu_custom_call.1} parent=5 // pred_check
        _
      $region26: #{tpu_custom_call.1} parent=5 // pred_check_branch
        %167 = sbr.rel (%p164) target = $region28
      $region27: #{tpu_custom_call.1} parent=5 // pred_region
        %s168 = ssub.s32 %s15, 1
        // Predicated region
        $region29: #{tpu_custom_call.1} parent=27 // pred_check
          %p169 = pneg %p36
        $region30: #{tpu_custom_call.1} parent=27 // pred_check_branch
          %171 = sbr.rel (%p169) target = $region32
        $region31: #{tpu_custom_call.1} parent=27 // pred_region
          %172 = dma.done [#allocation5], 48
        $region32: #{tpu_custom_call.1} parent=27 // pred_fallthru
          _
        %s173 = sand.u32 %s49, 1
        %s174 = scalar_lea.sflag [#allocation3], %s173
        %s175 = sand.u32 %s49, 1
        %s176 = smul.addr %s175, 64
        %s177 = scalar_lea.vmem [#allocation6], %s176
        // Predicated region
        $region33: #{tpu_custom_call.1} parent=27 // pred_check
          %p178 = pneg %p62
        $region34: #{tpu_custom_call.1} parent=27 // pred_check_branch
          %180 = sbr.rel (%p178) target = $region36
        $region35: #{tpu_custom_call.1} parent=27 // pred_region
          %181 = dma.done %s174, 1024
        $region36: #{tpu_custom_call.1} parent=27 // pred_fallthru
          _
        %182 = sfence
        %p183 = pneg %p36
        %p184 = pneg %p33
        %s185 = sand.u32 %s49, 1
        %s186 = scalar_lea.sflag [#allocation3], %s185
        %s187 = sand.u32 %s49, 1
        %s188 = smul.addr %s187, 64
        %s189 = scalar_lea.vmem [#allocation6], %s188
        %p190 = pneg %p62
        %p191 = pneg %p59
        %p192 = pneg %p88
        %p193 = pneg %p85
        %s194 = sand.u32 %s75, 1
        %s195 = scalar_lea.sflag [#allocation4], %s194
        %s196 = sand.u32 %s75, 1
        %s197 = smul.addr %s196, 16
        %s198 = scalar_lea.vmem [#allocation7], %s197
        %s199 = smul.u32 2, %s20
        %s200 = smul.u32 2, %s20
        %s201 = sld [smem:[#allocation2]]
        %s202 = sld [smem:[#allocation2 + $0x1]]
        %s203 = sld [smem:[#allocation2 + $0x2]]
        %s204 = sld [smem:[#allocation2 + $0x3]]
        %s205 = sld [smem:[#allocation2 + $0x4]]
        %s206 = sld [smem:[#allocation2 + $0x5]]
        %s207 = sld [smem:[#allocation2 + $0x6]]
        %s208 = sld [smem:[#allocation2 + $0x7]]
        %s209 = sld [smem:[#allocation2 + $0x8]]
        %s210 = sld [smem:[#allocation2 + $0x9]]
        %s211 = sld [smem:[#allocation2 + $0xa]]
        %s212 = sld [smem:[#allocation2 + $0xb]]
        %s213 = sld [smem:[#allocation2 + $0xc]]
        %s214 = sld [smem:[#allocation2 + $0xd]]
        %s215 = sld [smem:[#allocation2 + $0xe]]
        %s216 = sld [smem:[#allocation2 + $0xf]]
        %s217 = sld [smem:[#allocation2 + $0x10]]
        %s218 = sld [smem:[#allocation2 + $0x11]]
        %s219 = sld [smem:[#allocation2 + $0x12]]
        %s220 = sld [smem:[#allocation2 + $0x13]]
        %s221 = sld [smem:[#allocation2 + $0x14]]
        %s222 = sld [smem:[#allocation2 + $0x15]]
        %s223 = sld [smem:[#allocation2 + $0x16]]
        %s224 = sld [smem:[#allocation2 + $0x17]]
        %s225 = sld [smem:[#allocation2 + $0x18]]
        %s226 = sld [smem:[#allocation2 + $0x19]]
        %s227 = sld [smem:[#allocation2 + $0x1a]]
        %s228 = sld [smem:[#allocation2 + $0x1b]]
        %s229 = sld [smem:[#allocation2 + $0x1c]]
        %s230 = sld [smem:[#allocation2 + $0x1d]]
        %s231 = sld [smem:[#allocation2 + $0x1e]]
        %s232 = sld [smem:[#allocation2 + $0x1f]]
        %s233 = sld [smem:[#allocation2 + $0x20]]
        %s234 = sld [smem:[#allocation2 + $0x21]]
        %s235 = sld [smem:[#allocation2 + $0x22]]
        %s236 = sld [smem:[#allocation2 + $0x23]]
        %s237 = sld [smem:[#allocation2 + $0x24]]
        %s238 = sld [smem:[#allocation2 + $0x25]]
        %s239 = sld [smem:[#allocation2 + $0x26]]
        %s240 = sld [smem:[#allocation2 + $0x27]]
        %s241 = sld [smem:[#allocation2 + $0x28]]
        %s242 = sld [smem:[#allocation2 + $0x29]]
        %s243 = sld [smem:[#allocation2 + $0x2a]]
        %s244 = sld [smem:[#allocation2 + $0x2b]]
        %s245 = sld [smem:[#allocation2 + $0x2c]]
        %s246 = sld [smem:[#allocation2 + $0x2d]]
        %s247 = sld [smem:[#allocation2 + $0x2e]]
        %s248 = sld [smem:[#allocation2 + $0x2f]]
        %s249 = sld [smem:[#allocation2 + $0x30]]
        %s250 = sld [smem:[#allocation2 + $0x31]]
        %s251 = sld [smem:[#allocation2 + $0x32]]
        %s252 = sld [smem:[#allocation2 + $0x33]]
        %s253 = sld [smem:[#allocation2 + $0x34]]
        %s254 = sld [smem:[#allocation2 + $0x35]]
        %s255 = sld [smem:[#allocation2 + $0x36]]
        %s256 = sld [smem:[#allocation2 + $0x37]]
        %s257 = sld [smem:[#allocation2 + $0x38]]
        %s258 = sld [smem:[#allocation2 + $0x39]]
        %s259 = sld [smem:[#allocation2 + $0x3a]]
        %s260 = sld [smem:[#allocation2 + $0x3b]]
        %s261 = sld [smem:[#allocation2 + $0x3c]]
        %s262 = sld [smem:[#allocation2 + $0x3d]]
        %s263 = sld [smem:[#allocation2 + $0x3e]]
        %s264 = sld [smem:[#allocation2 + $0x3f]]
        %s265 = sld [smem:[#allocation2 + $0x40]]
        %s266 = sld [smem:[#allocation2 + $0x41]]
        %s267 = sld [smem:[#allocation2 + $0x42]]
        %s268 = sld [smem:[#allocation2 + $0x43]]
        %s269 = sld [smem:[#allocation2 + $0x44]]
        %s270 = sld [smem:[#allocation2 + $0x45]]
        %s271 = sld [smem:[#allocation2 + $0x46]]
        %s272 = sld [smem:[#allocation2 + $0x47]]
        %s273 = sld [smem:[#allocation2 + $0x48]]
        %s274 = sld [smem:[#allocation2 + $0x49]]
        %s275 = sld [smem:[#allocation2 + $0x4a]]
        %s276 = sld [smem:[#allocation2 + $0x4b]]
        %s277 = sld [smem:[#allocation2 + $0x4c]]
        %s278 = sld [smem:[#allocation2 + $0x4d]]
        %s279 = sld [smem:[#allocation2 + $0x4e]]
        %s280 = sld [smem:[#allocation2 + $0x4f]]
        %s281 = sld [smem:[#allocation2 + $0x50]]
        %s282 = sld [smem:[#allocation2 + $0x51]]
        %s283 = sld [smem:[#allocation2 + $0x52]]
        %s284 = sld [smem:[#allocation2 + $0x53]]
        %s285 = sld [smem:[#allocation2 + $0x54]]
        %s286 = sld [smem:[#allocation2 + $0x55]]
        %s287 = sld [smem:[#allocation2 + $0x56]]
        %s288 = sld [smem:[#allocation2 + $0x57]]
        %s289 = sld [smem:[#allocation2 + $0x58]]
        %s290 = sld [smem:[#allocation2 + $0x59]]
        %s291 = sld [smem:[#allocation2 + $0x5a]]
        %s292 = sld [smem:[#allocation2 + $0x5b]]
        %s293 = sld [smem:[#allocation2 + $0x5c]]
        %s294 = sld [smem:[#allocation2 + $0x5d]]
        %s295 = sld [smem:[#allocation2 + $0x5e]]
        %s296 = sld [smem:[#allocation2 + $0x5f]]
        %s297 = sld [smem:[#allocation2 + $0x60]]
        %s298 = sld [smem:[#allocation2 + $0x61]]
        %s299 = sld [smem:[#allocation2 + $0x62]]
        %s300 = sld [smem:[#allocation2 + $0x63]]
        %s301 = sld [smem:[#allocation2 + $0x64]]
        %s302 = sld [smem:[#allocation2 + $0x65]]
        %s303 = sld [smem:[#allocation2 + $0x66]]
        %s304 = sld [smem:[#allocation2 + $0x67]]
        %s305 = sld [smem:[#allocation2 + $0x68]]
        %s306 = sld [smem:[#allocation2 + $0x69]]
        %s307 = sld [smem:[#allocation2 + $0x6a]]
        %s308 = sld [smem:[#allocation2 + $0x6b]]
        %s309 = sld [smem:[#allocation2 + $0x6c]]
        %s310 = sld [smem:[#allocation2 + $0x6d]]
        %s311 = sld [smem:[#allocation2 + $0x6e]]
        %s312 = sld [smem:[#allocation2 + $0x6f]]
        %s313 = sld [smem:[#allocation2 + $0x70]]
        %s314 = sld [smem:[#allocation2 + $0x71]]
        %s315 = sld [smem:[#allocation2 + $0x72]]
        %s316 = sld [smem:[#allocation2 + $0x73]]
        %s317 = sld [smem:[#allocation2 + $0x74]]
        %s318 = sld [smem:[#allocation2 + $0x75]]
        %s319 = sld [smem:[#allocation2 + $0x76]]
        %s320 = sld [smem:[#allocation2 + $0x77]]
        %s321 = sld [smem:[#allocation2 + $0x78]]
        %s322 = sld [smem:[#allocation2 + $0x79]]
        %s323 = sld [smem:[#allocation2 + $0x7a]]
        %s324 = sld [smem:[#allocation2 + $0x7b]]
        %s325 = sld [smem:[#allocation2 + $0x7c]]
        %s326 = sld [smem:[#allocation2 + $0x7d]]
        %s327 = sld [smem:[#allocation2 + $0x7e]]
        %s328 = sld [smem:[#allocation2 + $0x7f]]
        %s329 = sld [smem:[#allocation2 + $0x80]]
        %s330 = sld [smem:[#allocation2 + $0x81]]
        %s331 = sld [smem:[#allocation2 + $0x82]]
        %s332 = sld [smem:[#allocation2 + $0x83]]
        %s333 = sld [smem:[#allocation2 + $0x84]]
        %s334 = sld [smem:[#allocation2 + $0x85]]
        %s335 = sld [smem:[#allocation2 + $0x86]]
        %s336 = sld [smem:[#allocation2 + $0x87]]
        %s337 = sld [smem:[#allocation2 + $0x88]]
        %s338 = sld [smem:[#allocation2 + $0x89]]
        %s339 = sld [smem:[#allocation2 + $0x8a]]
        %s340 = sld [smem:[#allocation2 + $0x8b]]
        %s341 = sld [smem:[#allocation2 + $0x8c]]
        %s342 = sld [smem:[#allocation2 + $0x8d]]
        %s343 = sld [smem:[#allocation2 + $0x8e]]
        %s344 = sld [smem:[#allocation2 + $0x8f]]
        %s345 = sld [smem:[#allocation2 + $0x90]]
        %s346 = sld [smem:[#allocation2 + $0x91]]
        %s347 = sld [smem:[#allocation2 + $0x92]]
        %s348 = sld [smem:[#allocation2 + $0x93]]
        %s349 = sld [smem:[#allocation2 + $0x94]]
        %s350 = sld [smem:[#allocation2 + $0x95]]
        %s351 = sld [smem:[#allocation2 + $0x96]]
        %s352 = sld [smem:[#allocation2 + $0x97]]
        %s353 = sld [smem:[#allocation2 + $0x98]]
        %s354 = sld [smem:[#allocation2 + $0x99]]
        %s355 = sld [smem:[#allocation2 + $0x9a]]
        %s356 = sld [smem:[#allocation2 + $0x9b]]
        %s357 = sld [smem:[#allocation2 + $0x9c]]
        %s358 = sld [smem:[#allocation2 + $0x9d]]
        %s359 = sld [smem:[#allocation2 + $0x9e]]
        %s360 = sld [smem:[#allocation2 + $0x9f]]
        %s361 = sld [smem:[#allocation2 + $0xa0]]
        %s362 = sld [smem:[#allocation2 + $0xa1]]
        %s363 = sld [smem:[#allocation2 + $0xa2]]
        %s364 = sld [smem:[#allocation2 + $0xa3]]
        %s365 = sld [smem:[#allocation2 + $0xa4]]
        %s366 = sld [smem:[#allocation2 + $0xa5]]
        %s367 = sld [smem:[#allocation2 + $0xa6]]
        %s368 = sld [smem:[#allocation2 + $0xa7]]
        %s369 = sld [smem:[#allocation2 + $0xa8]]
        %s370 = sld [smem:[#allocation2 + $0xa9]]
        %s371 = sld [smem:[#allocation2 + $0xaa]]
        %s372 = sld [smem:[#allocation2 + $0xab]]
        %s373 = sld [smem:[#allocation2 + $0xac]]
        %s374 = sld [smem:[#allocation2 + $0xad]]
        %s375 = sld [smem:[#allocation2 + $0xae]]
        %s376 = sld [smem:[#allocation2 + $0xaf]]
        %s377 = sld [smem:[#allocation2 + $0xb0]]
        %s378 = sld [smem:[#allocation2 + $0xb1]]
        %s379 = sld [smem:[#allocation2 + $0xb2]]
        %s380 = sld [smem:[#allocation2 + $0xb3]]
        %s381 = sld [smem:[#allocation2 + $0xb4]]
        %s382 = sld [smem:[#allocation2 + $0xb5]]
        %s383 = sld [smem:[#allocation2 + $0xb6]]
        %s384 = sld [smem:[#allocation2 + $0xb7]]
        %s385 = sld [smem:[#allocation2 + $0xb8]]
        %s386 = sld [smem:[#allocation2 + $0xb9]]
        %s387 = sld [smem:[#allocation2 + $0xba]]
        %s388 = sld [smem:[#allocation2 + $0xbb]]
        %s389 = sld [smem:[#allocation2 + $0xbc]]
        %s390 = sld [smem:[#allocation2 + $0xbd]]
        %s391 = sld [smem:[#allocation2 + $0xbe]]
        %s392 = sld [smem:[#allocation2 + $0xbf]]
        %s393 = sld [smem:[#allocation2 + $0xc0]]
        %s394 = sld [smem:[#allocation2 + $0xc1]]
        %s395 = sld [smem:[#allocation2 + $0xc2]]
        %s396 = sld [smem:[#allocation2 + $0xc3]]
        %s397 = sld [smem:[#allocation2 + $0xc4]]
        %s398 = sld [smem:[#allocation2 + $0xc5]]
        %s399 = sld [smem:[#allocation2 + $0xc6]]
        %s400 = sld [smem:[#allocation2 + $0xc7]]
        %s401 = sld [smem:[#allocation2 + $0xc8]]
        %s402 = sld [smem:[#allocation2 + $0xc9]]
        %s403 = sld [smem:[#allocation2 + $0xca]]
        %s404 = sld [smem:[#allocation2 + $0xcb]]
        %s405 = sld [smem:[#allocation2 + $0xcc]]
        %s406 = sld [smem:[#allocation2 + $0xcd]]
        %s407 = sld [smem:[#allocation2 + $0xce]]
        %s408 = sld [smem:[#allocation2 + $0xcf]]
        %s409 = sld [smem:[#allocation2 + $0xd0]]
        %s410 = sld [smem:[#allocation2 + $0xd1]]
        %s411 = sld [smem:[#allocation2 + $0xd2]]
        %s412 = sld [smem:[#allocation2 + $0xd3]]
        %s413 = sld [smem:[#allocation2 + $0xd4]]
        %s414 = sld [smem:[#allocation2 + $0xd5]]
        %s415 = sld [smem:[#allocation2 + $0xd6]]
        %s416 = sld [smem:[#allocation2 + $0xd7]]
        %s417 = sld [smem:[#allocation2 + $0xd8]]
        %s418 = sld [smem:[#allocation2 + $0xd9]]
        %s419 = sld [smem:[#allocation2 + $0xda]]
        %s420 = sld [smem:[#allocation2 + $0xdb]]
        %s421 = sld [smem:[#allocation2 + $0xdc]]
        %s422 = sld [smem:[#allocation2 + $0xdd]]
        %s423 = sld [smem:[#allocation2 + $0xde]]
        %s424 = sld [smem:[#allocation2 + $0xdf]]
        %s425 = sld [smem:[#allocation2 + $0xe0]]
        %s426 = sld [smem:[#allocation2 + $0xe1]]
        %s427 = sld [smem:[#allocation2 + $0xe2]]
        %s428 = sld [smem:[#allocation2 + $0xe3]]
        %s429 = sld [smem:[#allocation2 + $0xe4]]
        %s430 = sld [smem:[#allocation2 + $0xe5]]
        %s431 = sld [smem:[#allocation2 + $0xe6]]
        %s432 = sld [smem:[#allocation2 + $0xe7]]
        %s433 = sld [smem:[#allocation2 + $0xe8]]
        %s434 = sld [smem:[#allocation2 + $0xe9]]
        %s435 = sld [smem:[#allocation2 + $0xea]]
        %s436 = sld [smem:[#allocation2 + $0xeb]]
        %s437 = sld [smem:[#allocation2 + $0xec]]
        %s438 = sld [smem:[#allocation2 + $0xed]]
        %s439 = sld [smem:[#allocation2 + $0xee]]
        %s440 = sld [smem:[#allocation2 + $0xef]]
        %s441 = sld [smem:[#allocation2 + $0xf0]]
        %s442 = sld [smem:[#allocation2 + $0xf1]]
        %s443 = sld [smem:[#allocation2 + $0xf2]]
        %s444 = sld [smem:[#allocation2 + $0xf3]]
        %s445 = sld [smem:[#allocation2 + $0xf4]]
        %s446 = sld [smem:[#allocation2 + $0xf5]]
        %s447 = sld [smem:[#allocation2 + $0xf6]]
        %s448 = sld [smem:[#allocation2 + $0xf7]]
        %s449 = sld [smem:[#allocation2 + $0xf8]]
        %s450 = sld [smem:[#allocation2 + $0xf9]]
        %s451 = sld [smem:[#allocation2 + $0xfa]]
        %s452 = sld [smem:[#allocation2 + $0xfb]]
        %s453 = sld [smem:[#allocation2 + $0xfc]]
        %s454 = sld [smem:[#allocation2 + $0xfd]]
        %s455 = sld [smem:[#allocation2 + $0xfe]]
        %s456 = sld [smem:[#allocation2 + $0xff]]
        %s457 = sld [smem:[#allocation2 + $0x100]]
        %s458 = sld [smem:[#allocation2 + $0x101]]
        %s459 = sld [smem:[#allocation2 + $0x102]]
        %s460 = sld [smem:[#allocation2 + $0x103]]
        %s461 = sld [smem:[#allocation2 + $0x104]]
        %s462 = sld [smem:[#allocation2 + $0x105]]
        %s463 = sld [smem:[#allocation2 + $0x106]]
        %s464 = sld [smem:[#allocation2 + $0x107]]
        %s465 = sld [smem:[#allocation2 + $0x108]]
        %s466 = sld [smem:[#allocation2 + $0x109]]
        %s467 = sld [smem:[#allocation2 + $0x10a]]
        %s468 = sld [smem:[#allocation2 + $0x10b]]
        %s469 = sld [smem:[#allocation2 + $0x10c]]
        %s470 = sld [smem:[#allocation2 + $0x10d]]
        %s471 = sld [smem:[#allocation2 + $0x10e]]
        %s472 = sld [smem:[#allocation2 + $0x10f]]
        %s473 = sld [smem:[#allocation2 + $0x110]]
        %s474 = sld [smem:[#allocation2 + $0x111]]
        %s475 = sld [smem:[#allocation2 + $0x112]]
        %s476 = sld [smem:[#allocation2 + $0x113]]
        %s477 = sld [smem:[#allocation2 + $0x114]]
        %s478 = sld [smem:[#allocation2 + $0x115]]
        %s479 = sld [smem:[#allocation2 + $0x116]]
        %s480 = sld [smem:[#allocation2 + $0x117]]
        %s481 = sld [smem:[#allocation2 + $0x118]]
        %s482 = sld [smem:[#allocation2 + $0x119]]
        %s483 = sld [smem:[#allocation2 + $0x11a]]
        %s484 = sld [smem:[#allocation2 + $0x11b]]
        %s485 = sld [smem:[#allocation2 + $0x11c]]
        %s486 = sld [smem:[#allocation2 + $0x11d]]
        %s487 = sld [smem:[#allocation2 + $0x11e]]
        %s488 = sld [smem:[#allocation2 + $0x11f]]
        %s489 = sld [smem:[#allocation2 + $0x120]]
        %s490 = sld [smem:[#allocation2 + $0x121]]
        %s491 = sld [smem:[#allocation2 + $0x122]]
        %s492 = sld [smem:[#allocation2 + $0x123]]
        %s493 = sld [smem:[#allocation2 + $0x124]]
        %s494 = sld [smem:[#allocation2 + $0x125]]
        %s495 = sld [smem:[#allocation2 + $0x126]]
        %s496 = sld [smem:[#allocation2 + $0x127]]
        %s497 = sld [smem:[#allocation2 + $0x128]]
        %s498 = sld [smem:[#allocation2 + $0x129]]
        %s499 = sld [smem:[#allocation2 + $0x12a]]
        %s500 = sld [smem:[#allocation2 + $0x12b]]
        %s501 = sld [smem:[#allocation2 + $0x12c]]
        %s502 = sld [smem:[#allocation2 + $0x12d]]
        %s503 = sld [smem:[#allocation2 + $0x12e]]
        %s504 = sld [smem:[#allocation2 + $0x12f]]
        %s505 = sld [smem:[#allocation2 + $0x130]]
        %s506 = sld [smem:[#allocation2 + $0x131]]
        %s507 = sld [smem:[#allocation2 + $0x132]]
        %s508 = sld [smem:[#allocation2 + $0x133]]
        %s509 = sld [smem:[#allocation2 + $0x134]]
        %s510 = sld [smem:[#allocation2 + $0x135]]
        %s511 = sld [smem:[#allocation2 + $0x136]]
        %s512 = sld [smem:[#allocation2 + $0x137]]
        %s513 = sld [smem:[#allocation2 + $0x138]]
        %s514 = sld [smem:[#allocation2 + $0x139]]
        %s515 = sld [smem:[#allocation2 + $0x13a]]
        %s516 = sld [smem:[#allocation2 + $0x13b]]
        %s517 = sld [smem:[#allocation2 + $0x13c]]
        %s518 = sld [smem:[#allocation2 + $0x13d]]
        %s519 = sld [smem:[#allocation2 + $0x13e]]
        %v520 = vld [vmem:[%s177] sm:$0xff]
        %v521 = vld [vmem:[%s177 + $0x8] sm:$0xff]
        %s522 = scalar_lea.vmem %s177, 16 [#allocation6]
        %v523 = vld [vmem:[%s522] sm:$0xff]
        %v524 = vld [vmem:[%s522 + $0x8] sm:$0xff]
        %s525 = scalar_lea.vmem %s177, 32 [#allocation6]
        %v526 = vld [vmem:[%s525] sm:$0xff]
        %v527 = vld [vmem:[%s525 + $0x8] sm:$0xff]
        %s528 = scalar_lea.vmem %s177, 48 [#allocation6]
        %v529 = vld [vmem:[%s528] sm:$0xff]
        %v530 = vld [vmem:[%s528 + $0x8] sm:$0xff]
        %v531 = vstv %s201
        %v532 = vmul.f32 %v520, %v531
        %v533 = vmul.f32 %v521, %v531
        %v534 = vstv %s211
        %v535 = vmul.f32 %v523, %v534
        %v536 = vmul.f32 %v524, %v534
        %v537 = vadd.f32 %v532, %v535
        %v538 = vadd.f32 %v533, %v536
        %v539 = vstv %s221
        %v540 = vmul.f32 %v526, %v539
        %v541 = vmul.f32 %v527, %v539
        %v542 = vadd.f32 %v537, %v540
        %v543 = vadd.f32 %v538, %v541
        %v544 = vstv %s231
        %v545 = vmul.f32 %v529, %v544
        %v546 = vmul.f32 %v530, %v544
        %v547 = vadd.f32 %v542, %v545
        %v548 = vadd.f32 %v543, %v546
        %v549 = vstv %s241
        %v550 = vadd.f32 %v547, %v549
        %v551 = vadd.f32 %v548, %v549
        %v552 = vtanh.pop %v550
        %v553 = vtanh.pop %v551
        %v554 = vstv %s202
        %v555 = vmul.f32 %v520, %v554
        %v556 = vmul.f32 %v521, %v554
        %v557 = vstv %s212
        %v558 = vmul.f32 %v523, %v557
        %v559 = vmul.f32 %v524, %v557
        %v560 = vadd.f32 %v555, %v558
        %v561 = vadd.f32 %v556, %v559
        %v562 = vstv %s222
        %v563 = vmul.f32 %v526, %v562
        %v564 = vmul.f32 %v527, %v562
        %v565 = vadd.f32 %v560, %v563
        %v566 = vadd.f32 %v561, %v564
        %v567 = vstv %s232
        %v568 = vmul.f32 %v529, %v567
        %v569 = vmul.f32 %v530, %v567
        %v570 = vadd.f32 %v565, %v568
        %v571 = vadd.f32 %v566, %v569
        %v572 = vstv %s242
        %v573 = vadd.f32 %v570, %v572
        %v574 = vadd.f32 %v571, %v572
        %v575 = vtanh.pop %v573
        %v576 = vtanh.pop %v574
        %v577 = vstv %s203
        %v578 = vmul.f32 %v520, %v577
        %v579 = vmul.f32 %v521, %v577
        %v580 = vstv %s213
        %v581 = vmul.f32 %v523, %v580
        %v582 = vmul.f32 %v524, %v580
        %v583 = vadd.f32 %v578, %v581
        %v584 = vadd.f32 %v579, %v582
        %v585 = vstv %s223
        %v586 = vmul.f32 %v526, %v585
        %v587 = vmul.f32 %v527, %v585
        %v588 = vadd.f32 %v583, %v586
        %v589 = vadd.f32 %v584, %v587
        %v590 = vstv %s233
        %v591 = vmul.f32 %v529, %v590
        %v592 = vmul.f32 %v530, %v590
        %v593 = vadd.f32 %v588, %v591
        %v594 = vadd.f32 %v589, %v592
        %v595 = vstv %s243
        %v596 = vadd.f32 %v593, %v595
        %v597 = vadd.f32 %v594, %v595
        %v598 = vtanh.pop %v596
        %v599 = vtanh.pop %v597
        %v600 = vstv %s204
        %v601 = vmul.f32 %v520, %v600
        %v602 = vmul.f32 %v521, %v600
        %v603 = vstv %s214
        %v604 = vmul.f32 %v523, %v603
        %v605 = vmul.f32 %v524, %v603
        %v606 = vadd.f32 %v601, %v604
        %v607 = vadd.f32 %v602, %v605
        %v608 = vstv %s224
        %v609 = vmul.f32 %v526, %v608
        %v610 = vmul.f32 %v527, %v608
        %v611 = vadd.f32 %v606, %v609
        %v612 = vadd.f32 %v607, %v610
        %v613 = vstv %s234
        %v614 = vmul.f32 %v529, %v613
        %v615 = vmul.f32 %v530, %v613
        %v616 = vadd.f32 %v611, %v614
        %v617 = vadd.f32 %v612, %v615
        %v618 = vstv %s244
        %v619 = vadd.f32 %v616, %v618
        %v620 = vadd.f32 %v617, %v618
        %v621 = vtanh.pop %v619
        %v622 = vtanh.pop %v620
        %v623 = vstv %s205
        %v624 = vmul.f32 %v520, %v623
        %v625 = vmul.f32 %v521, %v623
        %v626 = vstv %s215
        %v627 = vmul.f32 %v523, %v626
        %v628 = vmul.f32 %v524, %v626
        %v629 = vadd.f32 %v624, %v627
        %v630 = vadd.f32 %v625, %v628
        %v631 = vstv %s225
        %v632 = vmul.f32 %v526, %v631
        %v633 = vmul.f32 %v527, %v631
        %v634 = vadd.f32 %v629, %v632
        %v635 = vadd.f32 %v630, %v633
        %v636 = vstv %s235
        %v637 = vmul.f32 %v529, %v636
        %v638 = vmul.f32 %v530, %v636
        %v639 = vadd.f32 %v634, %v637
        %v640 = vadd.f32 %v635, %v638
        %v641 = vstv %s245
        %v642 = vadd.f32 %v639, %v641
        %v643 = vadd.f32 %v640, %v641
        %v644 = vtanh.pop %v642
        %v645 = vtanh.pop %v643
        %v646 = vstv %s206
        %v647 = vmul.f32 %v520, %v646
        %v648 = vmul.f32 %v521, %v646
        %v649 = vstv %s216
        %v650 = vmul.f32 %v523, %v649
        %v651 = vmul.f32 %v524, %v649
        %v652 = vadd.f32 %v647, %v650
        %v653 = vadd.f32 %v648, %v651
        %v654 = vstv %s226
        %v655 = vmul.f32 %v526, %v654
        %v656 = vmul.f32 %v527, %v654
        %v657 = vadd.f32 %v652, %v655
        %v658 = vadd.f32 %v653, %v656
        %v659 = vstv %s236
        %v660 = vmul.f32 %v529, %v659
        %v661 = vmul.f32 %v530, %v659
        %v662 = vadd.f32 %v657, %v660
        %v663 = vadd.f32 %v658, %v661
        %v664 = vstv %s246
        %v665 = vadd.f32 %v662, %v664
        %v666 = vadd.f32 %v663, %v664
        %v667 = vtanh.pop %v665
        %v668 = vtanh.pop %v666
        %v669 = vstv %s207
        %v670 = vmul.f32 %v520, %v669
        %v671 = vmul.f32 %v521, %v669
        %v672 = vstv %s217
        %v673 = vmul.f32 %v523, %v672
        %v674 = vmul.f32 %v524, %v672
        %v675 = vadd.f32 %v670, %v673
        %v676 = vadd.f32 %v671, %v674
        %v677 = vstv %s227
        %v678 = vmul.f32 %v526, %v677
        %v679 = vmul.f32 %v527, %v677
        %v680 = vadd.f32 %v675, %v678
        %v681 = vadd.f32 %v676, %v679
        %v682 = vstv %s237
        %v683 = vmul.f32 %v529, %v682
        %v684 = vmul.f32 %v530, %v682
        %v685 = vadd.f32 %v680, %v683
        %v686 = vadd.f32 %v681, %v684
        %v687 = vstv %s247
        %v688 = vadd.f32 %v685, %v687
        %v689 = vadd.f32 %v686, %v687
        %v690 = vtanh.pop %v688
        %v691 = vtanh.pop %v689
        %v692 = vstv %s208
        %v693 = vmul.f32 %v520, %v692
        %v694 = vmul.f32 %v521, %v692
        %v695 = vstv %s218
        %v696 = vmul.f32 %v523, %v695
        %v697 = vmul.f32 %v524, %v695
        %v698 = vadd.f32 %v693, %v696
        %v699 = vadd.f32 %v694, %v697
        %v700 = vstv %s228
        %v701 = vmul.f32 %v526, %v700
        %v702 = vmul.f32 %v527, %v700
        %v703 = vadd.f32 %v698, %v701
        %v704 = vadd.f32 %v699, %v702
        %v705 = vstv %s238
        %v706 = vmul.f32 %v529, %v705
        %v707 = vmul.f32 %v530, %v705
        %v708 = vadd.f32 %v703, %v706
        %v709 = vadd.f32 %v704, %v707
        %v710 = vstv %s248
        %v711 = vadd.f32 %v708, %v710
        %v712 = vadd.f32 %v709, %v710
        %v713 = vtanh.pop %v711
        %v714 = vtanh.pop %v712
        %v715 = vstv %s209
        %v716 = vmul.f32 %v520, %v715
        %v717 = vmul.f32 %v521, %v715
        %v718 = vstv %s219
        %v719 = vmul.f32 %v523, %v718
        %v720 = vmul.f32 %v524, %v718
        %v721 = vadd.f32 %v716, %v719
        %v722 = vadd.f32 %v717, %v720
        %v723 = vstv %s229
        %v724 = vmul.f32 %v526, %v723
        %v725 = vmul.f32 %v527, %v723
        %v726 = vadd.f32 %v721, %v724
        %v727 = vadd.f32 %v722, %v725
        %v728 = vstv %s239
        %v729 = vmul.f32 %v529, %v728
        %v730 = vmul.f32 %v530, %v728
        %v731 = vadd.f32 %v726, %v729
        %v732 = vadd.f32 %v727, %v730
        %v733 = vstv %s249
        %v734 = vadd.f32 %v731, %v733
        %v735 = vadd.f32 %v732, %v733
        %v736 = vtanh.pop %v734
        %v737 = vtanh.pop %v735
        %v738 = vstv %s210
        %v739 = vmul.f32 %v520, %v738
        %v740 = vmul.f32 %v521, %v738
        %v741 = vstv %s220
        %v742 = vmul.f32 %v523, %v741
        %v743 = vmul.f32 %v524, %v741
        %v744 = vadd.f32 %v739, %v742
        %v745 = vadd.f32 %v740, %v743
        %v746 = vstv %s230
        %v747 = vmul.f32 %v526, %v746
        %v748 = vmul.f32 %v527, %v746
        %v749 = vadd.f32 %v744, %v747
        %v750 = vadd.f32 %v745, %v748
        %v751 = vstv %s240
        %v752 = vmul.f32 %v529, %v751
        %v753 = vmul.f32 %v530, %v751
        %v754 = vadd.f32 %v749, %v752
        %v755 = vadd.f32 %v750, %v753
        %v756 = vstv %s250
        %v757 = vadd.f32 %v754, %v756
        %v758 = vadd.f32 %v755, %v756
        %v759 = vtanh.pop %v757
        %v760 = vtanh.pop %v758
        %v761 = vstv %s251
        %v762 = vmul.f32 %v552, %v761
        %v763 = vmul.f32 %v553, %v761
        %v764 = vstv %s261
        %v765 = vmul.f32 %v575, %v764
        %v766 = vmul.f32 %v576, %v764
        %v767 = vadd.f32 %v762, %v765
        %v768 = vadd.f32 %v763, %v766
        %v769 = vstv %s271
        %v770 = vmul.f32 %v598, %v769
        %v771 = vmul.f32 %v599, %v769
        %v772 = vadd.f32 %v767, %v770
        %v773 = vadd.f32 %v768, %v771
        %v774 = vstv %s281
        %v775 = vmul.f32 %v621, %v774
        %v776 = vmul.f32 %v622, %v774
        %v777 = vadd.f32 %v772, %v775
        %v778 = vadd.f32 %v773, %v776
        %v779 = vstv %s291
        %v780 = vmul.f32 %v644, %v779
        %v781 = vmul.f32 %v645, %v779
        %v782 = vadd.f32 %v777, %v780
        %v783 = vadd.f32 %v778, %v781
        %v784 = vstv %s301
        %v785 = vmul.f32 %v667, %v784
        %v786 = vmul.f32 %v668, %v784
        %v787 = vadd.f32 %v782, %v785
        %v788 = vadd.f32 %v783, %v786
        %v789 = vstv %s311
        %v790 = vmul.f32 %v690, %v789
        %v791 = vmul.f32 %v691, %v789
        %v792 = vadd.f32 %v787, %v790
        %v793 = vadd.f32 %v788, %v791
        %v794 = vstv %s321
        %v795 = vmul.f32 %v713, %v794
        %v796 = vmul.f32 %v714, %v794
        %v797 = vadd.f32 %v792, %v795
        %v798 = vadd.f32 %v793, %v796
        %v799 = vstv %s331
        %v800 = vmul.f32 %v736, %v799
        %v801 = vmul.f32 %v737, %v799
        %v802 = vadd.f32 %v797, %v800
        %v803 = vadd.f32 %v798, %v801
        %v804 = vstv %s341
        %v805 = vmul.f32 %v759, %v804
        %v806 = vmul.f32 %v760, %v804
        %v807 = vadd.f32 %v802, %v805
        %v808 = vadd.f32 %v803, %v806
        %v809 = vstv %s351
        %v810 = vadd.f32 %v807, %v809
        %v811 = vadd.f32 %v808, %v809
        %v812 = vtanh.pop %v810
        %v813 = vtanh.pop %v811
        %v814 = vstv %s252
        %v815 = vmul.f32 %v552, %v814
        %v816 = vmul.f32 %v553, %v814
        %v817 = vstv %s262
        %v818 = vmul.f32 %v575, %v817
        %v819 = vmul.f32 %v576, %v817
        %v820 = vadd.f32 %v815, %v818
        %v821 = vadd.f32 %v816, %v819
        %v822 = vstv %s272
        %v823 = vmul.f32 %v598, %v822
        %v824 = vmul.f32 %v599, %v822
        %v825 = vadd.f32 %v820, %v823
        %v826 = vadd.f32 %v821, %v824
        %v827 = vstv %s282
        %v828 = vmul.f32 %v621, %v827
        %v829 = vmul.f32 %v622, %v827
        %v830 = vadd.f32 %v825, %v828
        %v831 = vadd.f32 %v826, %v829
        %v832 = vstv %s292
        %v833 = vmul.f32 %v644, %v832
        %v834 = vmul.f32 %v645, %v832
        %v835 = vadd.f32 %v830, %v833
        %v836 = vadd.f32 %v831, %v834
        %v837 = vstv %s302
        %v838 = vmul.f32 %v667, %v837
        %v839 = vmul.f32 %v668, %v837
        %v840 = vadd.f32 %v835, %v838
        %v841 = vadd.f32 %v836, %v839
        %v842 = vstv %s312
        %v843 = vmul.f32 %v690, %v842
        %v844 = vmul.f32 %v691, %v842
        %v845 = vadd.f32 %v840, %v843
        %v846 = vadd.f32 %v841, %v844
        %v847 = vstv %s322
        %v848 = vmul.f32 %v713, %v847
        %v849 = vmul.f32 %v714, %v847
        %v850 = vadd.f32 %v845, %v848
        %v851 = vadd.f32 %v846, %v849
        %v852 = vstv %s332
        %v853 = vmul.f32 %v736, %v852
        %v854 = vmul.f32 %v737, %v852
        %v855 = vadd.f32 %v850, %v853
        %v856 = vadd.f32 %v851, %v854
        %v857 = vstv %s342
        %v858 = vmul.f32 %v759, %v857
        %v859 = vmul.f32 %v760, %v857
        %v860 = vadd.f32 %v855, %v858
        %v861 = vadd.f32 %v856, %v859
        %v862 = vstv %s352
        %v863 = vadd.f32 %v860, %v862
        %v864 = vadd.f32 %v861, %v862
        %v865 = vtanh.pop %v863
        %v866 = vtanh.pop %v864
        %v867 = vstv %s253
        %v868 = vmul.f32 %v552, %v867
        %v869 = vmul.f32 %v553, %v867
        %v870 = vstv %s263
        %v871 = vmul.f32 %v575, %v870
        %v872 = vmul.f32 %v576, %v870
        %v873 = vadd.f32 %v868, %v871
        %v874 = vadd.f32 %v869, %v872
        %v875 = vstv %s273
        %v876 = vmul.f32 %v598, %v875
        %v877 = vmul.f32 %v599, %v875
        %v878 = vadd.f32 %v873, %v876
        %v879 = vadd.f32 %v874, %v877
        %v880 = vstv %s283
        %v881 = vmul.f32 %v621, %v880
        %v882 = vmul.f32 %v622, %v880
        %v883 = vadd.f32 %v878, %v881
        %v884 = vadd.f32 %v879, %v882
        %v885 = vstv %s293
        %v886 = vmul.f32 %v644, %v885
        %v887 = vmul.f32 %v645, %v885
        %v888 = vadd.f32 %v883, %v886
        %v889 = vadd.f32 %v884, %v887
        %v890 = vstv %s303
        %v891 = vmul.f32 %v667, %v890
        %v892 = vmul.f32 %v668, %v890
        %v893 = vadd.f32 %v888, %v891
        %v894 = vadd.f32 %v889, %v892
        %v895 = vstv %s313
        %v896 = vmul.f32 %v690, %v895
        %v897 = vmul.f32 %v691, %v895
        %v898 = vadd.f32 %v893, %v896
        %v899 = vadd.f32 %v894, %v897
        %v900 = vstv %s323
        %v901 = vmul.f32 %v713, %v900
        %v902 = vmul.f32 %v714, %v900
        %v903 = vadd.f32 %v898, %v901
        %v904 = vadd.f32 %v899, %v902
        %v905 = vstv %s333
        %v906 = vmul.f32 %v736, %v905
        %v907 = vmul.f32 %v737, %v905
        %v908 = vadd.f32 %v903, %v906
        %v909 = vadd.f32 %v904, %v907
        %v910 = vstv %s343
        %v911 = vmul.f32 %v759, %v910
        %v912 = vmul.f32 %v760, %v910
        %v913 = vadd.f32 %v908, %v911
        %v914 = vadd.f32 %v909, %v912
        %v915 = vstv %s353
        %v916 = vadd.f32 %v913, %v915
        %v917 = vadd.f32 %v914, %v915
        %v918 = vtanh.pop %v916
        %v919 = vtanh.pop %v917
        %v920 = vstv %s254
        %v921 = vmul.f32 %v552, %v920
        %v922 = vmul.f32 %v553, %v920
        %v923 = vstv %s264
        %v924 = vmul.f32 %v575, %v923
        %v925 = vmul.f32 %v576, %v923
        %v926 = vadd.f32 %v921, %v924
        %v927 = vadd.f32 %v922, %v925
        %v928 = vstv %s274
        %v929 = vmul.f32 %v598, %v928
        %v930 = vmul.f32 %v599, %v928
        %v931 = vadd.f32 %v926, %v929
        %v932 = vadd.f32 %v927, %v930
        %v933 = vstv %s284
        %v934 = vmul.f32 %v621, %v933
        %v935 = vmul.f32 %v622, %v933
        %v936 = vadd.f32 %v931, %v934
        %v937 = vadd.f32 %v932, %v935
        %v938 = vstv %s294
        %v939 = vmul.f32 %v644, %v938
        %v940 = vmul.f32 %v645, %v938
        %v941 = vadd.f32 %v936, %v939
        %v942 = vadd.f32 %v937, %v940
        %v943 = vstv %s304
        %v944 = vmul.f32 %v667, %v943
        %v945 = vmul.f32 %v668, %v943
        %v946 = vadd.f32 %v941, %v944
        %v947 = vadd.f32 %v942, %v945
        %v948 = vstv %s314
        %v949 = vmul.f32 %v690, %v948
        %v950 = vmul.f32 %v691, %v948
        %v951 = vadd.f32 %v946, %v949
        %v952 = vadd.f32 %v947, %v950
        %v953 = vstv %s324
        %v954 = vmul.f32 %v713, %v953
        %v955 = vmul.f32 %v714, %v953
        %v956 = vadd.f32 %v951, %v954
        %v957 = vadd.f32 %v952, %v955
        %v958 = vstv %s334
        %v959 = vmul.f32 %v736, %v958
        %v960 = vmul.f32 %v737, %v958
        %v961 = vadd.f32 %v956, %v959
        %v962 = vadd.f32 %v957, %v960
        %v963 = vstv %s344
        %v964 = vmul.f32 %v759, %v963
        %v965 = vmul.f32 %v760, %v963
        %v966 = vadd.f32 %v961, %v964
        %v967 = vadd.f32 %v962, %v965
        %v968 = vstv %s354
        %v969 = vadd.f32 %v966, %v968
        %v970 = vadd.f32 %v967, %v968
        %v971 = vtanh.pop %v969
        %v972 = vtanh.pop %v970
        %v973 = vstv %s255
        %v974 = vmul.f32 %v552, %v973
        %v975 = vmul.f32 %v553, %v973
        %v976 = vstv %s265
        %v977 = vmul.f32 %v575, %v976
        %v978 = vmul.f32 %v576, %v976
        %v979 = vadd.f32 %v974, %v977
        %v980 = vadd.f32 %v975, %v978
        %v981 = vstv %s275
        %v982 = vmul.f32 %v598, %v981
        %v983 = vmul.f32 %v599, %v981
        %v984 = vadd.f32 %v979, %v982
        %v985 = vadd.f32 %v980, %v983
        %v986 = vstv %s285
        %v987 = vmul.f32 %v621, %v986
        %v988 = vmul.f32 %v622, %v986
        %v989 = vadd.f32 %v984, %v987
        %v990 = vadd.f32 %v985, %v988
        %v991 = vstv %s295
        %v992 = vmul.f32 %v644, %v991
        %v993 = vmul.f32 %v645, %v991
        %v994 = vadd.f32 %v989, %v992
        %v995 = vadd.f32 %v990, %v993
        %v996 = vstv %s305
        %v997 = vmul.f32 %v667, %v996
        %v998 = vmul.f32 %v668, %v996
        %v999 = vadd.f32 %v994, %v997
        %v1000 = vadd.f32 %v995, %v998
        %v1001 = vstv %s315
        %v1002 = vmul.f32 %v690, %v1001
        %v1003 = vmul.f32 %v691, %v1001
        %v1004 = vadd.f32 %v999, %v1002
        %v1005 = vadd.f32 %v1000, %v1003
        %v1006 = vstv %s325
        %v1007 = vmul.f32 %v713, %v1006
        %v1008 = vmul.f32 %v714, %v1006
        %v1009 = vadd.f32 %v1004, %v1007
        %v1010 = vadd.f32 %v1005, %v1008
        %v1011 = vstv %s335
        %v1012 = vmul.f32 %v736, %v1011
        %v1013 = vmul.f32 %v737, %v1011
        %v1014 = vadd.f32 %v1009, %v1012
        %v1015 = vadd.f32 %v1010, %v1013
        %v1016 = vstv %s345
        %v1017 = vmul.f32 %v759, %v1016
        %v1018 = vmul.f32 %v760, %v1016
        %v1019 = vadd.f32 %v1014, %v1017
        %v1020 = vadd.f32 %v1015, %v1018
        %v1021 = vstv %s355
        %v1022 = vadd.f32 %v1019, %v1021
        %v1023 = vadd.f32 %v1020, %v1021
        %v1024 = vtanh.pop %v1022
        %v1025 = vtanh.pop %v1023
        %v1026 = vstv %s256
        %v1027 = vmul.f32 %v552, %v1026
        %v1028 = vmul.f32 %v553, %v1026
        %v1029 = vstv %s266
        %v1030 = vmul.f32 %v575, %v1029
        %v1031 = vmul.f32 %v576, %v1029
        %v1032 = vadd.f32 %v1027, %v1030
        %v1033 = vadd.f32 %v1028, %v1031
        %v1034 = vstv %s276
        %v1035 = vmul.f32 %v598, %v1034
        %v1036 = vmul.f32 %v599, %v1034
        %v1037 = vadd.f32 %v1032, %v1035
        %v1038 = vadd.f32 %v1033, %v1036
        %v1039 = vstv %s286
        %v1040 = vmul.f32 %v621, %v1039
        %v1041 = vmul.f32 %v622, %v1039
        %v1042 = vadd.f32 %v1037, %v1040
        %v1043 = vadd.f32 %v1038, %v1041
        %v1044 = vstv %s296
        %v1045 = vmul.f32 %v644, %v1044
        %v1046 = vmul.f32 %v645, %v1044
        %v1047 = vadd.f32 %v1042, %v1045
        %v1048 = vadd.f32 %v1043, %v1046
        %v1049 = vstv %s306
        %v1050 = vmul.f32 %v667, %v1049
        %v1051 = vmul.f32 %v668, %v1049
        %v1052 = vadd.f32 %v1047, %v1050
        %v1053 = vadd.f32 %v1048, %v1051
        %v1054 = vstv %s316
        %v1055 = vmul.f32 %v690, %v1054
        %v1056 = vmul.f32 %v691, %v1054
        %v1057 = vadd.f32 %v1052, %v1055
        %v1058 = vadd.f32 %v1053, %v1056
        %v1059 = vstv %s326
        %v1060 = vmul.f32 %v713, %v1059
        %v1061 = vmul.f32 %v714, %v1059
        %v1062 = vadd.f32 %v1057, %v1060
        %v1063 = vadd.f32 %v1058, %v1061
        %v1064 = vstv %s336
        %v1065 = vmul.f32 %v736, %v1064
        %v1066 = vmul.f32 %v737, %v1064
        %v1067 = vadd.f32 %v1062, %v1065
        %v1068 = vadd.f32 %v1063, %v1066
        %v1069 = vstv %s346
        %v1070 = vmul.f32 %v759, %v1069
        %v1071 = vmul.f32 %v760, %v1069
        %v1072 = vadd.f32 %v1067, %v1070
        %v1073 = vadd.f32 %v1068, %v1071
        %v1074 = vstv %s356
        %v1075 = vadd.f32 %v1072, %v1074
        %v1076 = vadd.f32 %v1073, %v1074
        %v1077 = vtanh.pop %v1075
        %v1078 = vtanh.pop %v1076
        %v1079 = vstv %s257
        %v1080 = vmul.f32 %v552, %v1079
        %v1081 = vmul.f32 %v553, %v1079
        %v1082 = vstv %s267
        %v1083 = vmul.f32 %v575, %v1082
        %v1084 = vmul.f32 %v576, %v1082
        %v1085 = vadd.f32 %v1080, %v1083
        %v1086 = vadd.f32 %v1081, %v1084
        %v1087 = vstv %s277
        %v1088 = vmul.f32 %v598, %v1087
        %v1089 = vmul.f32 %v599, %v1087
        %v1090 = vadd.f32 %v1085, %v1088
        %v1091 = vadd.f32 %v1086, %v1089
        %v1092 = vstv %s287
        %v1093 = vmul.f32 %v621, %v1092
        %v1094 = vmul.f32 %v622, %v1092
        %v1095 = vadd.f32 %v1090, %v1093
        %v1096 = vadd.f32 %v1091, %v1094
        %v1097 = vstv %s297
        %v1098 = vmul.f32 %v644, %v1097
        %v1099 = vmul.f32 %v645, %v1097
        %v1100 = vadd.f32 %v1095, %v1098
        %v1101 = vadd.f32 %v1096, %v1099
        %v1102 = vstv %s307
        %v1103 = vmul.f32 %v667, %v1102
        %v1104 = vmul.f32 %v668, %v1102
        %v1105 = vadd.f32 %v1100, %v1103
        %v1106 = vadd.f32 %v1101, %v1104
        %v1107 = vstv %s317
        %v1108 = vmul.f32 %v690, %v1107
        %v1109 = vmul.f32 %v691, %v1107
        %v1110 = vadd.f32 %v1105, %v1108
        %v1111 = vadd.f32 %v1106, %v1109
        %v1112 = vstv %s327
        %v1113 = vmul.f32 %v713, %v1112
        %v1114 = vmul.f32 %v714, %v1112
        %v1115 = vadd.f32 %v1110, %v1113
        %v1116 = vadd.f32 %v1111, %v1114
        %v1117 = vstv %s337
        %v1118 = vmul.f32 %v736, %v1117
        %v1119 = vmul.f32 %v737, %v1117
        %v1120 = vadd.f32 %v1115, %v1118
        %v1121 = vadd.f32 %v1116, %v1119
        %v1122 = vstv %s347
        %v1123 = vmul.f32 %v759, %v1122
        %v1124 = vmul.f32 %v760, %v1122
        %v1125 = vadd.f32 %v1120, %v1123
        %v1126 = vadd.f32 %v1121, %v1124
        %v1127 = vstv %s357
        %v1128 = vadd.f32 %v1125, %v1127
        %v1129 = vadd.f32 %v1126, %v1127
        %v1130 = vtanh.pop %v1128
        %v1131 = vtanh.pop %v1129
        %v1132 = vstv %s258
        %v1133 = vmul.f32 %v552, %v1132
        %v1134 = vmul.f32 %v553, %v1132
        %v1135 = vstv %s268
        %v1136 = vmul.f32 %v575, %v1135
        %v1137 = vmul.f32 %v576, %v1135
        %v1138 = vadd.f32 %v1133, %v1136
        %v1139 = vadd.f32 %v1134, %v1137
        %v1140 = vstv %s278
        %v1141 = vmul.f32 %v598, %v1140
        %v1142 = vmul.f32 %v599, %v1140
        %v1143 = vadd.f32 %v1138, %v1141
        %v1144 = vadd.f32 %v1139, %v1142
        %v1145 = vstv %s288
        %v1146 = vmul.f32 %v621, %v1145
        %v1147 = vmul.f32 %v622, %v1145
        %v1148 = vadd.f32 %v1143, %v1146
        %v1149 = vadd.f32 %v1144, %v1147
        %v1150 = vstv %s298
        %v1151 = vmul.f32 %v644, %v1150
        %v1152 = vmul.f32 %v645, %v1150
        %v1153 = vadd.f32 %v1148, %v1151
        %v1154 = vadd.f32 %v1149, %v1152
        %v1155 = vstv %s308
        %v1156 = vmul.f32 %v667, %v1155
        %v1157 = vmul.f32 %v668, %v1155
        %v1158 = vadd.f32 %v1153, %v1156
        %v1159 = vadd.f32 %v1154, %v1157
        %v1160 = vstv %s318
        %v1161 = vmul.f32 %v690, %v1160
        %v1162 = vmul.f32 %v691, %v1160
        %v1163 = vadd.f32 %v1158, %v1161
        %v1164 = vadd.f32 %v1159, %v1162
        %v1165 = vstv %s328
        %v1166 = vmul.f32 %v713, %v1165
        %v1167 = vmul.f32 %v714, %v1165
        %v1168 = vadd.f32 %v1163, %v1166
        %v1169 = vadd.f32 %v1164, %v1167
        %v1170 = vstv %s338
        %v1171 = vmul.f32 %v736, %v1170
        %v1172 = vmul.f32 %v737, %v1170
        %v1173 = vadd.f32 %v1168, %v1171
        %v1174 = vadd.f32 %v1169, %v1172
        %v1175 = vstv %s348
        %v1176 = vmul.f32 %v759, %v1175
        %v1177 = vmul.f32 %v760, %v1175
        %v1178 = vadd.f32 %v1173, %v1176
        %v1179 = vadd.f32 %v1174, %v1177
        %v1180 = vstv %s358
        %v1181 = vadd.f32 %v1178, %v1180
        %v1182 = vadd.f32 %v1179, %v1180
        %v1183 = vtanh.pop %v1181
        %v1184 = vtanh.pop %v1182
        %v1185 = vstv %s259
        %v1186 = vmul.f32 %v552, %v1185
        %v1187 = vmul.f32 %v553, %v1185
        %v1188 = vstv %s269
        %v1189 = vmul.f32 %v575, %v1188
        %v1190 = vmul.f32 %v576, %v1188
        %v1191 = vadd.f32 %v1186, %v1189
        %v1192 = vadd.f32 %v1187, %v1190
        %v1193 = vstv %s279
        %v1194 = vmul.f32 %v598, %v1193
        %v1195 = vmul.f32 %v599, %v1193
        %v1196 = vadd.f32 %v1191, %v1194
        %v1197 = vadd.f32 %v1192, %v1195
        %v1198 = vstv %s289
        %v1199 = vmul.f32 %v621, %v1198
        %v1200 = vmul.f32 %v622, %v1198
        %v1201 = vadd.f32 %v1196, %v1199
        %v1202 = vadd.f32 %v1197, %v1200
        %v1203 = vstv %s299
        %v1204 = vmul.f32 %v644, %v1203
        %v1205 = vmul.f32 %v645, %v1203
        %v1206 = vadd.f32 %v1201, %v1204
        %v1207 = vadd.f32 %v1202, %v1205
        %v1208 = vstv %s309
        %v1209 = vmul.f32 %v667, %v1208
        %v1210 = vmul.f32 %v668, %v1208
        %v1211 = vadd.f32 %v1206, %v1209
        %v1212 = vadd.f32 %v1207, %v1210
        %v1213 = vstv %s319
        %v1214 = vmul.f32 %v690, %v1213
        %v1215 = vmul.f32 %v691, %v1213
        %v1216 = vadd.f32 %v1211, %v1214
        %v1217 = vadd.f32 %v1212, %v1215
        %v1218 = vstv %s329
        %v1219 = vmul.f32 %v713, %v1218
        %v1220 = vmul.f32 %v714, %v1218
        %v1221 = vadd.f32 %v1216, %v1219
        %v1222 = vadd.f32 %v1217, %v1220
        %v1223 = vstv %s339
        %v1224 = vmul.f32 %v736, %v1223
        %v1225 = vmul.f32 %v737, %v1223
        %v1226 = vadd.f32 %v1221, %v1224
        %v1227 = vadd.f32 %v1222, %v1225
        %v1228 = vstv %s349
        %v1229 = vmul.f32 %v759, %v1228
        %v1230 = vmul.f32 %v760, %v1228
        %v1231 = vadd.f32 %v1226, %v1229
        %v1232 = vadd.f32 %v1227, %v1230
        %v1233 = vstv %s359
        %v1234 = vadd.f32 %v1231, %v1233
        %v1235 = vadd.f32 %v1232, %v1233
        %v1236 = vtanh.pop %v1234
        %v1237 = vtanh.pop %v1235
        %v1238 = vstv %s260
        %v1239 = vmul.f32 %v552, %v1238
        %v1240 = vmul.f32 %v553, %v1238
        %v1241 = vstv %s270
        %v1242 = vmul.f32 %v575, %v1241
        %v1243 = vmul.f32 %v576, %v1241
        %v1244 = vadd.f32 %v1239, %v1242
        %v1245 = vadd.f32 %v1240, %v1243
        %v1246 = vstv %s280
        %v1247 = vmul.f32 %v598, %v1246
        %v1248 = vmul.f32 %v599, %v1246
        %v1249 = vadd.f32 %v1244, %v1247
        %v1250 = vadd.f32 %v1245, %v1248
        %v1251 = vstv %s290
        %v1252 = vmul.f32 %v621, %v1251
        %v1253 = vmul.f32 %v622, %v1251
        %v1254 = vadd.f32 %v1249, %v1252
        %v1255 = vadd.f32 %v1250, %v1253
        %v1256 = vstv %s300
        %v1257 = vmul.f32 %v644, %v1256
        %v1258 = vmul.f32 %v645, %v1256
        %v1259 = vadd.f32 %v1254, %v1257
        %v1260 = vadd.f32 %v1255, %v1258
        %v1261 = vstv %s310
        %v1262 = vmul.f32 %v667, %v1261
        %v1263 = vmul.f32 %v668, %v1261
        %v1264 = vadd.f32 %v1259, %v1262
        %v1265 = vadd.f32 %v1260, %v1263
        %v1266 = vstv %s320
        %v1267 = vmul.f32 %v690, %v1266
        %v1268 = vmul.f32 %v691, %v1266
        %v1269 = vadd.f32 %v1264, %v1267
        %v1270 = vadd.f32 %v1265, %v1268
        %v1271 = vstv %s330
        %v1272 = vmul.f32 %v713, %v1271
        %v1273 = vmul.f32 %v714, %v1271
        %v1274 = vadd.f32 %v1269, %v1272
        %v1275 = vadd.f32 %v1270, %v1273
        %v1276 = vstv %s340
        %v1277 = vmul.f32 %v736, %v1276
        %v1278 = vmul.f32 %v737, %v1276
        %v1279 = vadd.f32 %v1274, %v1277
        %v1280 = vadd.f32 %v1275, %v1278
        %v1281 = vstv %s350
        %v1282 = vmul.f32 %v759, %v1281
        %v1283 = vmul.f32 %v760, %v1281
        %v1284 = vadd.f32 %v1279, %v1282
        %v1285 = vadd.f32 %v1280, %v1283
        %v1286 = vstv %s360
        %v1287 = vadd.f32 %v1284, %v1286
        %v1288 = vadd.f32 %v1285, %v1286
        %v1289 = vtanh.pop %v1287
        %v1290 = vtanh.pop %v1288
        %v1291 = vstv %s361
        %v1292 = vmul.f32 %v812, %v1291
        %v1293 = vmul.f32 %v813, %v1291
        %v1294 = vstv %s371
        %v1295 = vmul.f32 %v865, %v1294
        %v1296 = vmul.f32 %v866, %v1294
        %v1297 = vadd.f32 %v1292, %v1295
        %v1298 = vadd.f32 %v1293, %v1296
        %v1299 = vstv %s381
        %v1300 = vmul.f32 %v918, %v1299
        %v1301 = vmul.f32 %v919, %v1299
        %v1302 = vadd.f32 %v1297, %v1300
        %v1303 = vadd.f32 %v1298, %v1301
        %v1304 = vstv %s391
        %v1305 = vmul.f32 %v971, %v1304
        %v1306 = vmul.f32 %v972, %v1304
        %v1307 = vadd.f32 %v1302, %v1305
        %v1308 = vadd.f32 %v1303, %v1306
        %v1309 = vstv %s401
        %v1310 = vmul.f32 %v1024, %v1309
        %v1311 = vmul.f32 %v1025, %v1309
        %v1312 = vadd.f32 %v1307, %v1310
        %v1313 = vadd.f32 %v1308, %v1311
        %v1314 = vstv %s411
        %v1315 = vmul.f32 %v1077, %v1314
        %v1316 = vmul.f32 %v1078, %v1314
        %v1317 = vadd.f32 %v1312, %v1315
        %v1318 = vadd.f32 %v1313, %v1316
        %v1319 = vstv %s421
        %v1320 = vmul.f32 %v1130, %v1319
        %v1321 = vmul.f32 %v1131, %v1319
        %v1322 = vadd.f32 %v1317, %v1320
        %v1323 = vadd.f32 %v1318, %v1321
        %v1324 = vstv %s431
        %v1325 = vmul.f32 %v1183, %v1324
        %v1326 = vmul.f32 %v1184, %v1324
        %v1327 = vadd.f32 %v1322, %v1325
        %v1328 = vadd.f32 %v1323, %v1326
        %v1329 = vstv %s441
        %v1330 = vmul.f32 %v1236, %v1329
        %v1331 = vmul.f32 %v1237, %v1329
        %v1332 = vadd.f32 %v1327, %v1330
        %v1333 = vadd.f32 %v1328, %v1331
        %v1334 = vstv %s451
        %v1335 = vmul.f32 %v1289, %v1334
        %v1336 = vmul.f32 %v1290, %v1334
        %v1337 = vadd.f32 %v1332, %v1335
        %v1338 = vadd.f32 %v1333, %v1336
        %v1339 = vstv %s461
        %v1340 = vadd.f32 %v1337, %v1339
        %v1341 = vadd.f32 %v1338, %v1339
        %v1342 = vtanh.pop %v1340
        %v1343 = vtanh.pop %v1341
        %v1344 = vstv %s362
        %v1345 = vmul.f32 %v812, %v1344
        %v1346 = vmul.f32 %v813, %v1344
        %v1347 = vstv %s372
        %v1348 = vmul.f32 %v865, %v1347
        %v1349 = vmul.f32 %v866, %v1347
        %v1350 = vadd.f32 %v1345, %v1348
        %v1351 = vadd.f32 %v1346, %v1349
        %v1352 = vstv %s382
        %v1353 = vmul.f32 %v918, %v1352
        %v1354 = vmul.f32 %v919, %v1352
        %v1355 = vadd.f32 %v1350, %v1353
        %v1356 = vadd.f32 %v1351, %v1354
        %v1357 = vstv %s392
        %v1358 = vmul.f32 %v971, %v1357
        %v1359 = vmul.f32 %v972, %v1357
        %v1360 = vadd.f32 %v1355, %v1358
        %v1361 = vadd.f32 %v1356, %v1359
        %v1362 = vstv %s402
        %v1363 = vmul.f32 %v1024, %v1362
        %v1364 = vmul.f32 %v1025, %v1362
        %v1365 = vadd.f32 %v1360, %v1363
        %v1366 = vadd.f32 %v1361, %v1364
        %v1367 = vstv %s412
        %v1368 = vmul.f32 %v1077, %v1367
        %v1369 = vmul.f32 %v1078, %v1367
        %v1370 = vadd.f32 %v1365, %v1368
        %v1371 = vadd.f32 %v1366, %v1369
        %v1372 = vstv %s422
        %v1373 = vmul.f32 %v1130, %v1372
        %v1374 = vmul.f32 %v1131, %v1372
        %v1375 = vadd.f32 %v1370, %v1373
        %v1376 = vadd.f32 %v1371, %v1374
        %v1377 = vstv %s432
        %v1378 = vmul.f32 %v1183, %v1377
        %v1379 = vmul.f32 %v1184, %v1377
        %v1380 = vadd.f32 %v1375, %v1378
        %v1381 = vadd.f32 %v1376, %v1379
        %v1382 = vstv %s442
        %v1383 = vmul.f32 %v1236, %v1382
        %v1384 = vmul.f32 %v1237, %v1382
        %v1385 = vadd.f32 %v1380, %v1383
        %v1386 = vadd.f32 %v1381, %v1384
        %v1387 = vstv %s452
        %v1388 = vmul.f32 %v1289, %v1387
        %v1389 = vmul.f32 %v1290, %v1387
        %v1390 = vadd.f32 %v1385, %v1388
        %v1391 = vadd.f32 %v1386, %v1389
        %v1392 = vstv %s462
        %v1393 = vadd.f32 %v1390, %v1392
        %v1394 = vadd.f32 %v1391, %v1392
        %v1395 = vtanh.pop %v1393
        %v1396 = vtanh.pop %v1394
        %v1397 = vstv %s363
        %v1398 = vmul.f32 %v812, %v1397
        %v1399 = vmul.f32 %v813, %v1397
        %v1400 = vstv %s373
        %v1401 = vmul.f32 %v865, %v1400
        %v1402 = vmul.f32 %v866, %v1400
        %v1403 = vadd.f32 %v1398, %v1401
        %v1404 = vadd.f32 %v1399, %v1402
        %v1405 = vstv %s383
        %v1406 = vmul.f32 %v918, %v1405
        %v1407 = vmul.f32 %v919, %v1405
        %v1408 = vadd.f32 %v1403, %v1406
        %v1409 = vadd.f32 %v1404, %v1407
        %v1410 = vstv %s393
        %v1411 = vmul.f32 %v971, %v1410
        %v1412 = vmul.f32 %v972, %v1410
        %v1413 = vadd.f32 %v1408, %v1411
        %v1414 = vadd.f32 %v1409, %v1412
        %v1415 = vstv %s403
        %v1416 = vmul.f32 %v1024, %v1415
        %v1417 = vmul.f32 %v1025, %v1415
        %v1418 = vadd.f32 %v1413, %v1416
        %v1419 = vadd.f32 %v1414, %v1417
        %v1420 = vstv %s413
        %v1421 = vmul.f32 %v1077, %v1420
        %v1422 = vmul.f32 %v1078, %v1420
        %v1423 = vadd.f32 %v1418, %v1421
        %v1424 = vadd.f32 %v1419, %v1422
        %v1425 = vstv %s423
        %v1426 = vmul.f32 %v1130, %v1425
        %v1427 = vmul.f32 %v1131, %v1425
        %v1428 = vadd.f32 %v1423, %v1426
        %v1429 = vadd.f32 %v1424, %v1427
        %v1430 = vstv %s433
        %v1431 = vmul.f32 %v1183, %v1430
        %v1432 = vmul.f32 %v1184, %v1430
        %v1433 = vadd.f32 %v1428, %v1431
        %v1434 = vadd.f32 %v1429, %v1432
        %v1435 = vstv %s443
        %v1436 = vmul.f32 %v1236, %v1435
        %v1437 = vmul.f32 %v1237, %v1435
        %v1438 = vadd.f32 %v1433, %v1436
        %v1439 = vadd.f32 %v1434, %v1437
        %v1440 = vstv %s453
        %v1441 = vmul.f32 %v1289, %v1440
        %v1442 = vmul.f32 %v1290, %v1440
        %v1443 = vadd.f32 %v1438, %v1441
        %v1444 = vadd.f32 %v1439, %v1442
        %v1445 = vstv %s463
        %v1446 = vadd.f32 %v1443, %v1445
        %v1447 = vadd.f32 %v1444, %v1445
        %v1448 = vtanh.pop %v1446
        %v1449 = vtanh.pop %v1447
        %v1450 = vstv %s364
        %v1451 = vmul.f32 %v812, %v1450
        %v1452 = vmul.f32 %v813, %v1450
        %v1453 = vstv %s374
        %v1454 = vmul.f32 %v865, %v1453
        %v1455 = vmul.f32 %v866, %v1453
        %v1456 = vadd.f32 %v1451, %v1454
        %v1457 = vadd.f32 %v1452, %v1455
        %v1458 = vstv %s384
        %v1459 = vmul.f32 %v918, %v1458
        %v1460 = vmul.f32 %v919, %v1458
        %v1461 = vadd.f32 %v1456, %v1459
        %v1462 = vadd.f32 %v1457, %v1460
        %v1463 = vstv %s394
        %v1464 = vmul.f32 %v971, %v1463
        %v1465 = vmul.f32 %v972, %v1463
        %v1466 = vadd.f32 %v1461, %v1464
        %v1467 = vadd.f32 %v1462, %v1465
        %v1468 = vstv %s404
        %v1469 = vmul.f32 %v1024, %v1468
        %v1470 = vmul.f32 %v1025, %v1468
        %v1471 = vadd.f32 %v1466, %v1469
        %v1472 = vadd.f32 %v1467, %v1470
        %v1473 = vstv %s414
        %v1474 = vmul.f32 %v1077, %v1473
        %v1475 = vmul.f32 %v1078, %v1473
        %v1476 = vadd.f32 %v1471, %v1474
        %v1477 = vadd.f32 %v1472, %v1475
        %v1478 = vstv %s424
        %v1479 = vmul.f32 %v1130, %v1478
        %v1480 = vmul.f32 %v1131, %v1478
        %v1481 = vadd.f32 %v1476, %v1479
        %v1482 = vadd.f32 %v1477, %v1480
        %v1483 = vstv %s434
        %v1484 = vmul.f32 %v1183, %v1483
        %v1485 = vmul.f32 %v1184, %v1483
        %v1486 = vadd.f32 %v1481, %v1484
        %v1487 = vadd.f32 %v1482, %v1485
        %v1488 = vstv %s444
        %v1489 = vmul.f32 %v1236, %v1488
        %v1490 = vmul.f32 %v1237, %v1488
        %v1491 = vadd.f32 %v1486, %v1489
        %v1492 = vadd.f32 %v1487, %v1490
        %v1493 = vstv %s454
        %v1494 = vmul.f32 %v1289, %v1493
        %v1495 = vmul.f32 %v1290, %v1493
        %v1496 = vadd.f32 %v1491, %v1494
        %v1497 = vadd.f32 %v1492, %v1495
        %v1498 = vstv %s464
        %v1499 = vadd.f32 %v1496, %v1498
        %v1500 = vadd.f32 %v1497, %v1498
        %v1501 = vtanh.pop %v1499
        %v1502 = vtanh.pop %v1500
        %v1503 = vstv %s365
        %v1504 = vmul.f32 %v812, %v1503
        %v1505 = vmul.f32 %v813, %v1503
        %v1506 = vstv %s375
        %v1507 = vmul.f32 %v865, %v1506
        %v1508 = vmul.f32 %v866, %v1506
        %v1509 = vadd.f32 %v1504, %v1507
        %v1510 = vadd.f32 %v1505, %v1508
        %v1511 = vstv %s385
        %v1512 = vmul.f32 %v918, %v1511
        %v1513 = vmul.f32 %v919, %v1511
        %v1514 = vadd.f32 %v1509, %v1512
        %v1515 = vadd.f32 %v1510, %v1513
        %v1516 = vstv %s395
        %v1517 = vmul.f32 %v971, %v1516
        %v1518 = vmul.f32 %v972, %v1516
        %v1519 = vadd.f32 %v1514, %v1517
        %v1520 = vadd.f32 %v1515, %v1518
        %v1521 = vstv %s405
        %v1522 = vmul.f32 %v1024, %v1521
        %v1523 = vmul.f32 %v1025, %v1521
        %v1524 = vadd.f32 %v1519, %v1522
        %v1525 = vadd.f32 %v1520, %v1523
        %v1526 = vstv %s415
        %v1527 = vmul.f32 %v1077, %v1526
        %v1528 = vmul.f32 %v1078, %v1526
        %v1529 = vadd.f32 %v1524, %v1527
        %v1530 = vadd.f32 %v1525, %v1528
        %v1531 = vstv %s425
        %v1532 = vmul.f32 %v1130, %v1531
        %v1533 = vmul.f32 %v1131, %v1531
        %v1534 = vadd.f32 %v1529, %v1532
        %v1535 = vadd.f32 %v1530, %v1533
        %v1536 = vstv %s435
        %v1537 = vmul.f32 %v1183, %v1536
        %v1538 = vmul.f32 %v1184, %v1536
        %v1539 = vadd.f32 %v1534, %v1537
        %v1540 = vadd.f32 %v1535, %v1538
        %v1541 = vstv %s445
        %v1542 = vmul.f32 %v1236, %v1541
        %v1543 = vmul.f32 %v1237, %v1541
        %v1544 = vadd.f32 %v1539, %v1542
        %v1545 = vadd.f32 %v1540, %v1543
        %v1546 = vstv %s455
        %v1547 = vmul.f32 %v1289, %v1546
        %v1548 = vmul.f32 %v1290, %v1546
        %v1549 = vadd.f32 %v1544, %v1547
        %v1550 = vadd.f32 %v1545, %v1548
        %v1551 = vstv %s465
        %v1552 = vadd.f32 %v1549, %v1551
        %v1553 = vadd.f32 %v1550, %v1551
        %v1554 = vtanh.pop %v1552
        %v1555 = vtanh.pop %v1553
        %v1556 = vstv %s366
        %v1557 = vmul.f32 %v812, %v1556
        %v1558 = vmul.f32 %v813, %v1556
        %v1559 = vstv %s376
        %v1560 = vmul.f32 %v865, %v1559
        %v1561 = vmul.f32 %v866, %v1559
        %v1562 = vadd.f32 %v1557, %v1560
        %v1563 = vadd.f32 %v1558, %v1561
        %v1564 = vstv %s386
        %v1565 = vmul.f32 %v918, %v1564
        %v1566 = vmul.f32 %v919, %v1564
        %v1567 = vadd.f32 %v1562, %v1565
        %v1568 = vadd.f32 %v1563, %v1566
        %v1569 = vstv %s396
        %v1570 = vmul.f32 %v971, %v1569
        %v1571 = vmul.f32 %v972, %v1569
        %v1572 = vadd.f32 %v1567, %v1570
        %v1573 = vadd.f32 %v1568, %v1571
        %v1574 = vstv %s406
        %v1575 = vmul.f32 %v1024, %v1574
        %v1576 = vmul.f32 %v1025, %v1574
        %v1577 = vadd.f32 %v1572, %v1575
        %v1578 = vadd.f32 %v1573, %v1576
        %v1579 = vstv %s416
        %v1580 = vmul.f32 %v1077, %v1579
        %v1581 = vmul.f32 %v1078, %v1579
        %v1582 = vadd.f32 %v1577, %v1580
        %v1583 = vadd.f32 %v1578, %v1581
        %v1584 = vstv %s426
        %v1585 = vmul.f32 %v1130, %v1584
        %v1586 = vmul.f32 %v1131, %v1584
        %v1587 = vadd.f32 %v1582, %v1585
        %v1588 = vadd.f32 %v1583, %v1586
        %v1589 = vstv %s436
        %v1590 = vmul.f32 %v1183, %v1589
        %v1591 = vmul.f32 %v1184, %v1589
        %v1592 = vadd.f32 %v1587, %v1590
        %v1593 = vadd.f32 %v1588, %v1591
        %v1594 = vstv %s446
        %v1595 = vmul.f32 %v1236, %v1594
        %v1596 = vmul.f32 %v1237, %v1594
        %v1597 = vadd.f32 %v1592, %v1595
        %v1598 = vadd.f32 %v1593, %v1596
        %v1599 = vstv %s456
        %v1600 = vmul.f32 %v1289, %v1599
        %v1601 = vmul.f32 %v1290, %v1599
        %v1602 = vadd.f32 %v1597, %v1600
        %v1603 = vadd.f32 %v1598, %v1601
        %v1604 = vstv %s466
        %v1605 = vadd.f32 %v1602, %v1604
        %v1606 = vadd.f32 %v1603, %v1604
        %v1607 = vtanh.pop %v1605
        %v1608 = vtanh.pop %v1606
        %v1609 = vstv %s367
        %v1610 = vmul.f32 %v812, %v1609
        %v1611 = vmul.f32 %v813, %v1609
        %v1612 = vstv %s377
        %v1613 = vmul.f32 %v865, %v1612
        %v1614 = vmul.f32 %v866, %v1612
        %v1615 = vadd.f32 %v1610, %v1613
        %v1616 = vadd.f32 %v1611, %v1614
        %v1617 = vstv %s387
        %v1618 = vmul.f32 %v918, %v1617
        %v1619 = vmul.f32 %v919, %v1617
        %v1620 = vadd.f32 %v1615, %v1618
        %v1621 = vadd.f32 %v1616, %v1619
        %v1622 = vstv %s397
        %v1623 = vmul.f32 %v971, %v1622
        %v1624 = vmul.f32 %v972, %v1622
        %v1625 = vadd.f32 %v1620, %v1623
        %v1626 = vadd.f32 %v1621, %v1624
        %v1627 = vstv %s407
        %v1628 = vmul.f32 %v1024, %v1627
        %v1629 = vmul.f32 %v1025, %v1627
        %v1630 = vadd.f32 %v1625, %v1628
        %v1631 = vadd.f32 %v1626, %v1629
        %v1632 = vstv %s417
        %v1633 = vmul.f32 %v1077, %v1632
        %v1634 = vmul.f32 %v1078, %v1632
        %v1635 = vadd.f32 %v1630, %v1633
        %v1636 = vadd.f32 %v1631, %v1634
        %v1637 = vstv %s427
        %v1638 = vmul.f32 %v1130, %v1637
        %v1639 = vmul.f32 %v1131, %v1637
        %v1640 = vadd.f32 %v1635, %v1638
        %v1641 = vadd.f32 %v1636, %v1639
        %v1642 = vstv %s437
        %v1643 = vmul.f32 %v1183, %v1642
        %v1644 = vmul.f32 %v1184, %v1642
        %v1645 = vadd.f32 %v1640, %v1643
        %v1646 = vadd.f32 %v1641, %v1644
        %v1647 = vstv %s447
        %v1648 = vmul.f32 %v1236, %v1647
        %v1649 = vmul.f32 %v1237, %v1647
        %v1650 = vadd.f32 %v1645, %v1648
        %v1651 = vadd.f32 %v1646, %v1649
        %v1652 = vstv %s457
        %v1653 = vmul.f32 %v1289, %v1652
        %v1654 = vmul.f32 %v1290, %v1652
        %v1655 = vadd.f32 %v1650, %v1653
        %v1656 = vadd.f32 %v1651, %v1654
        %v1657 = vstv %s467
        %v1658 = vadd.f32 %v1655, %v1657
        %v1659 = vadd.f32 %v1656, %v1657
        %v1660 = vtanh.pop %v1658
        %v1661 = vtanh.pop %v1659
        %v1662 = vstv %s368
        %v1663 = vmul.f32 %v812, %v1662
        %v1664 = vmul.f32 %v813, %v1662
        %v1665 = vstv %s378
        %v1666 = vmul.f32 %v865, %v1665
        %v1667 = vmul.f32 %v866, %v1665
        %v1668 = vadd.f32 %v1663, %v1666
        %v1669 = vadd.f32 %v1664, %v1667
        %v1670 = vstv %s388
        %v1671 = vmul.f32 %v918, %v1670
        %v1672 = vmul.f32 %v919, %v1670
        %v1673 = vadd.f32 %v1668, %v1671
        %v1674 = vadd.f32 %v1669, %v1672
        %v1675 = vstv %s398
        %v1676 = vmul.f32 %v971, %v1675
        %v1677 = vmul.f32 %v972, %v1675
        %v1678 = vadd.f32 %v1673, %v1676
        %v1679 = vadd.f32 %v1674, %v1677
        %v1680 = vstv %s408
        %v1681 = vmul.f32 %v1024, %v1680
        %v1682 = vmul.f32 %v1025, %v1680
        %v1683 = vadd.f32 %v1678, %v1681
        %v1684 = vadd.f32 %v1679, %v1682
        %v1685 = vstv %s418
        %v1686 = vmul.f32 %v1077, %v1685
        %v1687 = vmul.f32 %v1078, %v1685
        %v1688 = vadd.f32 %v1683, %v1686
        %v1689 = vadd.f32 %v1684, %v1687
        %v1690 = vstv %s428
        %v1691 = vmul.f32 %v1130, %v1690
        %v1692 = vmul.f32 %v1131, %v1690
        %v1693 = vadd.f32 %v1688, %v1691
        %v1694 = vadd.f32 %v1689, %v1692
        %v1695 = vstv %s438
        %v1696 = vmul.f32 %v1183, %v1695
        %v1697 = vmul.f32 %v1184, %v1695
        %v1698 = vadd.f32 %v1693, %v1696
        %v1699 = vadd.f32 %v1694, %v1697
        %v1700 = vstv %s448
        %v1701 = vmul.f32 %v1236, %v1700
        %v1702 = vmul.f32 %v1237, %v1700
        %v1703 = vadd.f32 %v1698, %v1701
        %v1704 = vadd.f32 %v1699, %v1702
        %v1705 = vstv %s458
        %v1706 = vmul.f32 %v1289, %v1705
        %v1707 = vmul.f32 %v1290, %v1705
        %v1708 = vadd.f32 %v1703, %v1706
        %v1709 = vadd.f32 %v1704, %v1707
        %v1710 = vstv %s468
        %v1711 = vadd.f32 %v1708, %v1710
        %v1712 = vadd.f32 %v1709, %v1710
        %v1713 = vtanh.pop %v1711
        %v1714 = vtanh.pop %v1712
        %v1715 = vstv %s369
        %v1716 = vmul.f32 %v812, %v1715
        %v1717 = vmul.f32 %v813, %v1715
        %v1718 = vstv %s379
        %v1719 = vmul.f32 %v865, %v1718
        %v1720 = vmul.f32 %v866, %v1718
        %v1721 = vadd.f32 %v1716, %v1719
        %v1722 = vadd.f32 %v1717, %v1720
        %v1723 = vstv %s389
        %v1724 = vmul.f32 %v918, %v1723
        %v1725 = vmul.f32 %v919, %v1723
        %v1726 = vadd.f32 %v1721, %v1724
        %v1727 = vadd.f32 %v1722, %v1725
        %v1728 = vstv %s399
        %v1729 = vmul.f32 %v971, %v1728
        %v1730 = vmul.f32 %v972, %v1728
        %v1731 = vadd.f32 %v1726, %v1729
        %v1732 = vadd.f32 %v1727, %v1730
        %v1733 = vstv %s409
        %v1734 = vmul.f32 %v1024, %v1733
        %v1735 = vmul.f32 %v1025, %v1733
        %v1736 = vadd.f32 %v1731, %v1734
        %v1737 = vadd.f32 %v1732, %v1735
        %v1738 = vstv %s419
        %v1739 = vmul.f32 %v1077, %v1738
        %v1740 = vmul.f32 %v1078, %v1738
        %v1741 = vadd.f32 %v1736, %v1739
        %v1742 = vadd.f32 %v1737, %v1740
        %v1743 = vstv %s429
        %v1744 = vmul.f32 %v1130, %v1743
        %v1745 = vmul.f32 %v1131, %v1743
        %v1746 = vadd.f32 %v1741, %v1744
        %v1747 = vadd.f32 %v1742, %v1745
        %v1748 = vstv %s439
        %v1749 = vmul.f32 %v1183, %v1748
        %v1750 = vmul.f32 %v1184, %v1748
        %v1751 = vadd.f32 %v1746, %v1749
        %v1752 = vadd.f32 %v1747, %v1750
        %v1753 = vstv %s449
        %v1754 = vmul.f32 %v1236, %v1753
        %v1755 = vmul.f32 %v1237, %v1753
        %v1756 = vadd.f32 %v1751, %v1754
        %v1757 = vadd.f32 %v1752, %v1755
        %v1758 = vstv %s459
        %v1759 = vmul.f32 %v1289, %v1758
        %v1760 = vmul.f32 %v1290, %v1758
        %v1761 = vadd.f32 %v1756, %v1759
        %v1762 = vadd.f32 %v1757, %v1760
        %v1763 = vstv %s469
        %v1764 = vadd.f32 %v1761, %v1763
        %v1765 = vadd.f32 %v1762, %v1763
        %v1766 = vtanh.pop %v1764
        %v1767 = vtanh.pop %v1765
        %v1768 = vstv %s370
        %v1769 = vmul.f32 %v812, %v1768
        %v1770 = vmul.f32 %v813, %v1768
        %v1771 = vstv %s380
        %v1772 = vmul.f32 %v865, %v1771
        %v1773 = vmul.f32 %v866, %v1771
        %v1774 = vadd.f32 %v1769, %v1772
        %v1775 = vadd.f32 %v1770, %v1773
        %v1776 = vstv %s390
        %v1777 = vmul.f32 %v918, %v1776
        %v1778 = vmul.f32 %v919, %v1776
        %v1779 = vadd.f32 %v1774, %v1777
        %v1780 = vadd.f32 %v1775, %v1778
        %v1781 = vstv %s400
        %v1782 = vmul.f32 %v971, %v1781
        %v1783 = vmul.f32 %v972, %v1781
        %v1784 = vadd.f32 %v1779, %v1782
        %v1785 = vadd.f32 %v1780, %v1783
        %v1786 = vstv %s410
        %v1787 = vmul.f32 %v1024, %v1786
        %v1788 = vmul.f32 %v1025, %v1786
        %v1789 = vadd.f32 %v1784, %v1787
        %v1790 = vadd.f32 %v1785, %v1788
        %v1791 = vstv %s420
        %v1792 = vmul.f32 %v1077, %v1791
        %v1793 = vmul.f32 %v1078, %v1791
        %v1794 = vadd.f32 %v1789, %v1792
        %v1795 = vadd.f32 %v1790, %v1793
        %v1796 = vstv %s430
        %v1797 = vmul.f32 %v1130, %v1796
        %v1798 = vmul.f32 %v1131, %v1796
        %v1799 = vadd.f32 %v1794, %v1797
        %v1800 = vadd.f32 %v1795, %v1798
        %v1801 = vstv %s440
        %v1802 = vmul.f32 %v1183, %v1801
        %v1803 = vmul.f32 %v1184, %v1801
        %v1804 = vadd.f32 %v1799, %v1802
        %v1805 = vadd.f32 %v1800, %v1803
        %v1806 = vstv %s450
        %v1807 = vmul.f32 %v1236, %v1806
        %v1808 = vmul.f32 %v1237, %v1806
        %v1809 = vadd.f32 %v1804, %v1807
        %v1810 = vadd.f32 %v1805, %v1808
        %v1811 = vstv %s460
        %v1812 = vmul.f32 %v1289, %v1811
        %v1813 = vmul.f32 %v1290, %v1811
        %v1814 = vadd.f32 %v1809, %v1812
        %v1815 = vadd.f32 %v1810, %v1813
        %v1816 = vstv %s470
        %v1817 = vadd.f32 %v1814, %v1816
        %v1818 = vadd.f32 %v1815, %v1816
        %v1819 = vtanh.pop %v1817
        %v1820 = vtanh.pop %v1818
        %v1821 = vstv %s471
        %v1822 = vmul.f32 %v1342, %v1821
        %v1823 = vmul.f32 %v1343, %v1821
        %v1824 = vstv %s475
        %v1825 = vmul.f32 %v1395, %v1824
        %v1826 = vmul.f32 %v1396, %v1824
        %v1827 = vadd.f32 %v1822, %v1825
        %v1828 = vadd.f32 %v1823, %v1826
        %v1829 = vstv %s479
        %v1830 = vmul.f32 %v1448, %v1829
        %v1831 = vmul.f32 %v1449, %v1829
        %v1832 = vadd.f32 %v1827, %v1830
        %v1833 = vadd.f32 %v1828, %v1831
        %v1834 = vstv %s483
        %v1835 = vmul.f32 %v1501, %v1834
        %v1836 = vmul.f32 %v1502, %v1834
        %v1837 = vadd.f32 %v1832, %v1835
        %v1838 = vadd.f32 %v1833, %v1836
        %v1839 = vstv %s487
        %v1840 = vmul.f32 %v1554, %v1839
        %v1841 = vmul.f32 %v1555, %v1839
        %v1842 = vadd.f32 %v1837, %v1840
        %v1843 = vadd.f32 %v1838, %v1841
        %v1844 = vstv %s491
        %v1845 = vmul.f32 %v1607, %v1844
        %v1846 = vmul.f32 %v1608, %v1844
        %v1847 = vadd.f32 %v1842, %v1845
        %v1848 = vadd.f32 %v1843, %v1846
        %v1849 = vstv %s495
        %v1850 = vmul.f32 %v1660, %v1849
        %v1851 = vmul.f32 %v1661, %v1849
        %v1852 = vadd.f32 %v1847, %v1850
        %v1853 = vadd.f32 %v1848, %v1851
        %v1854 = vstv %s499
        %v1855 = vmul.f32 %v1713, %v1854
        %v1856 = vmul.f32 %v1714, %v1854
        %v1857 = vadd.f32 %v1852, %v1855
        %v1858 = vadd.f32 %v1853, %v1856
        %v1859 = vstv %s503
        %v1860 = vmul.f32 %v1766, %v1859
        %v1861 = vmul.f32 %v1767, %v1859
        %v1862 = vadd.f32 %v1857, %v1860
        %v1863 = vadd.f32 %v1858, %v1861
        %v1864 = vstv %s507
        %v1865 = vmul.f32 %v1819, %v1864
        %v1866 = vmul.f32 %v1820, %v1864
        %v1867 = vadd.f32 %v1862, %v1865
        %v1868 = vadd.f32 %v1863, %v1866
        %v1869 = vstv %s511
        %v1870 = vadd.f32 %v1867, %v1869
        %v1871 = vadd.f32 %v1868, %v1869
        %v1872 = vtanh.pop %v1870
        %v1873 = vtanh.pop %v1871
        %v1874 = vstv %s472
        %v1875 = vmul.f32 %v1342, %v1874
        %v1876 = vmul.f32 %v1343, %v1874
        %v1877 = vstv %s476
        %v1878 = vmul.f32 %v1395, %v1877
        %v1879 = vmul.f32 %v1396, %v1877
        %v1880 = vadd.f32 %v1875, %v1878
        %v1881 = vadd.f32 %v1876, %v1879
        %v1882 = vstv %s480
        %v1883 = vmul.f32 %v1448, %v1882
        %v1884 = vmul.f32 %v1449, %v1882
        %v1885 = vadd.f32 %v1880, %v1883
        %v1886 = vadd.f32 %v1881, %v1884
        %v1887 = vstv %s484
        %v1888 = vmul.f32 %v1501, %v1887
        %v1889 = vmul.f32 %v1502, %v1887
        %v1890 = vadd.f32 %v1885, %v1888
        %v1891 = vadd.f32 %v1886, %v1889
        %v1892 = vstv %s488
        %v1893 = vmul.f32 %v1554, %v1892
        %v1894 = vmul.f32 %v1555, %v1892
        %v1895 = vadd.f32 %v1890, %v1893
        %v1896 = vadd.f32 %v1891, %v1894
        %v1897 = vstv %s492
        %v1898 = vmul.f32 %v1607, %v1897
        %v1899 = vmul.f32 %v1608, %v1897
        %v1900 = vadd.f32 %v1895, %v1898
        %v1901 = vadd.f32 %v1896, %v1899
        %v1902 = vstv %s496
        %v1903 = vmul.f32 %v1660, %v1902
        %v1904 = vmul.f32 %v1661, %v1902
        %v1905 = vadd.f32 %v1900, %v1903
        %v1906 = vadd.f32 %v1901, %v1904
        %v1907 = vstv %s500
        %v1908 = vmul.f32 %v1713, %v1907
        %v1909 = vmul.f32 %v1714, %v1907
        %v1910 = vadd.f32 %v1905, %v1908
        %v1911 = vadd.f32 %v1906, %v1909
        %v1912 = vstv %s504
        %v1913 = vmul.f32 %v1766, %v1912
        %v1914 = vmul.f32 %v1767, %v1912
        %v1915 = vadd.f32 %v1910, %v1913
        %v1916 = vadd.f32 %v1911, %v1914
        %v1917 = vstv %s508
        %v1918 = vmul.f32 %v1819, %v1917
        %v1919 = vmul.f32 %v1820, %v1917
        %v1920 = vadd.f32 %v1915, %v1918
        %v1921 = vadd.f32 %v1916, %v1919
        %v1922 = vstv %s512
        %v1923 = vadd.f32 %v1920, %v1922
        %v1924 = vadd.f32 %v1921, %v1922
        %v1925 = vtanh.pop %v1923
        %v1926 = vtanh.pop %v1924
        %v1927 = vstv %s473
        %v1928 = vmul.f32 %v1342, %v1927
        %v1929 = vmul.f32 %v1343, %v1927
        %v1930 = vstv %s477
        %v1931 = vmul.f32 %v1395, %v1930
        %v1932 = vmul.f32 %v1396, %v1930
        %v1933 = vadd.f32 %v1928, %v1931
        %v1934 = vadd.f32 %v1929, %v1932
        %v1935 = vstv %s481
        %v1936 = vmul.f32 %v1448, %v1935
        %v1937 = vmul.f32 %v1449, %v1935
        %v1938 = vadd.f32 %v1933, %v1936
        %v1939 = vadd.f32 %v1934, %v1937
        %v1940 = vstv %s485
        %v1941 = vmul.f32 %v1501, %v1940
        %v1942 = vmul.f32 %v1502, %v1940
        %v1943 = vadd.f32 %v1938, %v1941
        %v1944 = vadd.f32 %v1939, %v1942
        %v1945 = vstv %s489
        %v1946 = vmul.f32 %v1554, %v1945
        %v1947 = vmul.f32 %v1555, %v1945
        %v1948 = vadd.f32 %v1943, %v1946
        %v1949 = vadd.f32 %v1944, %v1947
        %v1950 = vstv %s493
        %v1951 = vmul.f32 %v1607, %v1950
        %v1952 = vmul.f32 %v1608, %v1950
        %v1953 = vadd.f32 %v1948, %v1951
        %v1954 = vadd.f32 %v1949, %v1952
        %v1955 = vstv %s497
        %v1956 = vmul.f32 %v1660, %v1955
        %v1957 = vmul.f32 %v1661, %v1955
        %v1958 = vadd.f32 %v1953, %v1956
        %v1959 = vadd.f32 %v1954, %v1957
        %v1960 = vstv %s501
        %v1961 = vmul.f32 %v1713, %v1960
        %v1962 = vmul.f32 %v1714, %v1960
        %v1963 = vadd.f32 %v1958, %v1961
        %v1964 = vadd.f32 %v1959, %v1962
        %v1965 = vstv %s505
        %v1966 = vmul.f32 %v1766, %v1965
        %v1967 = vmul.f32 %v1767, %v1965
        %v1968 = vadd.f32 %v1963, %v1966
        %v1969 = vadd.f32 %v1964, %v1967
        %v1970 = vstv %s509
        %v1971 = vmul.f32 %v1819, %v1970
        %v1972 = vmul.f32 %v1820, %v1970
        %v1973 = vadd.f32 %v1968, %v1971
        %v1974 = vadd.f32 %v1969, %v1972
        %v1975 = vstv %s513
        %v1976 = vadd.f32 %v1973, %v1975
        %v1977 = vadd.f32 %v1974, %v1975
        %v1978 = vtanh.pop %v1976
        %v1979 = vtanh.pop %v1977
        %v1980 = vstv %s474
        %v1981 = vmul.f32 %v1342, %v1980
        %v1982 = vmul.f32 %v1343, %v1980
        %v1983 = vstv %s478
        %v1984 = vmul.f32 %v1395, %v1983
        %v1985 = vmul.f32 %v1396, %v1983
        %v1986 = vadd.f32 %v1981, %v1984
        %v1987 = vadd.f32 %v1982, %v1985
        %v1988 = vstv %s482
        %v1989 = vmul.f32 %v1448, %v1988
        %v1990 = vmul.f32 %v1449, %v1988
        %v1991 = vadd.f32 %v1986, %v1989
        %v1992 = vadd.f32 %v1987, %v1990
        %v1993 = vstv %s486
        %v1994 = vmul.f32 %v1501, %v1993
        %v1995 = vmul.f32 %v1502, %v1993
        %v1996 = vadd.f32 %v1991, %v1994
        %v1997 = vadd.f32 %v1992, %v1995
        %v1998 = vstv %s490
        %v1999 = vmul.f32 %v1554, %v1998
        %v2000 = vmul.f32 %v1555, %v1998
        %v2001 = vadd.f32 %v1996, %v1999
        %v2002 = vadd.f32 %v1997, %v2000
        %v2003 = vstv %s494
        %v2004 = vmul.f32 %v1607, %v2003
        %v2005 = vmul.f32 %v1608, %v2003
        %v2006 = vadd.f32 %v2001, %v2004
        %v2007 = vadd.f32 %v2002, %v2005
        %v2008 = vstv %s498
        %v2009 = vmul.f32 %v1660, %v2008
        %v2010 = vmul.f32 %v1661, %v2008
        %v2011 = vadd.f32 %v2006, %v2009
        %v2012 = vadd.f32 %v2007, %v2010
        %v2013 = vstv %s502
        %v2014 = vmul.f32 %v1713, %v2013
        %v2015 = vmul.f32 %v1714, %v2013
        %v2016 = vadd.f32 %v2011, %v2014
        %v2017 = vadd.f32 %v2012, %v2015
        %v2018 = vstv %s506
        %v2019 = vmul.f32 %v1766, %v2018
        %v2020 = vmul.f32 %v1767, %v2018
        %v2021 = vadd.f32 %v2016, %v2019
        %v2022 = vadd.f32 %v2017, %v2020
        %v2023 = vstv %s510
        %v2024 = vmul.f32 %v1819, %v2023
        %v2025 = vmul.f32 %v1820, %v2023
        %v2026 = vadd.f32 %v2021, %v2024
        %v2027 = vadd.f32 %v2022, %v2025
        %v2028 = vstv %s514
        %v2029 = vadd.f32 %v2026, %v2028
        %v2030 = vadd.f32 %v2027, %v2028
        %v2031 = vtanh.pop %v2029
        %v2032 = vtanh.pop %v2030
        %v2033 = vadd.f32 %v1872, %v1925
        %v2034 = vadd.f32 %v1873, %v1926
        %v2035 = vadd.f32 %v2033, %v1978
        %v2036 = vadd.f32 %v2034, %v1979
        %v2037 = vadd.f32 %v2035, %v2031
        %v2038 = vadd.f32 %v2036, %v2032
        %v2039 = vmul.f32 %v2037, 0.25
        %v2040 = vmul.f32 %v2038, 0.25
        %v2041 = vsub.f32 %v1872, %v2039
        %v2042 = vsub.f32 %v1873, %v2040
        %v2043 = vsub.f32 %v1925, %v2039
        %v2044 = vsub.f32 %v1926, %v2040
        %v2045 = vsub.f32 %v1978, %v2039
        %v2046 = vsub.f32 %v1979, %v2040
        %v2047 = vsub.f32 %v2031, %v2039
        %v2048 = vsub.f32 %v2032, %v2040
        %v2049 = vmul.f32 %v2041, %v2041
        %v2050 = vmul.f32 %v2042, %v2042
        %v2051 = vmul.f32 %v2043, %v2043
        %v2052 = vmul.f32 %v2044, %v2044
        %v2053 = vadd.f32 %v2049, %v2051
        %v2054 = vadd.f32 %v2050, %v2052
        %v2055 = vmul.f32 %v2045, %v2045
        %v2056 = vmul.f32 %v2046, %v2046
        %v2057 = vadd.f32 %v2053, %v2055
        %v2058 = vadd.f32 %v2054, %v2056
        %v2059 = vmul.f32 %v2047, %v2047
        %v2060 = vmul.f32 %v2048, %v2048
        %v2061 = vadd.f32 %v2057, %v2059
        %v2062 = vadd.f32 %v2058, %v2060
        %v2063 = vmul.f32 %v2061, 0.25
        %v2064 = vmul.f32 %v2062, 0.25
        %v2065 = vadd.f32 %v2063, 1e-05
        %v2066 = vadd.f32 %v2064, 1e-05
        %v2067 = vrsqrt.pop %v2065
        %v2068 = vrsqrt.pop %v2066
        %v2069 = vstv %s515
        %v2070 = vmul.f32 %v2041, %v2069
        %v2071 = vmul.f32 %v2042, %v2069
        %v2072 = vstv %s516
        %v2073 = vmul.f32 %v2043, %v2072
        %v2074 = vmul.f32 %v2044, %v2072
        %v2075 = vadd.f32 %v2070, %v2073
        %v2076 = vadd.f32 %v2071, %v2074
        %v2077 = vstv %s517
        %v2078 = vmul.f32 %v2045, %v2077
        %v2079 = vmul.f32 %v2046, %v2077
        %v2080 = vadd.f32 %v2075, %v2078
        %v2081 = vadd.f32 %v2076, %v2079
        %v2082 = vstv %s518
        %v2083 = vmul.f32 %v2047, %v2082
        %v2084 = vmul.f32 %v2048, %v2082
        %v2085 = vadd.f32 %v2080, %v2083
        %v2086 = vadd.f32 %v2081, %v2084
        %v2087 = vmul.f32 %v2085, %v2067
        %v2088 = vmul.f32 %v2086, %v2068
        %v2089 = vstv %s519
        %v2090 = vadd.f32 %v2087, %v2089
        %v2091 = vadd.f32 %v2088, %v2089
        %2092 = vst [vmem:[%s198] sm:$0xff] %v2090
        %2093 = vst [vmem:[%s198 + $0x8] sm:$0xff] %v2091
        %s2094 = sand.u32 %s75, 1
        %s2095 = scalar_lea.sflag [#allocation4], %s2094
        %s2096 = sand.u32 %s75, 1
        %s2097 = smul.addr %s2096, 16
        %s2098 = scalar_lea.vmem [#allocation7], %s2097
        // Predicated region
        $region37: #{tpu_custom_call.1} parent=27 // pred_check
          %p2099 = pneg %p85
        $region38: #{tpu_custom_call.1} parent=27 // pred_check_branch
          %2101 = sbr.rel (%p2099) target = $region40
        $region39: #{tpu_custom_call.1} parent=27 // pred_region
          %s2102 = smul.u32 2, %s20
          %s2104 = ssub.s32 256, 256
          %2105 = vsyncadd %s2095, %s2104
          %s2106 = smul.addr %s2102, 128
          %s2107 = scalar_lea.hbm %s2, %s2106
          %s2108 = sshll.u32 %s2098, 4
          %s2109 = int_to_ptr.vmem [resolvable:$true] %s2108
          %2114 = dma.vmem_to_hbm [thread:$0]  %s2109, 256, %s2107, %s2095, 128, 128, 8
        $region40: #{tpu_custom_call.1} parent=27 // pred_fallthru
          _
      $region28: #{tpu_custom_call.1} parent=5 // pred_fallthru
        _
      %p2115 = scmp.le.s32.totalorder 2, %s15
      // Predicated region
      $region41: #{tpu_custom_call.1} parent=5 // pred_check
        %p2116 = pneg %p2115
      $region42: #{tpu_custom_call.1} parent=5 // pred_check_branch
        %2118 = sbr.rel (%p2116) target = $region44
      $region43: #{tpu_custom_call.1} parent=5 // pred_region
        %s2119 = ssub.s32 %s15, 2
        // Predicated region
        $region45: #{tpu_custom_call.1} parent=43 // pred_check
          %p2120 = pneg %p91
        $region46: #{tpu_custom_call.1} parent=43 // pred_check_branch
          %2122 = sbr.rel (%p2120) target = $region48
        $region47: #{tpu_custom_call.1} parent=43 // pred_region
          %s2123 = sand.u32 %s76, 1
          %s2124 = scalar_lea.sflag [#allocation4], %s2123
          %s2125 = sand.u32 %s76, 1
          %s2126 = smul.addr %s2125, 16
          %s2127 = scalar_lea.vmem [#allocation7], %s2126
          %2128 = dma.done %s2124, 256
        $region48: #{tpu_custom_call.1} parent=43 // pred_fallthru
          _
      $region44: #{tpu_custom_call.1} parent=5 // pred_fallthru
        _
    $region6: #{tpu_custom_call.1} parent=1 // loop_footer
      %s19 = sadd.s32 1, %s15
    $region7: #{tpu_custom_call.1} parent=1 // loop_footer_branch
      %14 = sbr.rel target = $region3
    $region8: #{tpu_custom_call.1} parent=1 // loop_exit
      _
    %2129 = vsyncpa [#allocation3], 1
    %s2130 = scalar_lea.sflag [#allocation3], 1
    %2131 = vsyncpa %s2130, 1
    %2132 = vsyncpa [#allocation4], 1
    %s2133 = scalar_lea.sflag [#allocation4], 1
    %2134 = vsyncpa %s2133, 1
    %2135 = vsyncpa [#allocation5], 1
    %s2136 = scalar_lea.sflag [#allocation5], 1
    %2137 = vsyncpa %s2136, 1

</llo_original>
